<compile_context>
chip_gen: v6e
topology: v6e:2x2x1
jax: 0.10.0
libtpu: 0.0.40
codegen_flags: <defaults>
</compile_context>

<pallas_src>
import functools

import jax
import jax.numpy as jnp
from jax.experimental import pallas as pl
from jax.experimental.pallas import tpu as pltpu


_VMEM_LIMIT = 64 * 1024 * 1024  # <= physical VMEM on v5e/v6e (128 MiB) and v7x (64 MiB)


def _pick_tile(n, prefs):
    """Largest preferred tile that divides n; small full-dim fallback, else error."""
    for p in prefs:
        if n % p == 0:
            return p
    if n > 2048:
        raise ValueError(
            f"dimension {n} is not a multiple of {prefs[-1]}; pad it instead of "
            "collapsing to a single full-size block (VMEM blow-up).")
    return n


_M_PREFS = (512, 256, 128, 64, 32, 16, 8)
_N_PREFS = (256, 128)


# ----------------------------- Pallas kernels -----------------------------

def _matmul_kernel(*refs, has_bias, has_res):
    """y[it, jn] = x[it, :] @ w[:, jn] (+ bias) (+ residual).  Full-K dot."""
    x_ref, w_ref = refs[0], refs[1]
    i = 2
    b_ref = refs[i] if has_bias else None
    i += int(has_bias)
    r_ref = refs[i] if has_res else None
    i += int(has_res)
    o_ref = refs[i]

    out = jnp.dot(x_ref[...], w_ref[...], preferred_element_type=jnp.float32)
    if has_bias:
        out = out + b_ref[...].astype(jnp.float32)
    if has_res:
        out = out + r_ref[...].astype(jnp.float32)
    o_ref[...] = out.astype(o_ref.dtype)


def pallas_matmul(x, w, bias=None, residual=None, out_dtype=jnp.float32):
    """y = x @ w [+ bias] [+ residual].  x:(M,K), w:(K,N) pre-transposed."""
    M, K = x.shape
    N = w.shape[1]
    tm = _pick_tile(M, _M_PREFS)
    tn = _pick_tile(N, _N_PREFS)
    nm, nn = M // tm, N // tn

    has_bias = bias is not None
    has_res = residual is not None

    in_specs = [
        pl.BlockSpec((tm, K), lambda i, j: (i, 0)),   # resident per M tile
        pl.BlockSpec((K, tn), lambda i, j: (0, j)),   # weight tiles stream
    ]
    args = [x, w]
    if has_bias:
        in_specs.append(pl.BlockSpec((1, tn), lambda i, j: (0, j)))
        args.append(bias.reshape(1, N))
    if has_res:
        in_specs.append(pl.BlockSpec((tm, tn), lambda i, j: (i, j)))
        args.append(residual)

    kern = functools.partial(_matmul_kernel, has_bias=has_bias, has_res=has_res)
    return pl.pallas_call(
        kern,
        out_shape=jax.ShapeDtypeStruct((M, N), out_dtype),
        grid=(nm, nn),
        in_specs=in_specs,
        out_specs=pl.BlockSpec((tm, tn), lambda i, j: (i, j)),
        compiler_params=pltpu.CompilerParams(
            dimension_semantics=("parallel", "parallel"),
            vmem_limit_bytes=_VMEM_LIMIT),
    )(*args)


def _ln_linear_kernel(x_ref, g_ref, bln_ref, w_ref, b_ref, o_ref, xn_ref,
                      *, eps, activation):
    """Fused LayerNorm(x_tile) @ w[:, jn] + b.  LN cached per M tile (bf16)."""
    # The LN scratch is carried only across the inner (j) axis of one M tile;
    # j must stay "arbitrary" (sequential).  The M axis is safely "parallel".
    @pl.when(pl.program_id(1) == 0)
    def _():
        x = x_ref[...].astype(jnp.float32)
        mean = jnp.mean(x, axis=-1, keepdims=True)
        var = jnp.mean(jnp.square(x - mean), axis=-1, keepdims=True)
        xn = (x - mean) * jax.lax.rsqrt(var + eps)
        xn = xn * g_ref[...] + bln_ref[...]
        xn_ref[...] = xn.astype(xn_ref.dtype)

    acc = jnp.dot(xn_ref[...], w_ref[...], preferred_element_type=jnp.float32)
    acc = acc + b_ref[...].astype(jnp.float32)
    if activation == "quickgelu":
        acc = acc * jax.nn.sigmoid(1.702 * acc)
    o_ref[...] = acc.astype(o_ref.dtype)


def pallas_ln_linear(x, gamma, beta, w, b, out_dtype=jnp.bfloat16,
                     activation=None, eps=1e-5):
    """y = act(LayerNorm(x) @ w + b).  x:(M,K), w:(K,N)."""
    M, K = x.shape
    N = w.shape[1]
    tm = _pick_tile(M, _M_PREFS)
    tn = _pick_tile(N, _N_PREFS)
    nm, nn = M // tm, N // tn

    kern = functools.partial(_ln_linear_kernel, eps=eps, activation=activation)
    return pl.pallas_call(
        kern,
        out_shape=jax.ShapeDtypeStruct((M, N), out_dtype),
        grid=(nm, nn),
        in_specs=[
            pl.BlockSpec((tm, K), lambda i, j: (i, 0)),
            pl.BlockSpec((1, K), lambda i, j: (0, 0)),
            pl.BlockSpec((1, K), lambda i, j: (0, 0)),
            pl.BlockSpec((K, tn), lambda i, j: (0, j)),
            pl.BlockSpec((1, tn), lambda i, j: (0, j)),
        ],
        out_specs=pl.BlockSpec((tm, tn), lambda i, j: (i, j)),
        scratch_shapes=[pltpu.VMEM((tm, K), jnp.bfloat16)],
        compiler_params=pltpu.CompilerParams(
            dimension_semantics=("parallel", "arbitrary"),
            vmem_limit_bytes=_VMEM_LIMIT),
    )(x, gamma.reshape(1, K), beta.reshape(1, K), w, b.reshape(1, N))


def _mlp_kernel(x_ref, g_ref, bln_ref, w1_ref, b1_ref, w2_ref, b2_ref,
                o_ref, xn_ref, acc_ref, *, eps):
    """Fused per M tile: out = x + fc2(QuickGELU(fc1(LN(x)))), hidden tiled."""
    h = pl.program_id(1)

    @pl.when(h == 0)
    def _():
        x = x_ref[...].astype(jnp.float32)
        mean = jnp.mean(x, axis=-1, keepdims=True)
        var = jnp.mean(jnp.square(x - mean), axis=-1, keepdims=True)
        xn = (x - mean) * jax.lax.rsqrt(var + eps)
        xn_ref[...] = (xn * g_ref[...] + bln_ref[...]).astype(xn_ref.dtype)
        # residual + fc2 bias added exactly once per M tile
        acc_ref[...] = x + b2_ref[...].astype(jnp.float32)

    hid = jnp.dot(xn_ref[...], w1_ref[...], preferred_element_type=jnp.float32)
    hid = hid + b1_ref[...].astype(jnp.float32)
    hid = hid * jax.nn.sigmoid(1.702 * hid)                     # QuickGELU
    acc_ref[...] += jnp.dot(hid.astype(w2_ref.dtype), w2_ref[...],
                            preferred_element_type=jnp.float32)

    @pl.when(h == pl.num_programs(1) - 1)
    def _():
        o_ref[...] = acc_ref[...].astype(o_ref.dtype)


def pallas_mlp(x, gamma, beta, w1, b1, w2, b2, eps=1e-5):
    """x:(M,D) f32 residual stream; w1:(D,MLP), w2:(MLP,D)."""
    M, D = x.shape
    MLPD = w1.shape[1]
    tm = _pick_tile(M, _M_PREFS)
    th = _pick_tile(MLPD, (512, 256, 128))
    nm, nh = M // tm, MLPD // th

    kern = functools.partial(_mlp_kernel, eps=eps)
    return pl.pallas_call(
        kern,
        out_shape=jax.ShapeDtypeStruct((M, D), jnp.float32),
        grid=(nm, nh),
        in_specs=[
            pl.BlockSpec((tm, D), lambda i, h: (i, 0)),
            pl.BlockSpec((1, D), lambda i, h: (0, 0)),
            pl.BlockSpec((1, D), lambda i, h: (0, 0)),
            pl.BlockSpec((D, th), lambda i, h: (0, h)),
            pl.BlockSpec((1, th), lambda i, h: (0, h)),
            pl.BlockSpec((th, D), lambda i, h: (h, 0)),
            pl.BlockSpec((1, D), lambda i, h: (0, 0)),
        ],
        out_specs=pl.BlockSpec((tm, D), lambda i, h: (i, 0)),
        scratch_shapes=[pltpu.VMEM((tm, D), jnp.bfloat16),   # LN(x) cache
                        pltpu.VMEM((tm, D), jnp.float32)],   # accumulator
        compiler_params=pltpu.CompilerParams(
            dimension_semantics=("parallel", "arbitrary"),
            vmem_limit_bytes=_VMEM_LIMIT),
    )(x, gamma.reshape(1, D), beta.reshape(1, D),
      w1, b1.reshape(1, MLPD), w2, b2.reshape(1, D))


def _attention_kernel(qkv_ref, o_ref, *, nh, dh, scale):
    """Per-batch attention.  qkv:(L, 3*D) bf16; heads unrolled; bf16 MXU ops."""
    D = nh * dh
    for h in range(nh):                                   # static unroll
        q = qkv_ref[:, h * dh:(h + 1) * dh]               # bf16 slices
        k = qkv_ref[:, D + h * dh:D + (h + 1) * dh]
        v = qkv_ref[:, 2 * D + h * dh:2 * D + (h + 1) * dh]
        # q @ k^T in bf16 with f32 accumulation; scale applied to f32 scores.
        s = jax.lax.dot_general(q, k, (((1,), (1,)), ((), ())),
                                preferred_element_type=jnp.float32)
        s = s * scale
        s = s - jnp.max(s, axis=-1, keepdims=True)
        p = jnp.exp(s)
        # approx reciprocal (EUP slot); deviates ~1ulp from exact softmax.
        p = p * pl.reciprocal(jnp.sum(p, axis=-1, keepdims=True), approx=True)
        out_h = jnp.dot(p.astype(v.dtype), v, preferred_element_type=jnp.float32)
        o_ref[:, h * dh:(h + 1) * dh] = out_h.astype(o_ref.dtype)


def pallas_attention(qkv, nh, dh, out_dtype=jnp.bfloat16):
    """qkv: (B, L, 3*D) packed [q;k;v] -> (B, L, D)."""
    B, L, threeD = qkv.shape
    D = nh * dh
    scale = 1.0 / (dh ** 0.5)
    kern = functools.partial(_attention_kernel, nh=nh, dh=dh, scale=scale)
    return pl.pallas_call(
        kern,
        out_shape=jax.ShapeDtypeStruct((B, L, D), out_dtype),
        grid=(B,),
        in_specs=[pl.BlockSpec((None, L, threeD), lambda b: (b, 0, 0))],
        out_specs=pl.BlockSpec((None, L, D), lambda b: (b, 0, 0)),
        compiler_params=pltpu.CompilerParams(dimension_semantics=("parallel",)),
    )(qkv)


def _pos_ln_kernel(x_ref, pos_ref, g_ref, b_ref, o_ref, *, eps):
    x = x_ref[...].astype(jnp.float32) + pos_ref[...].astype(jnp.float32)
    mean = jnp.mean(x, axis=-1, keepdims=True)
    var = jnp.mean(jnp.square(x - mean), axis=-1, keepdims=True)
    y = (x - mean) * jax.lax.rsqrt(var + eps)
    o_ref[...] = (y * g_ref[...] + b_ref[...]).astype(o_ref.dtype)


def pallas_pos_ln(x, pos, gamma, beta, eps=1e-5):
    """ln_pre(x + positional_embedding).  x:(B,L,D), pos:(L,D)."""
    B, L, D = x.shape
    kern = functools.partial(_pos_ln_kernel, eps=eps)
    return pl.pallas_call(
        kern,
        out_shape=jax.ShapeDtypeStruct((B, L, D), jnp.float32),
        grid=(B,),
        in_specs=[
            pl.BlockSpec((None, L, D), lambda b: (b, 0, 0)),
            pl.BlockSpec((L, D), lambda b: (0, 0)),
            pl.BlockSpec((1, D), lambda b: (0, 0)),
            pl.BlockSpec((1, D), lambda b: (0, 0)),
        ],
        out_specs=pl.BlockSpec((None, L, D), lambda b: (b, 0, 0)),
        compiler_params=pltpu.CompilerParams(dimension_semantics=("parallel",)),
    )(x, pos, gamma.reshape(1, D), beta.reshape(1, D))


def _layernorm_kernel(x_ref, g_ref, b_ref, o_ref, *, eps):
    x = x_ref[...].astype(jnp.float32)
    mean = jnp.mean(x, axis=-1, keepdims=True)
    var = jnp.mean(jnp.square(x - mean), axis=-1, keepdims=True)
    y = (x - mean) * jax.lax.rsqrt(var + eps)
    o_ref[...] = (y * g_ref[...] + b_ref[...]).astype(o_ref.dtype)


def pallas_layernorm(x, gamma, beta, eps=1e-5):
    """Row-tiled LayerNorm over the last dim.  x:(M,D)."""
    M, D = x.shape
    tm = _pick_tile(M, (256, 128, 64, 32, 16, 8))
    kern = functools.partial(_layernorm_kernel, eps=eps)
    return pl.pallas_call(
        kern,
        out_shape=jax.ShapeDtypeStruct((M, D), jnp.float32),
        grid=(M // tm,),
        in_specs=[
            pl.BlockSpec((tm, D), lambda i: (i, 0)),
            pl.BlockSpec((1, D), lambda i: (0, 0)),
            pl.BlockSpec((1, D), lambda i: (0, 0)),
        ],
        out_specs=pl.BlockSpec((tm, D), lambda i: (i, 0)),
        compiler_params=pltpu.CompilerParams(dimension_semantics=("parallel",)),
    )(x, gamma.reshape(1, D), beta.reshape(1, D))


# ----------------------------- model config / params ----------------------

WIDTH = 128        # visual_width (768 in the real model; small here)
LAYERS = 3         # transformer.layers
HEADS = 4
PATCH = 8
IN_CH = 3
IMG = 16           # image H = W  -> grid 2x2 -> 4 patches, L = 5 tokens
MLP = 4 * WIDTH


def init_params(key):
    ks = iter(jax.random.split(key, 64))

    def nrm(shape, scale=0.02, dtype=jnp.float32):
        return (scale * jax.random.normal(next(ks), shape,
                                          dtype=jnp.float32)).astype(dtype)

    n_patches = (IMG // PATCH) ** 2
    # NOTE: matmul weights are stored pre-transposed as (K, N) and in bf16
    # (a torch checkpoint would be reshaped/transposed once at load time).
    p = dict(
        conv1_w=nrm((IN_CH * PATCH * PATCH, WIDTH), dtype=jnp.bfloat16),
        class_embedding=nrm((WIDTH,), WIDTH ** -0.5),
        positional_embedding=nrm((n_patches + 1, WIDTH), WIDTH ** -0.5),
        ln_pre_g=1.0 + nrm((WIDTH,), 0.01), ln_pre_b=nrm((WIDTH,), 0.01),
        ln_post_g=1.0 + nrm((WIDTH,), 0.01), ln_post_b=nrm((WIDTH,), 0.01),
        blocks=[],
    )
    for _ in range(LAYERS):
        p["blocks"].append(dict(
            ln1_g=1.0 + nrm((WIDTH,), 0.01), ln1_b=nrm((WIDTH,), 0.01),
            in_proj_w=nrm((WIDTH, 3 * WIDTH), dtype=jnp.bfloat16),  # = torch in_proj_weight.T
            in_proj_b=nrm((3 * WIDTH,), 0.01),
            out_proj_w=nrm((WIDTH, WIDTH), dtype=jnp.bfloat16),
            out_proj_b=nrm((WIDTH,), 0.01),
            ln2_g=1.0 + nrm((WIDTH,), 0.01), ln2_b=nrm((WIDTH,), 0.01),
            fc1_w=nrm((WIDTH, MLP), dtype=jnp.bfloat16), fc1_b=nrm((MLP,), 0.01),
            fc2_w=nrm((MLP, WIDTH), dtype=jnp.bfloat16), fc2_b=nrm((WIDTH,), 0.01),
        ))
    return p


# ----------------------------- forward -------------------------------------

def image_encoder_forward(image, params):
    # layout: image is NCHW (B, C, H, W), like the PyTorch module.
    B, C, H, W = image.shape
    D, nh = WIDTH, HEADS
    dh = D // nh
    gh, gw = H // PATCH, W // PATCH
    N = gh * gw
    L = N + 1

    # conv1 (stride == kernel == patch)  <=>  patch extraction + matmul (no bias).
    patches = image.reshape(B, C, gh, PATCH, gw, PATCH)
    patches = patches.transpose(0, 2, 4, 1, 3, 5).reshape(B * N, C * PATCH * PATCH)
    patches = patches.astype(jnp.bfloat16)                       # bf16 into the MXU
    x = pallas_matmul(patches, params["conv1_w"], out_dtype=jnp.float32)
    x = x.reshape(B, N, D)                                       # == reshape+permute in torch

    # class token (tiny concat in XLA) + fused (positional embedding + ln_pre)
    cls = jnp.broadcast_to(params["class_embedding"], (B, 1, D))
    x = jnp.concatenate([cls, x], axis=1)                        # (B, L, D) f32
    x = pallas_pos_ln(x, params["positional_embedding"],
                      params["ln_pre_g"], params["ln_pre_b"])    # (B, L, D) f32

    out_list = []
    for blk in params["blocks"]:
        x2d = x.reshape(B * L, D)

        # ---- x = x + out_proj(MHA(ln_1(x))) ----
        qkv = pallas_ln_linear(x2d, blk["ln1_g"], blk["ln1_b"],
                               blk["in_proj_w"], blk["in_proj_b"],
                               out_dtype=jnp.bfloat16)           # (B*L, 3D) bf16
        attn = pallas_attention(qkv.reshape(B, L, 3 * D), nh=nh, dh=dh)  # (B, L, D) bf16
        x = pallas_matmul(attn.reshape(B * L, D), blk["out_proj_w"],
                          bias=blk["out_proj_b"], residual=x2d,
                          out_dtype=jnp.float32).reshape(B, L, D)

        # ---- x = x + fc2(QuickGELU(fc1(ln_2(x)))) (single fused kernel) ----
        x = pallas_mlp(x.reshape(B * L, D), blk["ln2_g"], blk["ln2_b"],
                       blk["fc1_w"], blk["fc1_b"],
                       blk["fc2_w"], blk["fc2_b"]).reshape(B, L, D)

        # tmp = x.permute(1,0,2)[:, 0, :]  (we are already in (B, L, D))
        out_list.append(x[:, 0, :])

    feats = jnp.stack(out_list)                                  # (layers, B, D)
    nl = feats.shape[0]
    feats = pallas_layernorm(feats.reshape(nl * B, D),
                             params["ln_post_g"], params["ln_post_b"])
    return feats.reshape(nl, B, D)


# ----------------------------- main -----------------------------------------

if __name__ == "__main__":
    key = jax.random.PRNGKey(0)
    k_img, k_par = jax.random.split(key)
    image = jax.random.normal(k_img, (2, IN_CH, IMG, IMG), dtype=jnp.float32)
    params = init_params(k_par)

    fwd = jax.jit(image_encoder_forward)
    out = fwd(image, params)
    out = jax.block_until_ready(out)

    assert out.shape == (LAYERS, 2, WIDTH), out.shape
    assert jnp.all(jnp.isfinite(out))
    print("KERNEL_OK")
</pallas_src>

<mosaic_0001>
module attributes {stable_mosaic.version = 11 : i64} {
  func.func @_matmul_kernel(%arg0: i32, %arg1: i32, %arg2: memref<8x192xbf16, #tpu.memory_space<vmem>>, %arg3: memref<192x128xbf16, #tpu.memory_space<vmem>>, %arg4: memref<8x128xf32, #tpu.memory_space<vmem>>) attributes {dimension_semantics = [#tpu.dimension_semantics<parallel>, #tpu.dimension_semantics<parallel>], iteration_bounds = array<i64: 1, 1>, scalar_prefetch = 0 : i64, scratch_operands = 0 : i64, tpu.core_type = #tpu.core_type<tc>, window_params = [{transform_indices = @transform_0, window_bounds = array<i64: 8, 192>}, {transform_indices = @transform_1, window_bounds = array<i64: 192, 128>}, {transform_indices = @transform_2, window_bounds = array<i64: 8, 128>}]} {
    %c0 = arith.constant 0 : index
    %c0_0 = arith.constant 0 : index
    %0 = vector.load %arg2[%c0, %c0_0] : memref<8x192xbf16, #tpu.memory_space<vmem>>, vector<8x192xbf16>
    %c0_1 = arith.constant 0 : index
    %c0_2 = arith.constant 0 : index
    %1 = vector.load %arg3[%c0_1, %c0_2] : memref<192x128xbf16, #tpu.memory_space<vmem>>, vector<192x128xbf16>
    %cst = arith.constant dense<0.000000e+00> : vector<8x128xf32>
    %2 = tpu.matmul %0, %1, %cst {dimension_numbers = #tpu.dot_dimension_numbers<[1], [0], [0], [1], [0, 0, 1, 1], [], []>} : vector<8x192xbf16>, vector<192x128xbf16>, vector<8x128xf32> -> vector<8x128xf32>
    %c0_3 = arith.constant 0 : index
    %c0_4 = arith.constant 0 : index
    %3 = vector.load %arg4[%c0_3, %c0_4] : memref<8x128xf32, #tpu.memory_space<vmem>>, vector<8x128xf32>
    tpu.vector_store %arg4[%c0_3, %c0_4], %2 {strides = array<i32>} : memref<8x128xf32, #tpu.memory_space<vmem>>, vector<8x128xf32>,
    return
  }
  func.func @transform_0(%arg0: i32, %arg1: i32) -> (i32, i32) {
    %c0_i32 = arith.constant 0 : i32
    %c0_i32_0 = arith.constant 0 : i32
    return %arg0, %c0_i32 : i32, i32
  }
  func.func @transform_1(%arg0: i32, %arg1: i32) -> (i32, i32) {
    %c0_i32 = arith.constant 0 : i32
    %c0_i32_0 = arith.constant 0 : i32
    return %c0_i32, %arg1 : i32, i32
  }
  func.func @transform_2(%arg0: i32, %arg1: i32) -> (i32, i32) {
    %c0_i32 = arith.constant 0 : i32
    return %arg0, %arg1 : i32, i32
  }
}

module attributes {stable_mosaic.version = 11 : i64} {
  func.func @_ln_linear_kernel(%arg0: i32, %arg1: i32, %arg2: memref<10x128xf32, #tpu.memory_space<vmem>>, %arg3: memref<1x128xf32, #tpu.memory_space<vmem>>, %arg4: memref<1x128xf32, #tpu.memory_space<vmem>>, %arg5: memref<128x128xbf16, #tpu.memory_space<vmem>>, %arg6: memref<1x128xf32, #tpu.memory_space<vmem>>, %arg7: memref<10x128xbf16, #tpu.memory_space<vmem>>, %arg8: memref<10x128xbf16, #tpu.memory_space<vmem>>) attributes {dimension_semantics = [#tpu.dimension_semantics<parallel>, #tpu.dimension_semantics<arbitrary>], iteration_bounds = array<i64: 1, 3>, scalar_prefetch = 0 : i64, scratch_operands = 1 : i64, tpu.core_type = #tpu.core_type<tc>, window_params = [{transform_indices = @transform_0, window_bounds = array<i64: 10, 128>}, {pipeline_mode = #tpu.pipeline_mode<synchronous>, transform_indices = @transform_1, window_bounds = array<i64: 1, 128>}, {pipeline_mode = #tpu.pipeline_mode<synchronous>, transform_indices = @transform_2, window_bounds = array<i64: 1, 128>}, {transform_indices = @transform_3, window_bounds = array<i64: 128, 128>}, {transform_indices = @transform_4, window_bounds = array<i64: 1, 128>}, {transform_indices = @transform_5, window_bounds = array<i64: 10, 128>}]} {
    %c0_i32 = arith.constant 0 : i32
    %0 = arith.cmpi eq, %arg1, %c0_i32 : i32
    %1 = arith.extui %0 : i1 to i32
    %c0_i32_0 = arith.constant 0 : i32
    %2 = arith.cmpi ne, %1, %c0_i32_0 : i32
    scf.if %2 {
      %c0_8 = arith.constant 0 : index
      %c0_9 = arith.constant 0 : index
      %11 = vector.load %arg2[%c0_8, %c0_9] : memref<10x128xf32, #tpu.memory_space<vmem>>, vector<10x128xf32>
      %cst_10 = arith.constant dense<0.000000e+00> : vector<10xf32>
      %12 = vector.multi_reduction <add>, %11, %cst_10 [1] : vector<10x128xf32> to vector<10xf32>
      %13 = vector.shape_cast %12 : vector<10xf32> to vector<10x1xf32>
      %cst_11 = arith.constant 1.280000e+02 : f32
      %14 = vector.broadcast %cst_11 : f32 to vector<10x1xf32>
      %15 = arith.divf %13, %14 : vector<10x1xf32>
      %16 = vector.broadcast %15 : vector<10x1xf32> to vector<10x128xf32>
      %17 = arith.subf %11, %16 : vector<10x128xf32>
      %18 = arith.mulf %17, %17 : vector<10x128xf32>
      %cst_12 = arith.constant dense<0.000000e+00> : vector<10xf32>
      %19 = vector.multi_reduction <add>, %18, %cst_12 [1] : vector<10x128xf32> to vector<10xf32>
      %20 = vector.shape_cast %19 : vector<10xf32> to vector<10x1xf32>
      %cst_13 = arith.constant 1.280000e+02 : f32
      %21 = vector.broadcast %cst_13 : f32 to vector<10x1xf32>
      %22 = arith.divf %20, %21 : vector<10x1xf32>
      %23 = vector.broadcast %15 : vector<10x1xf32> to vector<10x128xf32>
      %24 = arith.subf %11, %23 : vector<10x128xf32>
      %cst_14 = arith.constant 9.99999974E-6 : f32
      %25 = vector.broadcast %cst_14 : f32 to vector<10x1xf32>
      %26 = arith.addf %22, %25 : vector<10x1xf32>
      %27 = math.rsqrt %26 : vector<10x1xf32>
      %28 = vector.broadcast %27 : vector<10x1xf32> to vector<10x128xf32>
      %29 = arith.mulf %24, %28 : vector<10x128xf32>
      %c0_15 = arith.constant 0 : index
      %c0_16 = arith.constant 0 : index
      %30 = vector.load %arg3[%c0_15, %c0_16] : memref<1x128xf32, #tpu.memory_space<vmem>>, vector<1x128xf32>
      %31 = vector.broadcast %30 : vector<1x128xf32> to vector<10x128xf32>
      %32 = arith.mulf %29, %31 : vector<10x128xf32>
      %c0_17 = arith.constant 0 : index
      %c0_18 = arith.constant 0 : index
      %33 = vector.load %arg4[%c0_17, %c0_18] : memref<1x128xf32, #tpu.memory_space<vmem>>, vector<1x128xf32>
      %34 = vector.broadcast %33 : vector<1x128xf32> to vector<10x128xf32>
      %35 = arith.addf %32, %34 : vector<10x128xf32>
      %36 = arith.truncf %35 : vector<10x128xf32> to vector<10x128xbf16>
      %c0_19 = arith.constant 0 : index
      %c0_20 = arith.constant 0 : index
      %37 = vector.load %arg8[%c0_19, %c0_20] : memref<10x128xbf16, #tpu.memory_space<vmem>>, vector<10x128xbf16>
      tpu.vector_store %arg8[%c0_19, %c0_20], %36 {strides = array<i32>} : memref<10x128xbf16, #tpu.memory_space<vmem>>, vector<10x128xbf16>,
    } else {
    }
    %c0 = arith.constant 0 : index
    %c0_1 = arith.constant 0 : index
    %3 = vector.load %arg8[%c0, %c0_1] : memref<10x128xbf16, #tpu.memory_space<vmem>>, vector<10x128xbf16>
    %c0_2 = arith.constant 0 : index
    %c0_3 = arith.constant 0 : index
    %4 = vector.load %arg5[%c0_2, %c0_3] : memref<128x128xbf16, #tpu.memory_space<vmem>>, vector<128x128xbf16>
    %cst = arith.constant dense<0.000000e+00> : vector<10x128xf32>
    %5 = tpu.matmul %3, %4, %cst {dimension_numbers = #tpu.dot_dimension_numbers<[1], [0], [0], [1], [0, 0, 1, 1], [], []>} : vector<10x128xbf16>, vector<128x128xbf16>, vector<10x128xf32> -> vector<10x128xf32>
    %c0_4 = arith.constant 0 : index
    %c0_5 = arith.constant 0 : index
    %6 = vector.load %arg6[%c0_4, %c0_5] : memref<1x128xf32, #tpu.memory_space<vmem>>, vector<1x128xf32>
    %7 = vector.broadcast %6 : vector<1x128xf32> to vector<10x128xf32>
    %8 = arith.addf %5, %7 : vector<10x128xf32>
    %9 = arith.truncf %8 : vector<10x128xf32> to vector<10x128xbf16>
    %c0_6 = arith.constant 0 : index
    %c0_7 = arith.constant 0 : index
    %10 = vector.load %arg7[%c0_6, %c0_7] : memref<10x128xbf16, #tpu.memory_space<vmem>>, vector<10x128xbf16>
    tpu.vector_store %arg7[%c0_6, %c0_7], %9 {strides = array<i32>} : memref<10x128xbf16, #tpu.memory_space<vmem>>, vector<10x128xbf16>,
    return
  }
  func.func @transform_0(%arg0: i32, %arg1: i32) -> (i32, i32) {
    %c0_i32 = arith.constant 0 : i32
    %c0_i32_0 = arith.constant 0 : i32
    return %arg0, %c0_i32 : i32, i32
  }
  func.func @transform_1(%arg0: i32, %arg1: i32) -> (i32, i32) {
    %c0_i32 = arith.constant 0 : i32
    %c0_i32_0 = arith.constant 0 : i32
    %c0_i32_1 = arith.constant 0 : i32
    return %c0_i32, %c0_i32_0 : i32, i32
  }
  func.func @transform_2(%arg0: i32, %arg1: i32) -> (i32, i32) {
    %c0_i32 = arith.constant 0 : i32
    %c0_i32_0 = arith.constant 0 : i32
    %c0_i32_1 = arith.constant 0 : i32
    return %c0_i32, %c0_i32_0 : i32, i32
  }
  func.func @transform_3(%arg0: i32, %arg1: i32) -> (i32, i32) {
    %c0_i32 = arith.constant 0 : i32
    %c0_i32_0 = arith.constant 0 : i32
    return %c0_i32, %arg1 : i32, i32
  }
  func.func @transform_4(%arg0: i32, %arg1: i32) -> (i32, i32) {
    %c0_i32 = arith.constant 0 : i32
    %c0_i32_0 = arith.constant 0 : i32
    return %c0_i32, %arg1 : i32, i32
  }
  func.func @transform_5(%arg0: i32, %arg1: i32) -> (i32, i32) {
    %c0_i32 = arith.constant 0 : i32
    return %arg0, %arg1 : i32, i32
  }
}

module attributes {stable_mosaic.version = 11 : i64} {
  func.func @_pos_ln_kernel(%arg0: i32, %arg1: memref<1x5x128xf32, #tpu.memory_space<vmem>>, %arg2: memref<5x128xf32, #tpu.memory_space<vmem>>, %arg3: memref<1x128xf32, #tpu.memory_space<vmem>>, %arg4: memref<1x128xf32, #tpu.memory_space<vmem>>, %arg5: memref<1x5x128xf32, #tpu.memory_space<vmem>>) attributes {dimension_semantics = [#tpu.dimension_semantics<parallel>], iteration_bounds = array<i64: 2>, scalar_prefetch = 0 : i64, scratch_operands = 0 : i64, tpu.core_type = #tpu.core_type<tc>, window_params = [{transform_indices = @transform_0, window_bounds = array<i64: 1, 5, 128>}, {pipeline_mode = #tpu.pipeline_mode<synchronous>, transform_indices = @transform_1, window_bounds = array<i64: 5, 128>}, {pipeline_mode = #tpu.pipeline_mode<synchronous>, transform_indices = @transform_2, window_bounds = array<i64: 1, 128>}, {pipeline_mode = #tpu.pipeline_mode<synchronous>, transform_indices = @transform_3, window_bounds = array<i64: 1, 128>}, {transform_indices = @transform_4, window_bounds = array<i64: 1, 5, 128>}]} {
    %c0 = arith.constant 0 : index
    %c0_0 = arith.constant 0 : index
    %c0_1 = arith.constant 0 : index
    %0 = vector.load %arg1[%c0, %c0_0, %c0_1] : memref<1x5x128xf32, #tpu.memory_space<vmem>>, vector<1x5x128xf32>
    %1 = vector.shape_cast %0 : vector<1x5x128xf32> to vector<5x128xf32>
    %c0_2 = arith.constant 0 : index
    %c0_3 = arith.constant 0 : index
    %2 = vector.load %arg2[%c0_2, %c0_3] : memref<5x128xf32, #tpu.memory_space<vmem>>, vector<5x128xf32>
    %3 = arith.addf %1, %2 : vector<5x128xf32>
    %cst = arith.constant dense<0.000000e+00> : vector<5xf32>
    %4 = vector.multi_reduction <add>, %3, %cst [1] : vector<5x128xf32> to vector<5xf32>
    %5 = vector.shape_cast %4 : vector<5xf32> to vector<5x1xf32>
    %cst_4 = arith.constant 1.280000e+02 : f32
    %6 = vector.broadcast %cst_4 : f32 to vector<5x1xf32>
    %7 = arith.divf %5, %6 : vector<5x1xf32>
    %8 = vector.broadcast %7 : vector<5x1xf32> to vector<5x128xf32>
    %9 = arith.subf %3, %8 : vector<5x128xf32>
    %10 = arith.mulf %9, %9 : vector<5x128xf32>
    %cst_5 = arith.constant dense<0.000000e+00> : vector<5xf32>
    %11 = vector.multi_reduction <add>, %10, %cst_5 [1] : vector<5x128xf32> to vector<5xf32>
    %12 = vector.shape_cast %11 : vector<5xf32> to vector<5x1xf32>
    %cst_6 = arith.constant 1.280000e+02 : f32
    %13 = vector.broadcast %cst_6 : f32 to vector<5x1xf32>
    %14 = arith.divf %12, %13 : vector<5x1xf32>
    %15 = vector.broadcast %7 : vector<5x1xf32> to vector<5x128xf32>
    %16 = arith.subf %3, %15 : vector<5x128xf32>
    %cst_7 = arith.constant 9.99999974E-6 : f32
    %17 = vector.broadcast %cst_7 : f32 to vector<5x1xf32>
    %18 = arith.addf %14, %17 : vector<5x1xf32>
    %19 = math.rsqrt %18 : vector<5x1xf32>
    %20 = vector.broadcast %19 : vector<5x1xf32> to vector<5x128xf32>
    %21 = arith.mulf %16, %20 : vector<5x128xf32>
    %c0_8 = arith.constant 0 : index
    %c0_9 = arith.constant 0 : index
    %22 = vector.load %arg3[%c0_8, %c0_9] : memref<1x128xf32, #tpu.memory_space<vmem>>, vector<1x128xf32>
    %23 = vector.broadcast %22 : vector<1x128xf32> to vector<5x128xf32>
    %24 = arith.mulf %21, %23 : vector<5x128xf32>
    %c0_10 = arith.constant 0 : index
    %c0_11 = arith.constant 0 : index
    %25 = vector.load %arg4[%c0_10, %c0_11] : memref<1x128xf32, #tpu.memory_space<vmem>>, vector<1x128xf32>
    %26 = vector.broadcast %25 : vector<1x128xf32> to vector<5x128xf32>
    %27 = arith.addf %24, %26 : vector<5x128xf32>
    %c0_12 = arith.constant 0 : index
    %c0_13 = arith.constant 0 : index
    %c0_14 = arith.constant 0 : index
    %28 = vector.load %arg5[%c0_12, %c0_13, %c0_14] : memref<1x5x128xf32, #tpu.memory_space<vmem>>, vector<1x5x128xf32>
    %29 = vector.shape_cast %28 : vector<1x5x128xf32> to vector<5x128xf32>
    %30 = vector.shape_cast %27 : vector<5x128xf32> to vector<1x5x128xf32>
    tpu.vector_store %arg5[%c0_12, %c0_13, %c0_14], %30 {strides = array<i32>} : memref<1x5x128xf32, #tpu.memory_space<vmem>>, vector<1x5x128xf32>,
    return
  }
  func.func @transform_0(%arg0: i32) -> (i32, i32, i32) {
    %c0_i32 = arith.constant 0 : i32
    %c0_i32_0 = arith.constant 0 : i32
    %c0_i32_1 = arith.constant 0 : i32
    return %arg0, %c0_i32, %c0_i32_0 : i32, i32, i32
  }
  func.func @transform_1(%arg0: i32) -> (i32, i32) {
    %c0_i32 = arith.constant 0 : i32
    %c0_i32_0 = arith.constant 0 : i32
    %c0_i32_1 = arith.constant 0 : i32
    return %c0_i32, %c0_i32_0 : i32, i32
  }
  func.func @transform_2(%arg0: i32) -> (i32, i32) {
    %c0_i32 = arith.constant 0 : i32
    %c0_i32_0 = arith.constant 0 : i32
    %c0_i32_1 = arith.constant 0 : i32
    return %c0_i32, %c0_i32_0 : i32, i32
  }
  func.func @transform_3(%arg0: i32) -> (i32, i32) {
    %c0_i32 = arith.constant 0 : i32
    %c0_i32_0 = arith.constant 0 : i32
    %c0_i32_1 = arith.constant 0 : i32
    return %c0_i32, %c0_i32_0 : i32, i32
  }
  func.func @transform_4(%arg0: i32) -> (i32, i32, i32) {
    %c0_i32 = arith.constant 0 : i32
    %c0_i32_0 = arith.constant 0 : i32
    %c0_i32_1 = arith.constant 0 : i32
    return %arg0, %c0_i32, %c0_i32_0 : i32, i32, i32
  }
}

module attributes {stable_mosaic.version = 11 : i64} {
  func.func @_attention_kernel(%arg0: i32, %arg1: memref<1x5x384xbf16, #tpu.memory_space<vmem>>, %arg2: memref<1x5x128xbf16, #tpu.memory_space<vmem>>) attributes {dimension_semantics = [#tpu.dimension_semantics<parallel>], iteration_bounds = array<i64: 2>, scalar_prefetch = 0 : i64, scratch_operands = 0 : i64, tpu.core_type = #tpu.core_type<tc>, window_params = [{transform_indices = @transform_0, window_bounds = array<i64: 1, 5, 384>}, {transform_indices = @transform_1, window_bounds = array<i64: 1, 5, 128>}]} {
    %c0 = arith.constant 0 : index
    %c0_0 = arith.constant 0 : index
    %c0_1 = arith.constant 0 : index
    %0 = vector.load %arg1[%c0, %c0_0, %c0_1] : memref<1x5x384xbf16, #tpu.memory_space<vmem>>, vector<1x5x32xbf16>
    %1 = vector.shape_cast %0 : vector<1x5x32xbf16> to vector<5x32xbf16>
    %c0_2 = arith.constant 0 : index
    %c0_3 = arith.constant 0 : index
    %c128 = arith.constant 128 : index
    %2 = vector.load %arg1[%c0_2, %c0_3, %c128] : memref<1x5x384xbf16, #tpu.memory_space<vmem>>, vector<1x5x32xbf16>
    %3 = vector.shape_cast %2 : vector<1x5x32xbf16> to vector<5x32xbf16>
    %c0_4 = arith.constant 0 : index
    %c0_5 = arith.constant 0 : index
    %c256 = arith.constant 256 : index
    %4 = vector.load %arg1[%c0_4, %c0_5, %c256] : memref<1x5x384xbf16, #tpu.memory_space<vmem>>, vector<1x5x32xbf16>
    %5 = vector.shape_cast %4 : vector<1x5x32xbf16> to vector<5x32xbf16>
    %cst = arith.constant dense<0.000000e+00> : vector<5x5xf32>
    %6 = tpu.matmul %1, %3, %cst {dimension_numbers = #tpu.dot_dimension_numbers<[1], [1], [0], [0], [0, 0, 1, 0], [], []>} : vector<5x32xbf16>, vector<5x32xbf16>, vector<5x5xf32> -> vector<5x5xf32>
    %cst_6 = arith.constant 0.176776692 : f32
    %7 = vector.broadcast %cst_6 : f32 to vector<5x5xf32>
    %8 = arith.mulf %6, %7 : vector<5x5xf32>
    %cst_7 = arith.constant dense<0xFF800000> : vector<5xf32>
    %9 = vector.multi_reduction <maximumf>, %8, %cst_7 [1] : vector<5x5xf32> to vector<5xf32>
    %10 = vector.shape_cast %9 : vector<5xf32> to vector<5x1xf32>
    %11 = vector.broadcast %10 : vector<5x1xf32> to vector<5x5xf32>
    %12 = arith.subf %8, %11 : vector<5x5xf32>
    %13 = math.exp %12 : vector<5x5xf32>
    %cst_8 = arith.constant dense<0.000000e+00> : vector<5xf32>
    %14 = vector.multi_reduction <add>, %13, %cst_8 [1] : vector<5x5xf32> to vector<5xf32>
    %15 = vector.shape_cast %14 : vector<5xf32> to vector<5x1xf32>
    %16 = tpu.reciprocal %15 {approx = true} : vector<5x1xf32> -> vector<5x1xf32>
    %17 = vector.broadcast %16 : vector<5x1xf32> to vector<5x5xf32>
    %18 = arith.mulf %13, %17 : vector<5x5xf32>
    %19 = arith.truncf %18 : vector<5x5xf32> to vector<5x5xbf16>
    %cst_9 = arith.constant dense<0.000000e+00> : vector<5x32xf32>
    %20 = tpu.matmul %19, %5, %cst_9 {dimension_numbers = #tpu.dot_dimension_numbers<[1], [0], [0], [1], [0, 0, 1, 1], [], []>} : vector<5x5xbf16>, vector<5x32xbf16>, vector<5x32xf32> -> vector<5x32xf32>
    %21 = arith.truncf %20 : vector<5x32xf32> to vector<5x32xbf16>
    %c0_10 = arith.constant 0 : index
    %c0_11 = arith.constant 0 : index
    %c0_12 = arith.constant 0 : index
    %22 = vector.load %arg2[%c0_10, %c0_11, %c0_12] : memref<1x5x128xbf16, #tpu.memory_space<vmem>>, vector<1x5x32xbf16>
    %23 = vector.shape_cast %22 : vector<1x5x32xbf16> to vector<5x32xbf16>
    %24 = vector.shape_cast %21 : vector<5x32xbf16> to vector<1x5x32xbf16>
    tpu.vector_store %arg2[%c0_10, %c0_11, %c0_12], %24 {strides = array<i32>} : memref<1x5x128xbf16, #tpu.memory_space<vmem>>, vector<1x5x32xbf16>,
    %c0_13 = arith.constant 0 : index
    %c0_14 = arith.constant 0 : index
    %c32 = arith.constant 32 : index
    %25 = vector.load %arg1[%c0_13, %c0_14, %c32] : memref<1x5x384xbf16, #tpu.memory_space<vmem>>, vector<1x5x32xbf16>
    %26 = vector.shape_cast %25 : vector<1x5x32xbf16> to vector<5x32xbf16>
    %c0_15 = arith.constant 0 : index
    %c0_16 = arith.constant 0 : index
    %c160 = arith.constant 160 : index
    %27 = vector.load %arg1[%c0_15, %c0_16, %c160] : memref<1x5x384xbf16, #tpu.memory_space<vmem>>, vector<1x5x32xbf16>
    %28 = vector.shape_cast %27 : vector<1x5x32xbf16> to vector<5x32xbf16>
    %c0_17 = arith.constant 0 : index
    %c0_18 = arith.constant 0 : index
    %c288 = arith.constant 288 : index
    %29 = vector.load %arg1[%c0_17, %c0_18, %c288] : memref<1x5x384xbf16, #tpu.memory_space<vmem>>, vector<1x5x32xbf16>
    %30 = vector.shape_cast %29 : vector<1x5x32xbf16> to vector<5x32xbf16>
    %cst_19 = arith.constant dense<0.000000e+00> : vector<5x5xf32>
    %31 = tpu.matmul %26, %28, %cst_19 {dimension_numbers = #tpu.dot_dimension_numbers<[1], [1], [0], [0], [0, 0, 1, 0], [], []>} : vector<5x32xbf16>, vector<5x32xbf16>, vector<5x5xf32> -> vector<5x5xf32>
    %cst_20 = arith.constant 0.176776692 : f32
    %32 = vector.broadcast %cst_20 : f32 to vector<5x5xf32>
    %33 = arith.mulf %31, %32 : vector<5x5xf32>
    %cst_21 = arith.constant dense<0xFF800000> : vector<5xf32>
    %34 = vector.multi_reduction <maximumf>, %33, %cst_21 [1] : vector<5x5xf32> to vector<5xf32>
    %35 = vector.shape_cast %34 : vector<5xf32> to vector<5x1xf32>
    %36 = vector.broadcast %35 : vector<5x1xf32> to vector<5x5xf32>
    %37 = arith.subf %33, %36 : vector<5x5xf32>
    %38 = math.exp %37 : vector<5x5xf32>
    %cst_22 = arith.constant dense<0.000000e+00> : vector<5xf32>
    %39 = vector.multi_reduction <add>, %38, %cst_22 [1] : vector<5x5xf32> to vector<5xf32>
    %40 = vector.shape_cast %39 : vector<5xf32> to vector<5x1xf32>
    %41 = tpu.reciprocal %40 {approx = true} : vector<5x1xf32> -> vector<5x1xf32>
    %42 = vector.broadcast %41 : vector<5x1xf32> to vector<5x5xf32>
    %43 = arith.mulf %38, %42 : vector<5x5xf32>
    %44 = arith.truncf %43 : vector<5x5xf32> to vector<5x5xbf16>
    %cst_23 = arith.constant dense<0.000000e+00> : vector<5x32xf32>
    %45 = tpu.matmul %44, %30, %cst_23 {dimension_numbers = #tpu.dot_dimension_numbers<[1], [0], [0], [1], [0, 0, 1, 1], [], []>} : vector<5x5xbf16>, vector<5x32xbf16>, vector<5x32xf32> -> vector<5x32xf32>
    %46 = arith.truncf %45 : vector<5x32xf32> to vector<5x32xbf16>
    %c0_24 = arith.constant 0 : index
    %c0_25 = arith.constant 0 : index
    %c32_26 = arith.constant 32 : index
    %47 = vector.load %arg2[%c0_24, %c0_25, %c32_26] : memref<1x5x128xbf16, #tpu.memory_space<vmem>>, vector<1x5x32xbf16>
    %48 = vector.shape_cast %47 : vector<1x5x32xbf16> to vector<5x32xbf16>
    %49 = vector.shape_cast %46 : vector<5x32xbf16> to vector<1x5x32xbf16>
    tpu.vector_store %arg2[%c0_24, %c0_25, %c32_26], %49 {strides = array<i32>} : memref<1x5x128xbf16, #tpu.memory_space<vmem>>, vector<1x5x32xbf16>,
    %c0_27 = arith.constant 0 : index
    %c0_28 = arith.constant 0 : index
    %c64 = arith.constant 64 : index
    %50 = vector.load %arg1[%c0_27, %c0_28, %c64] : memref<1x5x384xbf16, #tpu.memory_space<vmem>>, vector<1x5x32xbf16>
    %51 = vector.shape_cast %50 : vector<1x5x32xbf16> to vector<5x32xbf16>
    %c0_29 = arith.constant 0 : index
    %c0_30 = arith.constant 0 : index
    %c192 = arith.constant 192 : index
    %52 = vector.load %arg1[%c0_29, %c0_30, %c192] : memref<1x5x384xbf16, #tpu.memory_space<vmem>>, vector<1x5x32xbf16>
    %53 = vector.shape_cast %52 : vector<1x5x32xbf16> to vector<5x32xbf16>
    %c0_31 = arith.constant 0 : index
    %c0_32 = arith.constant 0 : index
    %c320 = arith.constant 320 : index
    %54 = vector.load %arg1[%c0_31, %c0_32, %c320] : memref<1x5x384xbf16, #tpu.memory_space<vmem>>, vector<1x5x32xbf16>
    %55 = vector.shape_cast %54 : vector<1x5x32xbf16> to vector<5x32xbf16>
    %cst_33 = arith.constant dense<0.000000e+00> : vector<5x5xf32>
    %56 = tpu.matmul %51, %53, %cst_33 {dimension_numbers = #tpu.dot_dimension_numbers<[1], [1], [0], [0], [0, 0, 1, 0], [], []>} : vector<5x32xbf16>, vector<5x32xbf16>, vector<5x5xf32> -> vector<5x5xf32>
    %cst_34 = arith.constant 0.176776692 : f32
    %57 = vector.broadcast %cst_34 : f32 to vector<5x5xf32>
    %58 = arith.mulf %56, %57 : vector<5x5xf32>
    %cst_35 = arith.constant dense<0xFF800000> : vector<5xf32>
    %59 = vector.multi_reduction <maximumf>, %58, %cst_35 [1] : vector<5x5xf32> to vector<5xf32>
    %60 = vector.shape_cast %59 : vector<5xf32> to vector<5x1xf32>
    %61 = vector.broadcast %60 : vector<5x1xf32> to vector<5x5xf32>
    %62 = arith.subf %58, %61 : vector<5x5xf32>
    %63 = math.exp %62 : vector<5x5xf32>
    %cst_36 = arith.constant dense<0.000000e+00> : vector<5xf32>
    %64 = vector.multi_reduction <add>, %63, %cst_36 [1] : vector<5x5xf32> to vector<5xf32>
    %65 = vector.shape_cast %64 : vector<5xf32> to vector<5x1xf32>
    %66 = tpu.reciprocal %65 {approx = true} : vector<5x1xf32> -> vector<5x1xf32>
    %67 = vector.broadcast %66 : vector<5x1xf32> to vector<5x5xf32>
    %68 = arith.mulf %63, %67 : vector<5x5xf32>
    %69 = arith.truncf %68 : vector<5x5xf32> to vector<5x5xbf16>
    %cst_37 = arith.constant dense<0.000000e+00> : vector<5x32xf32>
    %70 = tpu.matmul %69, %55, %cst_37 {dimension_numbers = #tpu.dot_dimension_numbers<[1], [0], [0], [1], [0, 0, 1, 1], [], []>} : vector<5x5xbf16>, vector<5x32xbf16>, vector<5x32xf32> -> vector<5x32xf32>
    %71 = arith.truncf %70 : vector<5x32xf32> to vector<5x32xbf16>
    %c0_38 = arith.constant 0 : index
    %c0_39 = arith.constant 0 : index
    %c64_40 = arith.constant 64 : index
    %72 = vector.load %arg2[%c0_38, %c0_39, %c64_40] : memref<1x5x128xbf16, #tpu.memory_space<vmem>>, vector<1x5x32xbf16>
    %73 = vector.shape_cast %72 : vector<1x5x32xbf16> to vector<5x32xbf16>
    %74 = vector.shape_cast %71 : vector<5x32xbf16> to vector<1x5x32xbf16>
    tpu.vector_store %arg2[%c0_38, %c0_39, %c64_40], %74 {strides = array<i32>} : memref<1x5x128xbf16, #tpu.memory_space<vmem>>, vector<1x5x32xbf16>,
    %c0_41 = arith.constant 0 : index
    %c0_42 = arith.constant 0 : index
    %c96 = arith.constant 96 : index
    %75 = vector.load %arg1[%c0_41, %c0_42, %c96] : memref<1x5x384xbf16, #tpu.memory_space<vmem>>, vector<1x5x32xbf16>
    %76 = vector.shape_cast %75 : vector<1x5x32xbf16> to vector<5x32xbf16>
    %c0_43 = arith.constant 0 : index
    %c0_44 = arith.constant 0 : index
    %c224 = arith.constant 224 : index
    %77 = vector.load %arg1[%c0_43, %c0_44, %c224] : memref<1x5x384xbf16, #tpu.memory_space<vmem>>, vector<1x5x32xbf16>
    %78 = vector.shape_cast %77 : vector<1x5x32xbf16> to vector<5x32xbf16>
    %c0_45 = arith.constant 0 : index
    %c0_46 = arith.constant 0 : index
    %c352 = arith.constant 352 : index
    %79 = vector.load %arg1[%c0_45, %c0_46, %c352] : memref<1x5x384xbf16, #tpu.memory_space<vmem>>, vector<1x5x32xbf16>
    %80 = vector.shape_cast %79 : vector<1x5x32xbf16> to vector<5x32xbf16>
    %cst_47 = arith.constant dense<0.000000e+00> : vector<5x5xf32>
    %81 = tpu.matmul %76, %78, %cst_47 {dimension_numbers = #tpu.dot_dimension_numbers<[1], [1], [0], [0], [0, 0, 1, 0], [], []>} : vector<5x32xbf16>, vector<5x32xbf16>, vector<5x5xf32> -> vector<5x5xf32>
    %cst_48 = arith.constant 0.176776692 : f32
    %82 = vector.broadcast %cst_48 : f32 to vector<5x5xf32>
    %83 = arith.mulf %81, %82 : vector<5x5xf32>
    %cst_49 = arith.constant dense<0xFF800000> : vector<5xf32>
    %84 = vector.multi_reduction <maximumf>, %83, %cst_49 [1] : vector<5x5xf32> to vector<5xf32>
    %85 = vector.shape_cast %84 : vector<5xf32> to vector<5x1xf32>
    %86 = vector.broadcast %85 : vector<5x1xf32> to vector<5x5xf32>
    %87 = arith.subf %83, %86 : vector<5x5xf32>
    %88 = math.exp %87 : vector<5x5xf32>
    %cst_50 = arith.constant dense<0.000000e+00> : vector<5xf32>
    %89 = vector.multi_reduction <add>, %88, %cst_50 [1] : vector<5x5xf32> to vector<5xf32>
    %90 = vector.shape_cast %89 : vector<5xf32> to vector<5x1xf32>
    %91 = tpu.reciprocal %90 {approx = true} : vector<5x1xf32> -> vector<5x1xf32>
    %92 = vector.broadcast %91 : vector<5x1xf32> to vector<5x5xf32>
    %93 = arith.mulf %88, %92 : vector<5x5xf32>
    %94 = arith.truncf %93 : vector<5x5xf32> to vector<5x5xbf16>
    %cst_51 = arith.constant dense<0.000000e+00> : vector<5x32xf32>
    %95 = tpu.matmul %94, %80, %cst_51 {dimension_numbers = #tpu.dot_dimension_numbers<[1], [0], [0], [1], [0, 0, 1, 1], [], []>} : vector<5x5xbf16>, vector<5x32xbf16>, vector<5x32xf32> -> vector<5x32xf32>
    %96 = arith.truncf %95 : vector<5x32xf32> to vector<5x32xbf16>
    %c0_52 = arith.constant 0 : index
    %c0_53 = arith.constant 0 : index
    %c96_54 = arith.constant 96 : index
    %97 = vector.load %arg2[%c0_52, %c0_53, %c96_54] : memref<1x5x128xbf16, #tpu.memory_space<vmem>>, vector<1x5x32xbf16>
    %98 = vector.shape_cast %97 : vector<1x5x32xbf16> to vector<5x32xbf16>
    %99 = vector.shape_cast %96 : vector<5x32xbf16> to vector<1x5x32xbf16>
    tpu.vector_store %arg2[%c0_52, %c0_53, %c96_54], %99 {strides = array<i32>} : memref<1x5x128xbf16, #tpu.memory_space<vmem>>, vector<1x5x32xbf16>,
    return
  }
  func.func @transform_0(%arg0: i32) -> (i32, i32, i32) {
    %c0_i32 = arith.constant 0 : i32
    %c0_i32_0 = arith.constant 0 : i32
    %c0_i32_1 = arith.constant 0 : i32
    return %arg0, %c0_i32, %c0_i32_0 : i32, i32, i32
  }
  func.func @transform_1(%arg0: i32) -> (i32, i32, i32) {
    %c0_i32 = arith.constant 0 : i32
    %c0_i32_0 = arith.constant 0 : i32
    %c0_i32_1 = arith.constant 0 : i32
    return %arg0, %c0_i32, %c0_i32_0 : i32, i32, i32
  }
}

module attributes {stable_mosaic.version = 11 : i64} {
  func.func @_matmul_kernel(%arg0: i32, %arg1: i32, %arg2: memref<10x128xbf16, #tpu.memory_space<vmem>>, %arg3: memref<128x128xbf16, #tpu.memory_space<vmem>>, %arg4: memref<1x128xf32, #tpu.memory_space<vmem>>, %arg5: memref<10x128xf32, #tpu.memory_space<vmem>>, %arg6: memref<10x128xf32, #tpu.memory_space<vmem>>) attributes {dimension_semantics = [#tpu.dimension_semantics<parallel>, #tpu.dimension_semantics<parallel>], iteration_bounds = array<i64: 1, 1>, scalar_prefetch = 0 : i64, scratch_operands = 0 : i64, tpu.core_type = #tpu.core_type<tc>, window_params = [{transform_indices = @transform_0, window_bounds = array<i64: 10, 128>}, {transform_indices = @transform_1, window_bounds = array<i64: 128, 128>}, {transform_indices = @transform_2, window_bounds = array<i64: 1, 128>}, {transform_indices = @transform_3, window_bounds = array<i64: 10, 128>}, {transform_indices = @transform_4, window_bounds = array<i64: 10, 128>}]} {
    %c0 = arith.constant 0 : index
    %c0_0 = arith.constant 0 : index
    %0 = vector.load %arg2[%c0, %c0_0] : memref<10x128xbf16, #tpu.memory_space<vmem>>, vector<10x128xbf16>
    %c0_1 = arith.constant 0 : index
    %c0_2 = arith.constant 0 : index
    %1 = vector.load %arg3[%c0_1, %c0_2] : memref<128x128xbf16, #tpu.memory_space<vmem>>, vector<128x128xbf16>
    %cst = arith.constant dense<0.000000e+00> : vector<10x128xf32>
    %2 = tpu.matmul %0, %1, %cst {dimension_numbers = #tpu.dot_dimension_numbers<[1], [0], [0], [1], [0, 0, 1, 1], [], []>} : vector<10x128xbf16>, vector<128x128xbf16>, vector<10x128xf32> -> vector<10x128xf32>
    %c0_3 = arith.constant 0 : index
    %c0_4 = arith.constant 0 : index
    %3 = vector.load %arg4[%c0_3, %c0_4] : memref<1x128xf32, #tpu.memory_space<vmem>>, vector<1x128xf32>
    %4 = vector.broadcast %3 : vector<1x128xf32> to vector<10x128xf32>
    %5 = arith.addf %2, %4 : vector<10x128xf32>
    %c0_5 = arith.constant 0 : index
    %c0_6 = arith.constant 0 : index
    %6 = vector.load %arg5[%c0_5, %c0_6] : memref<10x128xf32, #tpu.memory_space<vmem>>, vector<10x128xf32>
    %7 = arith.addf %5, %6 : vector<10x128xf32>
    %c0_7 = arith.constant 0 : index
    %c0_8 = arith.constant 0 : index
    %8 = vector.load %arg6[%c0_7, %c0_8] : memref<10x128xf32, #tpu.memory_space<vmem>>, vector<10x128xf32>
    tpu.vector_store %arg6[%c0_7, %c0_8], %7 {strides = array<i32>} : memref<10x128xf32, #tpu.memory_space<vmem>>, vector<10x128xf32>,
    return
  }
  func.func @transform_0(%arg0: i32, %arg1: i32) -> (i32, i32) {
    %c0_i32 = arith.constant 0 : i32
    %c0_i32_0 = arith.constant 0 : i32
    return %arg0, %c0_i32 : i32, i32
  }
  func.func @transform_1(%arg0: i32, %arg1: i32) -> (i32, i32) {
    %c0_i32 = arith.constant 0 : i32
    %c0_i32_0 = arith.constant 0 : i32
    return %c0_i32, %arg1 : i32, i32
  }
  func.func @transform_2(%arg0: i32, %arg1: i32) -> (i32, i32) {
    %c0_i32 = arith.constant 0 : i32
    %c0_i32_0 = arith.constant 0 : i32
    return %c0_i32, %arg1 : i32, i32
  }
  func.func @transform_3(%arg0: i32, %arg1: i32) -> (i32, i32) {
    %c0_i32 = arith.constant 0 : i32
    return %arg0, %arg1 : i32, i32
  }
  func.func @transform_4(%arg0: i32, %arg1: i32) -> (i32, i32) {
    %c0_i32 = arith.constant 0 : i32
    return %arg0, %arg1 : i32, i32
  }
}

module attributes {stable_mosaic.version = 11 : i64} {
  func.func @_mlp_kernel(%arg0: i32, %arg1: i32, %arg2: memref<10x128xf32, #tpu.memory_space<vmem>>, %arg3: memref<1x128xf32, #tpu.memory_space<vmem>>, %arg4: memref<1x128xf32, #tpu.memory_space<vmem>>, %arg5: memref<128x512xbf16, #tpu.memory_space<vmem>>, %arg6: memref<1x512xf32, #tpu.memory_space<vmem>>, %arg7: memref<512x128xbf16, #tpu.memory_space<vmem>>, %arg8: memref<1x128xf32, #tpu.memory_space<vmem>>, %arg9: memref<10x128xf32, #tpu.memory_space<vmem>>, %arg10: memref<10x128xbf16, #tpu.memory_space<vmem>>, %arg11: memref<10x128xf32, #tpu.memory_space<vmem>>) attributes {dimension_semantics = [#tpu.dimension_semantics<parallel>, #tpu.dimension_semantics<arbitrary>], iteration_bounds = array<i64: 1, 1>, scalar_prefetch = 0 : i64, scratch_operands = 2 : i64, tpu.core_type = #tpu.core_type<tc>, window_params = [{transform_indices = @transform_0, window_bounds = array<i64: 10, 128>}, {pipeline_mode = #tpu.pipeline_mode<synchronous>, transform_indices = @transform_1, window_bounds = array<i64: 1, 128>}, {pipeline_mode = #tpu.pipeline_mode<synchronous>, transform_indices = @transform_2, window_bounds = array<i64: 1, 128>}, {transform_indices = @transform_3, window_bounds = array<i64: 128, 512>}, {transform_indices = @transform_4, window_bounds = array<i64: 1, 512>}, {transform_indices = @transform_5, window_bounds = array<i64: 512, 128>}, {pipeline_mode = #tpu.pipeline_mode<synchronous>, transform_indices = @transform_6, window_bounds = array<i64: 1, 128>}, {transform_indices = @transform_7, window_bounds = array<i64: 10, 128>}]} {
    %c0_i32 = arith.constant 0 : i32
    %0 = arith.cmpi eq, %arg1, %c0_i32 : i32
    %1 = arith.extui %0 : i1 to i32
    %c0_i32_0 = arith.constant 0 : i32
    %2 = arith.cmpi ne, %1, %c0_i32_0 : i32
    scf.if %2 {
      %c0_17 = arith.constant 0 : index
      %c0_18 = arith.constant 0 : index
      %26 = vector.load %arg2[%c0_17, %c0_18] : memref<10x128xf32, #tpu.memory_space<vmem>>, vector<10x128xf32>
      %cst_19 = arith.constant dense<0.000000e+00> : vector<10xf32>
      %27 = vector.multi_reduction <add>, %26, %cst_19 [1] : vector<10x128xf32> to vector<10xf32>
      %28 = vector.shape_cast %27 : vector<10xf32> to vector<10x1xf32>
      %cst_20 = arith.constant 1.280000e+02 : f32
      %29 = vector.broadcast %cst_20 : f32 to vector<10x1xf32>
      %30 = arith.divf %28, %29 : vector<10x1xf32>
      %31 = vector.broadcast %30 : vector<10x1xf32> to vector<10x128xf32>
      %32 = arith.subf %26, %31 : vector<10x128xf32>
      %33 = arith.mulf %32, %32 : vector<10x128xf32>
      %cst_21 = arith.constant dense<0.000000e+00> : vector<10xf32>
      %34 = vector.multi_reduction <add>, %33, %cst_21 [1] : vector<10x128xf32> to vector<10xf32>
      %35 = vector.shape_cast %34 : vector<10xf32> to vector<10x1xf32>
      %cst_22 = arith.constant 1.280000e+02 : f32
      %36 = vector.broadcast %cst_22 : f32 to vector<10x1xf32>
      %37 = arith.divf %35, %36 : vector<10x1xf32>
      %38 = vector.broadcast %30 : vector<10x1xf32> to vector<10x128xf32>
      %39 = arith.subf %26, %38 : vector<10x128xf32>
      %cst_23 = arith.constant 9.99999974E-6 : f32
      %40 = vector.broadcast %cst_23 : f32 to vector<10x1xf32>
      %41 = arith.addf %37, %40 : vector<10x1xf32>
      %42 = math.rsqrt %41 : vector<10x1xf32>
      %43 = vector.broadcast %42 : vector<10x1xf32> to vector<10x128xf32>
      %44 = arith.mulf %39, %43 : vector<10x128xf32>
      %c0_24 = arith.constant 0 : index
      %c0_25 = arith.constant 0 : index
      %45 = vector.load %arg3[%c0_24, %c0_25] : memref<1x128xf32, #tpu.memory_space<vmem>>, vector<1x128xf32>
      %46 = vector.broadcast %45 : vector<1x128xf32> to vector<10x128xf32>
      %47 = arith.mulf %44, %46 : vector<10x128xf32>
      %c0_26 = arith.constant 0 : index
      %c0_27 = arith.constant 0 : index
      %48 = vector.load %arg4[%c0_26, %c0_27] : memref<1x128xf32, #tpu.memory_space<vmem>>, vector<1x128xf32>
      %49 = vector.broadcast %48 : vector<1x128xf32> to vector<10x128xf32>
      %50 = arith.addf %47, %49 : vector<10x128xf32>
      %51 = arith.truncf %50 : vector<10x128xf32> to vector<10x128xbf16>
      %c0_28 = arith.constant 0 : index
      %c0_29 = arith.constant 0 : index
      %52 = vector.load %arg10[%c0_28, %c0_29] : memref<10x128xbf16, #tpu.memory_space<vmem>>, vector<10x128xbf16>
      tpu.vector_store %arg10[%c0_28, %c0_29], %51 {strides = array<i32>} : memref<10x128xbf16, #tpu.memory_space<vmem>>, vector<10x128xbf16>,
      %c0_30 = arith.constant 0 : index
      %c0_31 = arith.constant 0 : index
      %53 = vector.load %arg8[%c0_30, %c0_31] : memref<1x128xf32, #tpu.memory_space<vmem>>, vector<1x128xf32>
      %54 = vector.broadcast %53 : vector<1x128xf32> to vector<10x128xf32>
      %55 = arith.addf %26, %54 : vector<10x128xf32>
      %c0_32 = arith.constant 0 : index
      %c0_33 = arith.constant 0 : index
      %56 = vector.load %arg11[%c0_32, %c0_33] : memref<10x128xf32, #tpu.memory_space<vmem>>, vector<10x128xf32>
      tpu.vector_store %arg11[%c0_32, %c0_33], %55 {strides = array<i32>} : memref<10x128xf32, #tpu.memory_space<vmem>>, vector<10x128xf32>,
    } else {
    }
    %c0 = arith.constant 0 : index
    %c0_1 = arith.constant 0 : index
    %3 = vector.load %arg10[%c0, %c0_1] : memref<10x128xbf16, #tpu.memory_space<vmem>>, vector<10x128xbf16>
    %c0_2 = arith.constant 0 : index
    %c0_3 = arith.constant 0 : index
    %4 = vector.load %arg5[%c0_2, %c0_3] : memref<128x512xbf16, #tpu.memory_space<vmem>>, vector<128x512xbf16>
    %cst = arith.constant dense<0.000000e+00> : vector<10x512xf32>
    %5 = tpu.matmul %3, %4, %cst {dimension_numbers = #tpu.dot_dimension_numbers<[1], [0], [0], [1], [0, 0, 1, 1], [], []>} : vector<10x128xbf16>, vector<128x512xbf16>, vector<10x512xf32> -> vector<10x512xf32>
    %c0_4 = arith.constant 0 : index
    %c0_5 = arith.constant 0 : index
    %6 = vector.load %arg6[%c0_4, %c0_5] : memref<1x512xf32, #tpu.memory_space<vmem>>, vector<1x512xf32>
    %7 = vector.broadcast %6 : vector<1x512xf32> to vector<10x512xf32>
    %8 = arith.addf %5, %7 : vector<10x512xf32>
    %cst_6 = arith.constant 1.702000e+00 : f32
    %9 = vector.broadcast %cst_6 : f32 to vector<10x512xf32>
    %10 = arith.mulf %9, %8 : vector<10x512xf32>
    %11 = arith.negf %10 : vector<10x512xf32>
    %12 = math.exp %11 : vector<10x512xf32>
    %cst_7 = arith.constant 1.000000e+00 : f32
    %13 = vector.broadcast %cst_7 : f32 to vector<10x512xf32>
    %14 = arith.addf %13, %12 : vector<10x512xf32>
    %15 = arith.divf %13, %14 : vector<10x512xf32>
    %16 = arith.mulf %8, %15 : vector<10x512xf32>
    %c0_8 = arith.constant 0 : index
    %c0_9 = arith.constant 0 : index
    %17 = vector.load %arg11[%c0_8, %c0_9] : memref<10x128xf32, #tpu.memory_space<vmem>>, vector<10x128xf32>
    %18 = arith.truncf %16 : vector<10x512xf32> to vector<10x512xbf16>
    %c0_10 = arith.constant 0 : index
    %c0_11 = arith.constant 0 : index
    %19 = vector.load %arg7[%c0_10, %c0_11] : memref<512x128xbf16, #tpu.memory_space<vmem>>, vector<512x128xbf16>
    %cst_12 = arith.constant dense<0.000000e+00> : vector<10x128xf32>
    %20 = tpu.matmul %18, %19, %cst_12 {dimension_numbers = #tpu.dot_dimension_numbers<[1], [0], [0], [1], [0, 0, 1, 1], [], []>} : vector<10x512xbf16>, vector<512x128xbf16>, vector<10x128xf32> -> vector<10x128xf32>
    %21 = arith.addf %17, %20 : vector<10x128xf32>
    %c0_13 = arith.constant 0 : index
    %c0_14 = arith.constant 0 : index
    %22 = vector.load %arg11[%c0_13, %c0_14] : memref<10x128xf32, #tpu.memory_space<vmem>>, vector<10x128xf32>
    tpu.vector_store %arg11[%c0_13, %c0_14], %21 {strides = array<i32>} : memref<10x128xf32, #tpu.memory_space<vmem>>, vector<10x128xf32>,
    %c0_i32_15 = arith.constant 0 : i32
    %23 = arith.cmpi eq, %arg1, %c0_i32_15 : i32
    %24 = arith.extui %23 : i1 to i32
    %c0_i32_16 = arith.constant 0 : i32
    %25 = arith.cmpi ne, %24, %c0_i32_16 : i32
    scf.if %25 {
      %c0_17 = arith.constant 0 : index
      %c0_18 = arith.constant 0 : index
      %26 = vector.load %arg11[%c0_17, %c0_18] : memref<10x128xf32, #tpu.memory_space<vmem>>, vector<10x128xf32>
      %c0_19 = arith.constant 0 : index
      %c0_20 = arith.constant 0 : index
      %27 = vector.load %arg9[%c0_19, %c0_20] : memref<10x128xf32, #tpu.memory_space<vmem>>, vector<10x128xf32>
      tpu.vector_store %arg9[%c0_19, %c0_20], %26 {strides = array<i32>} : memref<10x128xf32, #tpu.memory_space<vmem>>, vector<10x128xf32>,
    } else {
    }
    return
  }
  func.func @transform_0(%arg0: i32, %arg1: i32) -> (i32, i32) {
    %c0_i32 = arith.constant 0 : i32
    %c0_i32_0 = arith.constant 0 : i32
    return %arg0, %c0_i32 : i32, i32
  }
  func.func @transform_1(%arg0: i32, %arg1: i32) -> (i32, i32) {
    %c0_i32 = arith.constant 0 : i32
    %c0_i32_0 = arith.constant 0 : i32
    %c0_i32_1 = arith.constant 0 : i32
    return %c0_i32, %c0_i32_0 : i32, i32
  }
  func.func @transform_2(%arg0: i32, %arg1: i32) -> (i32, i32) {
    %c0_i32 = arith.constant 0 : i32
    %c0_i32_0 = arith.constant 0 : i32
    %c0_i32_1 = arith.constant 0 : i32
    return %c0_i32, %c0_i32_0 : i32, i32
  }
  func.func @transform_3(%arg0: i32, %arg1: i32) -> (i32, i32) {
    %c0_i32 = arith.constant 0 : i32
    %c0_i32_0 = arith.constant 0 : i32
    return %c0_i32, %arg1 : i32, i32
  }
  func.func @transform_4(%arg0: i32, %arg1: i32) -> (i32, i32) {
    %c0_i32 = arith.constant 0 : i32
    %c0_i32_0 = arith.constant 0 : i32
    return %c0_i32, %arg1 : i32, i32
  }
  func.func @transform_5(%arg0: i32, %arg1: i32) -> (i32, i32) {
    %c0_i32 = arith.constant 0 : i32
    %c0_i32_0 = arith.constant 0 : i32
    return %arg1, %c0_i32 : i32, i32
  }
  func.func @transform_6(%arg0: i32, %arg1: i32) -> (i32, i32) {
    %c0_i32 = arith.constant 0 : i32
    %c0_i32_0 = arith.constant 0 : i32
    %c0_i32_1 = arith.constant 0 : i32
    return %c0_i32, %c0_i32_0 : i32, i32
  }
  func.func @transform_7(%arg0: i32, %arg1: i32) -> (i32, i32) {
    %c0_i32 = arith.constant 0 : i32
    %c0_i32_0 = arith.constant 0 : i32
    return %arg0, %c0_i32 : i32, i32
  }
}

module attributes {stable_mosaic.version = 11 : i64} {
  func.func @_layernorm_kernel(%arg0: i32, %arg1: memref<6x128xf32, #tpu.memory_space<vmem>>, %arg2: memref<1x128xf32, #tpu.memory_space<vmem>>, %arg3: memref<1x128xf32, #tpu.memory_space<vmem>>, %arg4: memref<6x128xf32, #tpu.memory_space<vmem>>) attributes {dimension_semantics = [#tpu.dimension_semantics<parallel>], iteration_bounds = array<i64: 1>, scalar_prefetch = 0 : i64, scratch_operands = 0 : i64, tpu.core_type = #tpu.core_type<tc>, window_params = [{transform_indices = @transform_0, window_bounds = array<i64: 6, 128>}, {pipeline_mode = #tpu.pipeline_mode<synchronous>, transform_indices = @transform_1, window_bounds = array<i64: 1, 128>}, {pipeline_mode = #tpu.pipeline_mode<synchronous>, transform_indices = @transform_2, window_bounds = array<i64: 1, 128>}, {transform_indices = @transform_3, window_bounds = array<i64: 6, 128>}]} {
    %c0 = arith.constant 0 : index
    %c0_0 = arith.constant 0 : index
    %0 = vector.load %arg1[%c0, %c0_0] : memref<6x128xf32, #tpu.memory_space<vmem>>, vector<6x128xf32>
    %cst = arith.constant dense<0.000000e+00> : vector<6xf32>
    %1 = vector.multi_reduction <add>, %0, %cst [1] : vector<6x128xf32> to vector<6xf32>
    %2 = vector.shape_cast %1 : vector<6xf32> to vector<6x1xf32>
    %cst_1 = arith.constant 1.280000e+02 : f32
    %3 = vector.broadcast %cst_1 : f32 to vector<6x1xf32>
    %4 = arith.divf %2, %3 : vector<6x1xf32>
    %5 = vector.broadcast %4 : vector<6x1xf32> to vector<6x128xf32>
    %6 = arith.subf %0, %5 : vector<6x128xf32>
    %7 = arith.mulf %6, %6 : vector<6x128xf32>
    %cst_2 = arith.constant dense<0.000000e+00> : vector<6xf32>
    %8 = vector.multi_reduction <add>, %7, %cst_2 [1] : vector<6x128xf32> to vector<6xf32>
    %9 = vector.shape_cast %8 : vector<6xf32> to vector<6x1xf32>
    %cst_3 = arith.constant 1.280000e+02 : f32
    %10 = vector.broadcast %cst_3 : f32 to vector<6x1xf32>
    %11 = arith.divf %9, %10 : vector<6x1xf32>
    %12 = vector.broadcast %4 : vector<6x1xf32> to vector<6x128xf32>
    %13 = arith.subf %0, %12 : vector<6x128xf32>
    %cst_4 = arith.constant 9.99999974E-6 : f32
    %14 = vector.broadcast %cst_4 : f32 to vector<6x1xf32>
    %15 = arith.addf %11, %14 : vector<6x1xf32>
    %16 = math.rsqrt %15 : vector<6x1xf32>
    %17 = vector.broadcast %16 : vector<6x1xf32> to vector<6x128xf32>
    %18 = arith.mulf %13, %17 : vector<6x128xf32>
    %c0_5 = arith.constant 0 : index
    %c0_6 = arith.constant 0 : index
    %19 = vector.load %arg2[%c0_5, %c0_6] : memref<1x128xf32, #tpu.memory_space<vmem>>, vector<1x128xf32>
    %20 = vector.broadcast %19 : vector<1x128xf32> to vector<6x128xf32>
    %21 = arith.mulf %18, %20 : vector<6x128xf32>
    %c0_7 = arith.constant 0 : index
    %c0_8 = arith.constant 0 : index
    %22 = vector.load %arg3[%c0_7, %c0_8] : memref<1x128xf32, #tpu.memory_space<vmem>>, vector<1x128xf32>
    %23 = vector.broadcast %22 : vector<1x128xf32> to vector<6x128xf32>
    %24 = arith.addf %21, %23 : vector<6x128xf32>
    %c0_9 = arith.constant 0 : index
    %c0_10 = arith.constant 0 : index
    %25 = vector.load %arg4[%c0_9, %c0_10] : memref<6x128xf32, #tpu.memory_space<vmem>>, vector<6x128xf32>
    tpu.vector_store %arg4[%c0_9, %c0_10], %24 {strides = array<i32>} : memref<6x128xf32, #tpu.memory_space<vmem>>, vector<6x128xf32>,
    return
  }
  func.func @transform_0(%arg0: i32) -> (i32, i32) {
    %c0_i32 = arith.constant 0 : i32
    %c0_i32_0 = arith.constant 0 : i32
    return %arg0, %c0_i32 : i32, i32
  }
  func.func @transform_1(%arg0: i32) -> (i32, i32) {
    %c0_i32 = arith.constant 0 : i32
    %c0_i32_0 = arith.constant 0 : i32
    %c0_i32_1 = arith.constant 0 : i32
    return %c0_i32, %c0_i32_0 : i32, i32
  }
  func.func @transform_2(%arg0: i32) -> (i32, i32) {
    %c0_i32 = arith.constant 0 : i32
    %c0_i32_0 = arith.constant 0 : i32
    %c0_i32_1 = arith.constant 0 : i32
    return %c0_i32, %c0_i32_0 : i32, i32
  }
  func.func @transform_3(%arg0: i32) -> (i32, i32) {
    %c0_i32 = arith.constant 0 : i32
    %c0_i32_0 = arith.constant 0 : i32
    return %arg0, %c0_i32 : i32, i32
  }
}

</mosaic_0001>

<llo_original>
// kernel: image_encoder_forward.16
$region0: #{image_encoder_forward.16}
  #allocation0 [shape = 'u32[]', space=smem, size = 0x4, offset = 0x4, fixed_abs, tag = 'smem constant byte address 0x4 - core index']
  #allocation1 [shape = 'u32[144,128]{1,0:T(1,128)}', space=vmem, size = 0x12000, scoped, tag = 'internal scratch']
  %s0 = inlined_call_operand.vmem [shape: f32[2,5,128], index: 0, kind: input, shape index: {}]
  %s1 = inlined_call_operand.vmem [shape: f32[5,128], index: 1, kind: input, shape index: {}]
  %s2 = inlined_call_operand.vmem [shape: f32[1,128], index: 2, kind: input, shape index: {}]
  %s3 = inlined_call_operand.vmem [shape: f32[1,128], index: 3, kind: input, shape index: {}]
  %s4 = inlined_call_operand.vmem [shape: f32[2,5,128], index: 4, kind: output, shape index: {}]
  %s5 = sld [smem:[#allocation0]]
  $region49: #{image_encoder_forward.16} parent=0
    _
  %s7 = ssub.s32 1, %s5
  %s8 = scalar_select 0, %s7, %s5
  loop: start=0, step=1, limit=4
  $region2: #{image_encoder_forward.16} parent=0 // loop_pre_header
    _
  $region3: #{image_encoder_forward.16} parent=0 // loop_header
    %s10 = sphi 0, %s14
    %p11 = scmp.ge.s32.totalorder %s10, 4
    %s20 = sphi 0, %s22
    %s23 = sphi 0, %s20
    %s24 = sphi 0, %s23
    %s40 = sphi 0, %s24
    %s44 = sphi 0, %s44
    %s46 = sphi 0, %s44
    %s47 = sphi 0, %s46
    %s61 = sphi 0, %s47
    %s65 = sphi 0, %s65
    %s67 = sphi 0, %s65
    %s68 = sphi 0, %s67
    %s82 = sphi 0, %s68
    %s86 = sphi 0, %s86
    %s88 = sphi 0, %s86
    %s89 = sphi 0, %s88
    %s103 = sphi 0, %s89
    %s109 = sphi 0, %s111
    %s112 = sphi 0, %s109
    %s113 = sphi 0, %s112
    %s129 = sphi 0, %s113
  $region4: #{image_encoder_forward.16} parent=0 // loop_header_branch
    %13 = sbr.rel (%p11) target = $region8
  $region5: #{image_encoder_forward.16} parent=0 // loop_body
    %s15 = ssub.s32 %s10, 1
    %s16 = ssub.s32 %s10, 2
    %s17 = sadd.s32 %s10, 1
    %s18 = ssub.s32 %s10, %s17
    %p19 = scmp.eq.s32.totalorder %s18, 0
    %s21 = sadd.s32 %s20, 1
    %s22 = scalar_select %p19, %s20, %s21
    %p25 = pneg %p19
    %p26 = scmp.eq.s32.totalorder %s10, 1
    %p27 = por %p25, %p26
    %p28 = scmp.ne.s32.totalorder %s20, %s23
    %p29 = scmp.eq.s32.totalorder %s10, 0
    %p30 = por %p28, %p29
    %p31 = scmp.ne.s32.totalorder %s20, %s23
    %p32 = scmp.eq.s32.totalorder %s15, 1
    %p33 = por %p31, %p32
    %p34 = scmp.ne.s32.totalorder %s23, %s24
    %p35 = scmp.eq.s32.totalorder %s15, 0
    %p36 = por %p34, %p35
    %p37 = scmp.ne.s32.totalorder %s23, %s24
    %p38 = scmp.eq.s32.totalorder %s16, 1
    %p39 = por %p37, %p38
    %p41 = scmp.ne.s32.totalorder %s24, %s40
    %p42 = scmp.eq.s32.totalorder %s16, 0
    %p43 = por %p41, %p42
    %s45 = sadd.s32 %s44, 1
    %p48 = scmp.eq.s32.totalorder %s10, 1
    %p49 = scmp.ne.s32.totalorder %s44, %s46
    %p50 = scmp.eq.s32.totalorder %s10, 0
    %p51 = por %p49, %p50
    %p52 = scmp.ne.s32.totalorder %s44, %s46
    %p53 = scmp.eq.s32.totalorder %s15, 1
    %p54 = por %p52, %p53
    %p55 = scmp.ne.s32.totalorder %s46, %s47
    %p56 = scmp.eq.s32.totalorder %s15, 0
    %p57 = por %p55, %p56
    %p58 = scmp.ne.s32.totalorder %s46, %s47
    %p59 = scmp.eq.s32.totalorder %s16, 1
    %p60 = por %p58, %p59
    %p62 = scmp.ne.s32.totalorder %s47, %s61
    %p63 = scmp.eq.s32.totalorder %s16, 0
    %p64 = por %p62, %p63
    %s66 = sadd.s32 %s65, 1
    %p69 = scmp.eq.s32.totalorder %s10, 1
    %p70 = scmp.ne.s32.totalorder %s65, %s67
    %p71 = scmp.eq.s32.totalorder %s10, 0
    %p72 = por %p70, %p71
    %p73 = scmp.ne.s32.totalorder %s65, %s67
    %p74 = scmp.eq.s32.totalorder %s15, 1
    %p75 = por %p73, %p74
    %p76 = scmp.ne.s32.totalorder %s67, %s68
    %p77 = scmp.eq.s32.totalorder %s15, 0
    %p78 = por %p76, %p77
    %p79 = scmp.ne.s32.totalorder %s67, %s68
    %p80 = scmp.eq.s32.totalorder %s16, 1
    %p81 = por %p79, %p80
    %p83 = scmp.ne.s32.totalorder %s68, %s82
    %p84 = scmp.eq.s32.totalorder %s16, 0
    %p85 = por %p83, %p84
    %s87 = sadd.s32 %s86, 1
    %p90 = scmp.eq.s32.totalorder %s10, 1
    %p91 = scmp.ne.s32.totalorder %s86, %s88
    %p92 = scmp.eq.s32.totalorder %s10, 0
    %p93 = por %p91, %p92
    %p94 = scmp.ne.s32.totalorder %s86, %s88
    %p95 = scmp.eq.s32.totalorder %s15, 1
    %p96 = por %p94, %p95
    %p97 = scmp.ne.s32.totalorder %s88, %s89
    %p98 = scmp.eq.s32.totalorder %s15, 0
    %p99 = por %p97, %p98
    %p100 = scmp.ne.s32.totalorder %s88, %s89
    %p101 = scmp.eq.s32.totalorder %s16, 1
    %p102 = por %p100, %p101
    %p104 = scmp.ne.s32.totalorder %s89, %s103
    %p105 = scmp.eq.s32.totalorder %s16, 0
    %p106 = por %p104, %p105
    %s107 = ssub.s32 %s10, %s17
    %p108 = scmp.eq.s32.totalorder %s107, 0
    %s110 = sadd.s32 %s109, 1
    %s111 = scalar_select %p108, %s109, %s110
    %p114 = pneg %p108
    %p115 = scmp.eq.s32.totalorder %s10, 1
    %p116 = por %p114, %p115
    %p117 = scmp.ne.s32.totalorder %s109, %s112
    %p118 = scmp.eq.s32.totalorder %s10, 0
    %p119 = por %p117, %p118
    %p120 = scmp.ne.s32.totalorder %s109, %s112
    %p121 = scmp.eq.s32.totalorder %s15, 1
    %p122 = por %p120, %p121
    %p123 = scmp.ne.s32.totalorder %s112, %s113
    %p124 = scmp.eq.s32.totalorder %s15, 0
    %p125 = por %p123, %p124
    %p126 = scmp.ne.s32.totalorder %s112, %s113
    %p127 = scmp.eq.s32.totalorder %s16, 1
    %p128 = por %p126, %p127
    %p130 = scmp.ne.s32.totalorder %s113, %s129
    %p131 = scmp.eq.s32.totalorder %s16, 0
    %p132 = por %p130, %p131
    %p133 = scmp.le.s32.totalorder 1, %s10
    %p134 = scmp.lt.s32.totalorder %s10, 3
    %p135 = pnand %p133, %p134
    %p136 = pneg %p135
    // Predicated region
    $region9: #{image_encoder_forward.16} parent=5 // pred_check
      _
    $region10: #{image_encoder_forward.16} parent=5 // pred_check_branch
      %138 = sbr.rel (%p135) target = $region12
    $region11: #{image_encoder_forward.16} parent=5 // pred_region
      %s139 = ssub.s32 %s10, 1
      // Predicated region
      $region13: #{image_encoder_forward.16} parent=11 // pred_check
        %p140 = pneg %p57
      $region14: #{image_encoder_forward.16} parent=11 // pred_check_branch
        %142 = sbr.rel (%p140) target = $region16
      $region15: #{image_encoder_forward.16} parent=11 // pred_region
        _
      $region16: #{image_encoder_forward.16} parent=11 // pred_fallthru
        _
      // Predicated region
      $region17: #{image_encoder_forward.16} parent=11 // pred_check
        %p143 = pneg %p78
      $region18: #{image_encoder_forward.16} parent=11 // pred_check_branch
        %145 = sbr.rel (%p143) target = $region20
      $region19: #{image_encoder_forward.16} parent=11 // pred_region
        _
      $region20: #{image_encoder_forward.16} parent=11 // pred_fallthru
        _
      // Predicated region
      $region21: #{image_encoder_forward.16} parent=11 // pred_check
        %p146 = pneg %p99
      $region22: #{image_encoder_forward.16} parent=11 // pred_check_branch
        %148 = sbr.rel (%p146) target = $region24
      $region23: #{image_encoder_forward.16} parent=11 // pred_region
        _
      $region24: #{image_encoder_forward.16} parent=11 // pred_fallthru
        _
    $region12: #{image_encoder_forward.16} parent=5 // pred_fallthru
      _
    %p149 = scmp.lt.s32.totalorder %s10, 2
    // Predicated region
    $region25: #{image_encoder_forward.16} parent=5 // pred_check
      %p150 = pneg %p149
    $region26: #{image_encoder_forward.16} parent=5 // pred_check_branch
      %152 = sbr.rel (%p150) target = $region28
    $region27: #{image_encoder_forward.16} parent=5 // pred_region
      // Predicated region
      $region29: #{image_encoder_forward.16} parent=27 // pred_check
        %p153 = pneg %p30
      $region30: #{image_encoder_forward.16} parent=27 // pred_check_branch
        %155 = sbr.rel (%p153) target = $region32
      $region31: #{image_encoder_forward.16} parent=27 // pred_region
        %p156 = scmp.lt.s32.totalorder %s10, 1
        %s157 = scalar_select %p156, %s10, 1
        %s158 = smul.addr %s157, 8
        %s159 = scalar_lea.vmem %s0, %s158
      $region32: #{image_encoder_forward.16} parent=27 // pred_fallthru
        _
    $region28: #{image_encoder_forward.16} parent=5 // pred_fallthru
      _
    %p160 = scmp.le.s32.totalorder 1, %s10
    %p161 = scmp.lt.s32.totalorder %s10, 3
    %p162 = pnand %p160, %p161
    %p163 = pneg %p162
    // Predicated region
    $region33: #{image_encoder_forward.16} parent=5 // pred_check
      _
    $region34: #{image_encoder_forward.16} parent=5 // pred_check_branch
      %165 = sbr.rel (%p162) target = $region36
    $region35: #{image_encoder_forward.16} parent=5 // pred_region
      %s166 = ssub.s32 %s10, 1
      %p167 = scmp.lt.s32.totalorder %s15, 1
      %s168 = scalar_select %p167, %s15, 1
      %s169 = smul.addr %s168, 8
      %s170 = scalar_lea.vmem %s0, %s169
      %p171 = pneg %p36
      %p172 = pneg %p33
      %p173 = pneg %p57
      %p174 = pneg %p54
      %p175 = pneg %p78
      %p176 = pneg %p75
      %p177 = pneg %p99
      %p178 = pneg %p96
      %p179 = pneg %p125
      %p180 = pneg %p122
      %p181 = scmp.lt.s32.totalorder %s15, 1
      %s182 = scalar_select %p181, %s15, 1
      %s183 = smul.addr %s182, 8
      %s184 = scalar_lea.vmem %s4, %s183
      %p185 = scmp.lt.s32.totalorder %s15, 1
      %s186 = scalar_select %p185, %s15, 1
      %s187 = smul.addr %s186, 8
      %s188 = scalar_lea.vmem %s0, %s187
      %p189 = scmp.lt.s32.totalorder %s15, 1
      %s190 = scalar_select %p189, %s15, 1
      %s191 = smul.addr %s190, 8
      %s192 = scalar_lea.vmem %s4, %s191
      %v193 = vld [vmem:[%s188] sm:$0x1f]
      %v194 = vld [vmem:[%s1] sm:$0x1f]
      %v195 = vadd.f32 %v193, %v194
      %vm196 = vcmask 1044480
      %v197 = vsel %vm196, %v195, 0.0
      %198 = vadd.xlane.f32.xlu0 %v197
      %v199 = vpop.xlane.xlu0 %198
      %v200 = vrcp.pop 128.0
      %v201 = vmul.f32 %v199, %v200
      %v202 = vsub.f32 %v195, %v201
      %v203 = vmul.f32 %v202, %v202
      %v204 = vsel %vm196, %v203, 0.0
      %205 = vadd.xlane.f32.xlu0 %v204
      %v206 = vpop.xlane.xlu0 %205
      %v207 = vmul.f32 %v206, %v200
      %v208 = vadd.f32 %v207, 1e-05
      %v209 = vrsqrt.pop %v208
      %v210 = vmul.f32 %v202, %v209
      %v211 = vld [vmem:[%s2] sm:$0x1]
      %v213 = vlaneseq
      %v214 = vshrl.u32 %v213, 7
      %v215 = vsub.s32 0, %v214
      %v216 = vrot.slane %v211, %v215
      %v218 = vmul.f32 %v210, %v216
      %v219 = vld [vmem:[%s3] sm:$0x1]
      %v221 = vlaneseq
      %v222 = vshrl.u32 %v221, 7
      %v223 = vsub.s32 0, %v222
      %v224 = vrot.slane %v219, %v223
      %v226 = vadd.f32 %v218, %v224
      %227 = vst [vmem:[%s192] sm:$0x1f] %v226
      %p228 = scmp.lt.s32.totalorder %s15, 1
      %s229 = scalar_select %p228, %s15, 1
      %s230 = smul.addr %s229, 8
      %s231 = scalar_lea.vmem %s4, %s230
      // Predicated region
      $region37: #{image_encoder_forward.16} parent=35 // pred_check
        %p232 = pneg %p122
      $region38: #{image_encoder_forward.16} parent=35 // pred_check_branch
        %234 = sbr.rel (%p232) target = $region40
      $region39: #{image_encoder_forward.16} parent=35 // pred_region
        _
      $region40: #{image_encoder_forward.16} parent=35 // pred_fallthru
        _
    $region36: #{image_encoder_forward.16} parent=5 // pred_fallthru
      _
    %p235 = scmp.le.s32.totalorder 2, %s10
    // Predicated region
    $region41: #{image_encoder_forward.16} parent=5 // pred_check
      %p236 = pneg %p235
    $region42: #{image_encoder_forward.16} parent=5 // pred_check_branch
      %238 = sbr.rel (%p236) target = $region44
    $region43: #{image_encoder_forward.16} parent=5 // pred_region
      %s239 = ssub.s32 %s10, 2
      // Predicated region
      $region45: #{image_encoder_forward.16} parent=43 // pred_check
        %p240 = pneg %p128
      $region46: #{image_encoder_forward.16} parent=43 // pred_check_branch
        %242 = sbr.rel (%p240) target = $region48
      $region47: #{image_encoder_forward.16} parent=43 // pred_region
        %p243 = scmp.lt.s32.totalorder %s16, 1
        %s244 = scalar_select %p243, %s16, 1
        %s245 = smul.addr %s244, 8
        %s246 = scalar_lea.vmem %s4, %s245
      $region48: #{image_encoder_forward.16} parent=43 // pred_fallthru
        _
    $region44: #{image_encoder_forward.16} parent=5 // pred_fallthru
      _
  $region6: #{image_encoder_forward.16} parent=0 // loop_footer
    %s14 = sadd.s32 1, %s10
  $region7: #{image_encoder_forward.16} parent=0 // loop_footer_branch
    %9 = sbr.rel target = $region3
  $region8: #{image_encoder_forward.16} parent=0 // loop_exit
    _

// kernel: image_encoder_forward.15
$region0: #{image_encoder_forward.15}
  #allocation0 [shape = 'u32[]', space=smem, size = 0x4, offset = 0x4, fixed_abs, tag = 'smem constant byte address 0x4 - core index']
  #allocation1 [shape = 'u32[144,128]{1,0:T(1,128)}', space=vmem, size = 0x12000, scoped, tag = 'internal scratch']
  %s0 = inlined_call_operand.vmem [shape: bf16[8,192], index: 0, kind: input, shape index: {}]
  %s1 = inlined_call_operand.vmem [shape: bf16[192,128], index: 1, kind: input, shape index: {}]
  %s2 = inlined_call_operand.vmem [shape: f32[8,128], index: 2, kind: output, shape index: {}]
  %s3 = sld [smem:[#allocation0]]
  $region18: #{image_encoder_forward.15} parent=0
    _
  %s5 = ssub.s32 1, %s3
  %s6 = scalar_select 0, %s5, %s3
  // Predicated region
  $region2: #{image_encoder_forward.15} parent=0 // pred_check
    _
  $region3: #{image_encoder_forward.15} parent=0 // pred_check_branch
    %8 = sbr.rel (0) target = $region5
  $region4: #{image_encoder_forward.15} parent=0 // pred_region
    _
  $region5: #{image_encoder_forward.15} parent=0 // pred_fallthru
    _
  // Predicated region
  $region6: #{image_encoder_forward.15} parent=0 // pred_check
    _
  $region7: #{image_encoder_forward.15} parent=0 // pred_check_branch
    %10 = sbr.rel (0) target = $region9
  $region8: #{image_encoder_forward.15} parent=0 // pred_region
    _
  $region9: #{image_encoder_forward.15} parent=0 // pred_fallthru
    _
  %v12 = vld [vmem:[%s0] sm:$0xff]
  %v13 = vld [vmem:[%s1] sm:$0xf]
  %v14 = vld [vmem:[%s1 + $0x4] sm:$0xf]
  %v15 = vld [vmem:[%s1 + $0x8] sm:$0xf]
  %v16 = vld [vmem:[%s1 + $0xc] sm:$0xf]
  %v17 = vld [vmem:[%s1 + $0x10] sm:$0xf]
  %v18 = vld [vmem:[%s1 + $0x14] sm:$0xf]
  %v19 = vld [vmem:[%s1 + $0x18] sm:$0xf]
  %v20 = vld [vmem:[%s1 + $0x1c] sm:$0xf]
  %v21 = vld [vmem:[%s1 + $0x20] sm:$0xf]
  %v22 = vld [vmem:[%s1 + $0x24] sm:$0xf]
  %v23 = vld [vmem:[%s1 + $0x28] sm:$0xf]
  %v24 = vld [vmem:[%s1 + $0x2c] sm:$0xf]
  %v25 = vld [vmem:[%s1 + $0x30] sm:$0xf]
  %v26 = vld [vmem:[%s1 + $0x34] sm:$0xf]
  %v27 = vld [vmem:[%s1 + $0x38] sm:$0xf]
  %v28 = vld [vmem:[%s1 + $0x3c] sm:$0xf]
  %v29 = vld [vmem:[%s1 + $0x40] sm:$0xf]
  %v30 = vld [vmem:[%s1 + $0x44] sm:$0xf]
  %v31 = vld [vmem:[%s1 + $0x48] sm:$0xf]
  %v32 = vld [vmem:[%s1 + $0x4c] sm:$0xf]
  %v33 = vld [vmem:[%s1 + $0x50] sm:$0xf]
  %v34 = vld [vmem:[%s1 + $0x54] sm:$0xf]
  %v35 = vld [vmem:[%s1 + $0x58] sm:$0xf]
  %v36 = vld [vmem:[%s1 + $0x5c] sm:$0xf]
  %v38 = vunpack.c.l.b16 %v12
  %v39 = vunpack.c.h.b16 %v12
  %v40 = vpack.c.b16 %v38, %v38
  %v41 = vpack.c.b16 %v39, %v39
  %v67 = vunpack.c.l.b16 %v13
  %v68 = vunpack.c.l.b16 %v14
  %v69 = vunpack.c.l.b16 %v15
  %v70 = vunpack.c.l.b16 %v16
  %v71 = vunpack.c.l.b16 %v17
  %v72 = vunpack.c.l.b16 %v18
  %v73 = vunpack.c.l.b16 %v19
  %v74 = vunpack.c.l.b16 %v20
  %v75 = vunpack.c.l.b16 %v21
  %v76 = vunpack.c.l.b16 %v22
  %v77 = vunpack.c.l.b16 %v23
  %v78 = vunpack.c.l.b16 %v24
  %v79 = vunpack.c.l.b16 %v25
  %v80 = vunpack.c.l.b16 %v26
  %v81 = vunpack.c.l.b16 %v27
  %v82 = vunpack.c.l.b16 %v28
  %v83 = vunpack.c.l.b16 %v29
  %v84 = vunpack.c.l.b16 %v30
  %v85 = vunpack.c.l.b16 %v31
  %v86 = vunpack.c.l.b16 %v32
  %v87 = vunpack.c.l.b16 %v33
  %v88 = vunpack.c.l.b16 %v34
  %v89 = vunpack.c.l.b16 %v35
  %v90 = vunpack.c.l.b16 %v36
  %v91 = vpack.c.b16 %v68, %v67
  %v92 = vpack.c.b16 %v70, %v69
  %v93 = vpack.c.b16 %v72, %v71
  %v94 = vpack.c.b16 %v74, %v73
  %v95 = vpack.c.b16 %v76, %v75
  %v96 = vpack.c.b16 %v78, %v77
  %v97 = vpack.c.b16 %v80, %v79
  %v98 = vpack.c.b16 %v82, %v81
  %v99 = vpack.c.b16 %v84, %v83
  %v100 = vpack.c.b16 %v86, %v85
  %v101 = vpack.c.b16 %v88, %v87
  %v102 = vpack.c.b16 %v90, %v89
  %vm115 = vcmask 523264
  %v117 = vsel %vm115, %v41, 0
  %119 = vmatprep.subr.bf16.mxu0 0
  %120 = vmatpush1.bf16.msra.mxu0 %v98
  %121 = vmatprep.subr.bf16.mxu0 0
  %122 = vmatpush1.bf16.msra.mxu0 %v97
  %123 = vmatprep.subr.bf16.mxu0 0
  %124 = vmatpush1.bf16.msra.mxu0 %v96
  %125 = vmatprep.subr.bf16.mxu0 0
  %126 = vmatpush1.bf16.msra.mxu0 %v95
  %127 = vmatprep.subr.bf16.mxu0 0
  %128 = vmatpush1.bf16.msra.mxu0 %v94
  %129 = vmatprep.subr.bf16.mxu0 0
  %130 = vmatpush1.bf16.msra.mxu0 %v93
  %131 = vmatprep.subr.bf16.mxu0 0
  %132 = vmatpush1.bf16.msra.mxu0 %v92
  %133 = vmatprep.subr.bf16.mxu0 0
  %134 = vmatpush1.bf16.msra.mxu0 %v91
  %135 = vmatprep.subr.bf16.mxu0 0
  %136 = vmatpush2.bf16.msra.mxu0 0
  %137 = vmatprep.subr.bf16.mxu0 0
  %138 = vmatpush2.bf16.msra.mxu0 0
  %139 = vmatprep.subr.bf16.mxu0 0
  %140 = vmatpush2.bf16.msra.mxu0 0
  %141 = vmatprep.subr.bf16.mxu0 0
  %142 = vmatpush2.bf16.msra.mxu0 0
  %143 = vmatprep.subr.bf16.mxu0 0
  %144 = vmatpush2.bf16.msra.mxu0 %v102
  %145 = vmatprep.subr.bf16.mxu0 0
  %146 = vmatpush2.bf16.msra.mxu0 %v101
  %147 = vmatprep.subr.bf16.mxu0 0
  %148 = vmatpush2.bf16.msra.mxu0 %v100
  %149 = vmatprep.subr.bf16.mxu0 0
  %150 = vmatpush2.bf16.msra.mxu0 %v99
  %151 = vmatprep.mubr.bf16.mxu0 %v117
  %152 = vmatmul.mubr.bf16.gmra.mxu0 %v40
  %v153 = vpop.f32.mrf.mxu0
  %v154 = vadd.f32 0.0, %v153
  %v155 = vpop.f32.mrf.mxu0
  %v156 = vpop.f32.mrf.mxu0
  %v157 = vpop.f32.mrf.mxu0
  %158 = vdwg.mxu0
  %159 = vst [vmem:[%s2] sm:$0xff] %v154
  // Predicated region
  $region10: #{image_encoder_forward.15} parent=0 // pred_check
    _
  $region11: #{image_encoder_forward.15} parent=0 // pred_check_branch
    %161 = sbr.rel (0) target = $region13
  $region12: #{image_encoder_forward.15} parent=0 // pred_region
    _
  $region13: #{image_encoder_forward.15} parent=0 // pred_fallthru
    _
  // Predicated region
  $region14: #{image_encoder_forward.15} parent=0 // pred_check
    _
  $region15: #{image_encoder_forward.15} parent=0 // pred_check_branch
    %163 = sbr.rel (0) target = $region17
  $region16: #{image_encoder_forward.15} parent=0 // pred_region
    _
  $region17: #{image_encoder_forward.15} parent=0 // pred_fallthru
    _

// kernel: image_encoder_forward.17
$region0: #{image_encoder_forward.17}
  #allocation0 [shape = 'u32[]', space=smem, size = 0x4, offset = 0x4, fixed_abs, tag = 'smem constant byte address 0x4 - core index']
  #allocation1 [shape = 'u32[144,128]{1,0:T(1,128)}', space=vmem, size = 0x12000, scoped, tag = 'internal scratch']
  #allocation2 [shape = 'bf16[10,128]{1,0:T(8,128)(2,1)}', space=vmem, size = 0x1000, scoped, tag = 'scratch operand']
  %s0 = inlined_call_operand.vmem [shape: f32[10,128], index: 0, kind: input, shape index: {}]
  %s1 = inlined_call_operand.vmem [shape: f32[1,128], index: 1, kind: input, shape index: {}]
  %s2 = inlined_call_operand.vmem [shape: f32[1,128], index: 2, kind: input, shape index: {}]
  %s3 = inlined_call_operand.vmem [shape: bf16[128,384], index: 3, kind: input, shape index: {}]
  %s4 = inlined_call_operand.vmem [shape: f32[1,384], index: 4, kind: input, shape index: {}]
  %s5 = inlined_call_operand.vmem [shape: bf16[10,384], index: 5, kind: output, shape index: {}]
  %s6 = sld [smem:[#allocation0]]
  $region135: #{image_encoder_forward.17} parent=0
    _
  %s8 = ssub.s32 1, %s6
  %s9 = scalar_select 0, %s8, %s6
  $region1: #{image_encoder_forward.17} parent=0
    #allocation3 [shape = 'u8[65536]{0}', space=vmem, size = 0x10000, scoped, tag = 'input window, operand 3']
    #allocation4 [shape = 'u8[8192]{0}', space=vmem, size = 0x2000, scoped, tag = 'output window, operand 0']
    loop: start=0, step=1, limit=5
    $region2: #{image_encoder_forward.17} parent=1 // loop_pre_header
      _
    $region3: #{image_encoder_forward.17} parent=1 // loop_header
      %s11 = sphi 0, %s15
      %p12 = scmp.ge.s32.totalorder %s11, 5
      %s18 = sphi 0, %s30
      %s19 = sphi 0, %s26
      %s20 = sphi 0, %s18
      %s21 = sphi 0, %s19
      %s22 = sphi 0, %s20
      %s23 = sphi 0, %s21
      %s33 = sphi 0, %s35
      %s36 = sphi 0, %s33
      %s37 = sphi 0, %s36
      %s53 = sphi 0, %s37
      %s57 = sphi 0, %s57
      %s59 = sphi 0, %s57
      %s60 = sphi 0, %s59
      %s74 = sphi 0, %s60
      %s78 = sphi 0, %s78
      %s80 = sphi 0, %s78
      %s81 = sphi 0, %s80
      %s95 = sphi 0, %s81
      %s101 = sphi 0, %s103
      %s104 = sphi 0, %s101
      %s105 = sphi 0, %s104
      %s121 = sphi 0, %s105
      %s127 = sphi 0, %s129
      %s130 = sphi 0, %s127
      %s131 = sphi 0, %s130
      %s147 = sphi 0, %s131
      %s155 = sphi 0, %s157
      %s158 = sphi 0, %s155
      %s159 = sphi 0, %s158
      %s175 = sphi 0, %s159
    $region4: #{image_encoder_forward.17} parent=1 // loop_header_branch
      %14 = sbr.rel (%p12) target = $region8
    $region5: #{image_encoder_forward.17} parent=1 // loop_body
      %s16 = ssub.s32 %s11, 1
      %s17 = ssub.s32 %s11, 2
      %s24 = sadd.s32 1, %s19
      %p25 = scmp.ge.s32.totalorder %s24, 3
      %s26 = scalar_select %p25, 0, %s24
      %s27 = sadd.s32 1, %s18
      %s28 = scalar_select %p25, %s27, %s18
      %p29 = scmp.ge.s32.totalorder %s28, 1
      %s30 = scalar_select %p29, 0, %s28
      %s31 = ssub.s32 %s18, %s30
      %p32 = scmp.eq.s32.totalorder %s31, 0
      %s34 = sadd.s32 %s33, 1
      %s35 = scalar_select %p32, %s33, %s34
      %p38 = pneg %p32
      %p39 = scmp.eq.s32.totalorder %s11, 2
      %p40 = por %p38, %p39
      %p41 = scmp.ne.s32.totalorder %s33, %s36
      %p42 = scmp.eq.s32.totalorder %s11, 0
      %p43 = por %p41, %p42
      %p44 = scmp.ne.s32.totalorder %s33, %s36
      %p45 = scmp.eq.s32.totalorder %s16, 2
      %p46 = por %p44, %p45
      %p47 = scmp.ne.s32.totalorder %s36, %s37
      %p48 = scmp.eq.s32.totalorder %s16, 0
      %p49 = por %p47, %p48
      %p50 = scmp.ne.s32.totalorder %s36, %s37
      %p51 = scmp.eq.s32.totalorder %s17, 2
      %p52 = por %p50, %p51
      %p54 = scmp.ne.s32.totalorder %s37, %s53
      %p55 = scmp.eq.s32.totalorder %s17, 0
      %p56 = por %p54, %p55
      %s58 = sadd.s32 %s57, 1
      %p61 = scmp.eq.s32.totalorder %s11, 2
      %p62 = scmp.ne.s32.totalorder %s57, %s59
      %p63 = scmp.eq.s32.totalorder %s11, 0
      %p64 = por %p62, %p63
      %p65 = scmp.ne.s32.totalorder %s57, %s59
      %p66 = scmp.eq.s32.totalorder %s16, 2
      %p67 = por %p65, %p66
      %p68 = scmp.ne.s32.totalorder %s59, %s60
      %p69 = scmp.eq.s32.totalorder %s16, 0
      %p70 = por %p68, %p69
      %p71 = scmp.ne.s32.totalorder %s59, %s60
      %p72 = scmp.eq.s32.totalorder %s17, 2
      %p73 = por %p71, %p72
      %p75 = scmp.ne.s32.totalorder %s60, %s74
      %p76 = scmp.eq.s32.totalorder %s17, 0
      %p77 = por %p75, %p76
      %s79 = sadd.s32 %s78, 1
      %p82 = scmp.eq.s32.totalorder %s11, 2
      %p83 = scmp.ne.s32.totalorder %s78, %s80
      %p84 = scmp.eq.s32.totalorder %s11, 0
      %p85 = por %p83, %p84
      %p86 = scmp.ne.s32.totalorder %s78, %s80
      %p87 = scmp.eq.s32.totalorder %s16, 2
      %p88 = por %p86, %p87
      %p89 = scmp.ne.s32.totalorder %s80, %s81
      %p90 = scmp.eq.s32.totalorder %s16, 0
      %p91 = por %p89, %p90
      %p92 = scmp.ne.s32.totalorder %s80, %s81
      %p93 = scmp.eq.s32.totalorder %s17, 2
      %p94 = por %p92, %p93
      %p96 = scmp.ne.s32.totalorder %s81, %s95
      %p97 = scmp.eq.s32.totalorder %s17, 0
      %p98 = por %p96, %p97
      %s99 = ssub.s32 %s19, %s26
      %p100 = scmp.eq.s32.totalorder %s99, 0
      %s102 = sadd.s32 %s101, 1
      %s103 = scalar_select %p100, %s101, %s102
      %p106 = pneg %p100
      %p107 = scmp.eq.s32.totalorder %s11, 2
      %p108 = por %p106, %p107
      %p109 = scmp.ne.s32.totalorder %s101, %s104
      %p110 = scmp.eq.s32.totalorder %s11, 0
      %p111 = por %p109, %p110
      %p112 = scmp.ne.s32.totalorder %s101, %s104
      %p113 = scmp.eq.s32.totalorder %s16, 2
      %p114 = por %p112, %p113
      %p115 = scmp.ne.s32.totalorder %s104, %s105
      %p116 = scmp.eq.s32.totalorder %s16, 0
      %p117 = por %p115, %p116
      %p118 = scmp.ne.s32.totalorder %s104, %s105
      %p119 = scmp.eq.s32.totalorder %s17, 2
      %p120 = por %p118, %p119
      %p122 = scmp.ne.s32.totalorder %s105, %s121
      %p123 = scmp.eq.s32.totalorder %s17, 0
      %p124 = por %p122, %p123
      %s125 = ssub.s32 %s19, %s26
      %p126 = scmp.eq.s32.totalorder %s125, 0
      %s128 = sadd.s32 %s127, 1
      %s129 = scalar_select %p126, %s127, %s128
      %p132 = pneg %p126
      %p133 = scmp.eq.s32.totalorder %s11, 2
      %p134 = por %p132, %p133
      %p135 = scmp.ne.s32.totalorder %s127, %s130
      %p136 = scmp.eq.s32.totalorder %s11, 0
      %p137 = por %p135, %p136
      %p138 = scmp.ne.s32.totalorder %s127, %s130
      %p139 = scmp.eq.s32.totalorder %s16, 2
      %p140 = por %p138, %p139
      %p141 = scmp.ne.s32.totalorder %s130, %s131
      %p142 = scmp.eq.s32.totalorder %s16, 0
      %p143 = por %p141, %p142
      %p144 = scmp.ne.s32.totalorder %s130, %s131
      %p145 = scmp.eq.s32.totalorder %s17, 2
      %p146 = por %p144, %p145
      %p148 = scmp.ne.s32.totalorder %s131, %s147
      %p149 = scmp.eq.s32.totalorder %s17, 0
      %p150 = por %p148, %p149
      %s151 = ssub.s32 %s18, %s30
      %s152 = ssub.s32 %s19, %s26
      %s153 = sor.u32 %s151, %s152
      %p154 = scmp.eq.s32.totalorder %s153, 0
      %s156 = sadd.s32 %s155, 1
      %s157 = scalar_select %p154, %s155, %s156
      %p160 = pneg %p154
      %p161 = scmp.eq.s32.totalorder %s11, 2
      %p162 = por %p160, %p161
      %p163 = scmp.ne.s32.totalorder %s155, %s158
      %p164 = scmp.eq.s32.totalorder %s11, 0
      %p165 = por %p163, %p164
      %p166 = scmp.ne.s32.totalorder %s155, %s158
      %p167 = scmp.eq.s32.totalorder %s16, 2
      %p168 = por %p166, %p167
      %p169 = scmp.ne.s32.totalorder %s158, %s159
      %p170 = scmp.eq.s32.totalorder %s16, 0
      %p171 = por %p169, %p170
      %p172 = scmp.ne.s32.totalorder %s158, %s159
      %p173 = scmp.eq.s32.totalorder %s17, 2
      %p174 = por %p172, %p173
      %p176 = scmp.ne.s32.totalorder %s159, %s175
      %p177 = scmp.eq.s32.totalorder %s17, 0
      %p178 = por %p176, %p177
      %p179 = scmp.le.s32.totalorder 1, %s11
      %p180 = scmp.lt.s32.totalorder %s11, 4
      %p181 = pnand %p179, %p180
      %p182 = pneg %p181
      // Predicated region
      $region9: #{image_encoder_forward.17} parent=5 // pred_check
        _
      $region10: #{image_encoder_forward.17} parent=5 // pred_check_branch
        %184 = sbr.rel (%p181) target = $region12
      $region11: #{image_encoder_forward.17} parent=5 // pred_region
        %s185 = ssub.s32 %s11, 1
        // Predicated region
        $region13: #{image_encoder_forward.17} parent=11 // pred_check
          %p186 = pneg %p49
        $region14: #{image_encoder_forward.17} parent=11 // pred_check_branch
          %188 = sbr.rel (%p186) target = $region16
        $region15: #{image_encoder_forward.17} parent=11 // pred_region
          %s189 = smul.u32 2, %s20
          %p190 = scmp.lt.s32.totalorder %s189, 1
          %s191 = scalar_select %p190, %s189, 1
          %s192 = smul.addr %s191, 8
          %s193 = scalar_lea.vmem %s0, %s192
          %s194 = smul.u32 2, %s20
        $region16: #{image_encoder_forward.17} parent=11 // pred_fallthru
          _
        // Predicated region
        $region17: #{image_encoder_forward.17} parent=11 // pred_check
          %p195 = pneg %p70
        $region18: #{image_encoder_forward.17} parent=11 // pred_check_branch
          %197 = sbr.rel (%p195) target = $region20
        $region19: #{image_encoder_forward.17} parent=11 // pred_region
          _
        $region20: #{image_encoder_forward.17} parent=11 // pred_fallthru
          _
        // Predicated region
        $region21: #{image_encoder_forward.17} parent=11 // pred_check
          %p198 = pneg %p91
        $region22: #{image_encoder_forward.17} parent=11 // pred_check_branch
          %200 = sbr.rel (%p198) target = $region24
        $region23: #{image_encoder_forward.17} parent=11 // pred_region
          _
        $region24: #{image_encoder_forward.17} parent=11 // pred_fallthru
          _
      $region12: #{image_encoder_forward.17} parent=5 // pred_fallthru
        _
      %p201 = scmp.lt.s32.totalorder %s11, 3
      // Predicated region
      $region25: #{image_encoder_forward.17} parent=5 // pred_check
        %p202 = pneg %p201
      $region26: #{image_encoder_forward.17} parent=5 // pred_check_branch
        %204 = sbr.rel (%p202) target = $region28
      $region27: #{image_encoder_forward.17} parent=5 // pred_region
        // Predicated region
        $region29: #{image_encoder_forward.17} parent=27 // pred_check
          %p205 = pneg %p111
        $region30: #{image_encoder_forward.17} parent=27 // pred_check_branch
          %207 = sbr.rel (%p205) target = $region32
        $region31: #{image_encoder_forward.17} parent=27 // pred_region
          %s208 = sand.u32 %s101, 1
          %s209 = sand.u32 %s101, 1
          %s210 = smul.addr %s209, 64
          %s211 = scalar_lea.vmem [#allocation3], %s210
          %s212 = smul.addr %s19, 4
          %s213 = scalar_lea.vmem %s3, %s212
          // Predicated region
          $region33: #{image_encoder_forward.17} parent=31 // pred_check
            _
          $region34: #{image_encoder_forward.17} parent=31 // pred_check_branch
            %215 = sbr.rel (0) target = $region36
          $region35: #{image_encoder_forward.17} parent=31 // pred_region
            // Predicated region
            $region37: #{image_encoder_forward.17} parent=35 // pred_check
              _
            $region38: #{image_encoder_forward.17} parent=35 // pred_check_branch
              %217 = sbr.rel target = $region40
            $region39: #{image_encoder_forward.17} parent=35 // pred_region
              // Predicated region
              $region52: #{image_encoder_forward.17} parent=39 // pred_check
                _
              $region53: #{image_encoder_forward.17} parent=39 // pred_check_branch
                %263 = sbr.rel (0) target = $region55
              $region54: #{image_encoder_forward.17} parent=39 // pred_region
                loop: start=0, step=1, limit=1
                $region56: #{image_encoder_forward.17} parent=54 // loop_pre_header
                  _
                $region57: #{image_encoder_forward.17} parent=54 // loop_header
                  %s265 = sphi 0, %s269
                  %p266 = scmp.ge.s32.totalorder %s265, 1
                  %s270 = sphi %s213, %s213
                  %s271 = sphi %s211, %s211
                $region58: #{image_encoder_forward.17} parent=54 // loop_header_branch
                  %268 = sbr.rel (%p266) target = $region62
                $region59: #{image_encoder_forward.17} parent=54 // loop_body
                  _
                $region60: #{image_encoder_forward.17} parent=54 // loop_footer
                  %s269 = sadd.s32 1, %s265
                $region61: #{image_encoder_forward.17} parent=54 // loop_footer_branch
                  %264 = sbr.rel target = $region57
                $region62: #{image_encoder_forward.17} parent=54 // loop_exit
                  _
                %s273 = ssub.s32 16, 1
                loop: start=0, step=1, limit=1
                $region63: #{image_encoder_forward.17} parent=54 // loop_pre_header
                  _
                $region64: #{image_encoder_forward.17} parent=54 // loop_header
                  %s275 = sphi 0, %s279
                  %p276 = scmp.ge.s32.totalorder %s275, 1
                  %s280 = sphi %s213, %s213
                  %s281 = sphi %s211, %s211
                $region65: #{image_encoder_forward.17} parent=54 // loop_header_branch
                  %278 = sbr.rel (%p276) target = $region69
                $region66: #{image_encoder_forward.17} parent=54 // loop_body
                  %v282 = vld [vmem:[%s280] sm:%s273]
                  %283 = vst [vmem:[%s281] sm:%s273] %v282
                  %v284 = vld [vmem:[%s280 + $0xc] sm:%s273]
                  %285 = vst [vmem:[%s281 + $0x4] sm:%s273] %v284
                  %v286 = vld [vmem:[%s280 + $0x18] sm:%s273]
                  %287 = vst [vmem:[%s281 + $0x8] sm:%s273] %v286
                  %v288 = vld [vmem:[%s280 + $0x24] sm:%s273]
                  %289 = vst [vmem:[%s281 + $0xc] sm:%s273] %v288
                  %v290 = vld [vmem:[%s280 + $0x30] sm:%s273]
                  %291 = vst [vmem:[%s281 + $0x10] sm:%s273] %v290
                  %v292 = vld [vmem:[%s280 + $0x3c] sm:%s273]
                  %293 = vst [vmem:[%s281 + $0x14] sm:%s273] %v292
                  %v294 = vld [vmem:[%s280 + $0x48] sm:%s273]
                  %295 = vst [vmem:[%s281 + $0x18] sm:%s273] %v294
                  %v296 = vld [vmem:[%s280 + $0x54] sm:%s273]
                  %297 = vst [vmem:[%s281 + $0x1c] sm:%s273] %v296
                  %v298 = vld [vmem:[%s280 + $0x60] sm:%s273]
                  %299 = vst [vmem:[%s281 + $0x20] sm:%s273] %v298
                  %v300 = vld [vmem:[%s280 + $0x6c] sm:%s273]
                  %301 = vst [vmem:[%s281 + $0x24] sm:%s273] %v300
                  %v302 = vld [vmem:[%s280 + $0x78] sm:%s273]
                  %303 = vst [vmem:[%s281 + $0x28] sm:%s273] %v302
                  %v304 = vld [vmem:[%s280 + $0x84] sm:%s273]
                  %305 = vst [vmem:[%s281 + $0x2c] sm:%s273] %v304
                  %v306 = vld [vmem:[%s280 + $0x90] sm:%s273]
                  %307 = vst [vmem:[%s281 + $0x30] sm:%s273] %v306
                  %v308 = vld [vmem:[%s280 + $0x9c] sm:%s273]
                  %309 = vst [vmem:[%s281 + $0x34] sm:%s273] %v308
                  %v310 = vld [vmem:[%s280 + $0xa8] sm:%s273]
                  %311 = vst [vmem:[%s281 + $0x38] sm:%s273] %v310
                  %v312 = vld [vmem:[%s280 + $0xb4] sm:%s273]
                  %313 = vst [vmem:[%s281 + $0x3c] sm:%s273] %v312
                $region67: #{image_encoder_forward.17} parent=54 // loop_footer
                  %s279 = sadd.s32 1, %s275
                $region68: #{image_encoder_forward.17} parent=54 // loop_footer_branch
                  %274 = sbr.rel target = $region64
                $region69: #{image_encoder_forward.17} parent=54 // loop_exit
                  _
              $region55: #{image_encoder_forward.17} parent=39 // pred_fallthru
                _
            $region40: #{image_encoder_forward.17} parent=35 // pred_fallthru
              _
            // Predicated region
            $region41: #{image_encoder_forward.17} parent=35 // pred_check
              _
            $region42: #{image_encoder_forward.17} parent=35 // pred_check_branch
              %219 = sbr.rel (0) target = $region44
            $region43: #{image_encoder_forward.17} parent=35 // pred_region
              %s221 = ssub.s32 16, 1
              loop: start=0, step=1, limit=1
              $region45: #{image_encoder_forward.17} parent=43 // loop_pre_header
                _
              $region46: #{image_encoder_forward.17} parent=43 // loop_header
                %s223 = sphi 0, %s227
                %p224 = scmp.ge.s32.totalorder %s223, 1
                %s228 = sphi %s213, %s213
                %s229 = sphi %s211, %s211
              $region47: #{image_encoder_forward.17} parent=43 // loop_header_branch
                %226 = sbr.rel (%p224) target = $region51
              $region48: #{image_encoder_forward.17} parent=43 // loop_body
                %v230 = vld [vmem:[%s228] sm:%s221]
                %231 = vst [vmem:[%s229] sm:%s221] %v230
                %v232 = vld [vmem:[%s228 + $0xc] sm:%s221]
                %233 = vst [vmem:[%s229 + $0x4] sm:%s221] %v232
                %v234 = vld [vmem:[%s228 + $0x18] sm:%s221]
                %235 = vst [vmem:[%s229 + $0x8] sm:%s221] %v234
                %v236 = vld [vmem:[%s228 + $0x24] sm:%s221]
                %237 = vst [vmem:[%s229 + $0xc] sm:%s221] %v236
                %v238 = vld [vmem:[%s228 + $0x30] sm:%s221]
                %239 = vst [vmem:[%s229 + $0x10] sm:%s221] %v238
                %v240 = vld [vmem:[%s228 + $0x3c] sm:%s221]
                %241 = vst [vmem:[%s229 + $0x14] sm:%s221] %v240
                %v242 = vld [vmem:[%s228 + $0x48] sm:%s221]
                %243 = vst [vmem:[%s229 + $0x18] sm:%s221] %v242
                %v244 = vld [vmem:[%s228 + $0x54] sm:%s221]
                %245 = vst [vmem:[%s229 + $0x1c] sm:%s221] %v244
                %v246 = vld [vmem:[%s228 + $0x60] sm:%s221]
                %247 = vst [vmem:[%s229 + $0x20] sm:%s221] %v246
                %v248 = vld [vmem:[%s228 + $0x6c] sm:%s221]
                %249 = vst [vmem:[%s229 + $0x24] sm:%s221] %v248
                %v250 = vld [vmem:[%s228 + $0x78] sm:%s221]
                %251 = vst [vmem:[%s229 + $0x28] sm:%s221] %v250
                %v252 = vld [vmem:[%s228 + $0x84] sm:%s221]
                %253 = vst [vmem:[%s229 + $0x2c] sm:%s221] %v252
                %v254 = vld [vmem:[%s228 + $0x90] sm:%s221]
                %255 = vst [vmem:[%s229 + $0x30] sm:%s221] %v254
                %v256 = vld [vmem:[%s228 + $0x9c] sm:%s221]
                %257 = vst [vmem:[%s229 + $0x34] sm:%s221] %v256
                %v258 = vld [vmem:[%s228 + $0xa8] sm:%s221]
                %259 = vst [vmem:[%s229 + $0x38] sm:%s221] %v258
                %v260 = vld [vmem:[%s228 + $0xb4] sm:%s221]
                %261 = vst [vmem:[%s229 + $0x3c] sm:%s221] %v260
              $region49: #{image_encoder_forward.17} parent=43 // loop_footer
                %s227 = sadd.s32 1, %s223
              $region50: #{image_encoder_forward.17} parent=43 // loop_footer_branch
                %222 = sbr.rel target = $region46
              $region51: #{image_encoder_forward.17} parent=43 // loop_exit
                _
            $region44: #{image_encoder_forward.17} parent=35 // pred_fallthru
              _
          $region36: #{image_encoder_forward.17} parent=31 // pred_fallthru
            _
          %314 = vnop
        $region32: #{image_encoder_forward.17} parent=27 // pred_fallthru
          _
        // Predicated region
        $region70: #{image_encoder_forward.17} parent=27 // pred_check
          %p315 = pneg %p137
        $region71: #{image_encoder_forward.17} parent=27 // pred_check_branch
          %317 = sbr.rel (%p315) target = $region73
        $region72: #{image_encoder_forward.17} parent=27 // pred_region
          %p318 = scmp.lt.s32.totalorder %s19, 2
          %s319 = scalar_select %p318, %s19, 2
          %s320 = scalar_lea.vmem %s4, %s319
        $region73: #{image_encoder_forward.17} parent=27 // pred_fallthru
          _
      $region28: #{image_encoder_forward.17} parent=5 // pred_fallthru
        _
      %p321 = scmp.le.s32.totalorder 1, %s11
      %p322 = scmp.lt.s32.totalorder %s11, 4
      %p323 = pnand %p321, %p322
      %p324 = pneg %p323
      // Predicated region
      $region74: #{image_encoder_forward.17} parent=5 // pred_check
        _
      $region75: #{image_encoder_forward.17} parent=5 // pred_check_branch
        %326 = sbr.rel (%p323) target = $region77
      $region76: #{image_encoder_forward.17} parent=5 // pred_region
        %s327 = ssub.s32 %s11, 1
        %s328 = sand.u32 %s104, 1
        %s329 = sand.u32 %s104, 1
        %s330 = smul.addr %s329, 64
        %s331 = scalar_lea.vmem [#allocation3], %s330
        // Predicated region
        $region78: #{image_encoder_forward.17} parent=76 // pred_check
          %p332 = pneg %p117
        $region79: #{image_encoder_forward.17} parent=76 // pred_check_branch
          %334 = sbr.rel (%p332) target = $region81
        $region80: #{image_encoder_forward.17} parent=76 // pred_region
          _
        $region81: #{image_encoder_forward.17} parent=76 // pred_fallthru
          _
        %s335 = smul.u32 2, %s20
        %p336 = scmp.lt.s32.totalorder %s335, 1
        %s337 = scalar_select %p336, %s335, 1
        %s338 = smul.addr %s337, 8
        %s339 = scalar_lea.vmem %s0, %s338
        %p340 = pneg %p49
        %p341 = pneg %p46
        %p342 = pneg %p70
        %p343 = pneg %p67
        %p344 = pneg %p91
        %p345 = pneg %p88
        %s346 = sand.u32 %s104, 1
        %s347 = sand.u32 %s104, 1
        %s348 = smul.addr %s347, 64
        %s349 = scalar_lea.vmem [#allocation3], %s348
        %p350 = pneg %p117
        %p351 = pneg %p114
        %p352 = scmp.lt.s32.totalorder %s21, 2
        %s353 = scalar_select %p352, %s21, 2
        %s354 = scalar_lea.vmem %s4, %s353
        %p355 = pneg %p143
        %p356 = pneg %p140
        %p357 = pneg %p171
        %p358 = pneg %p168
        %s359 = sand.u32 %s158, 1
        %s360 = sand.u32 %s158, 1
        %s361 = smul.addr %s360, 8
        %s362 = scalar_lea.vmem [#allocation4], %s361
        %s363 = smul.u32 2, %s20
        %p364 = scmp.lt.s32.totalorder %s363, 1
        %s365 = scalar_select %p364, %s363, 1
        %s366 = smul.addr %s365, 8
        %s367 = scalar_lea.vmem %s0, %s366
        %s368 = smul.u32 2, %s20
        %p369 = scmp.lt.s32.totalorder %s21, 2
        %s370 = scalar_select %p369, %s21, 2
        %s371 = scalar_lea.vmem %s4, %s370
        %s372 = smul.u32 2, %s20
        %p374 = scmp.eq.s32.totalorder %s21, 0
        // Predicated region
        $region82: #{image_encoder_forward.17} parent=76 // pred_check
          %p375 = pneg %p374
        $region83: #{image_encoder_forward.17} parent=76 // pred_check_branch
          %377 = sbr.rel (%p375) target = $region85
        $region84: #{image_encoder_forward.17} parent=76 // pred_region
          %v378 = vld [vmem:[%s367] sm:$0xff]
          %v379 = vld [vmem:[%s367 + $0x8] sm:$0x3]
          %380 = vadd.xlane.f32.xlu0 %v378
          %v381 = vpop.xlane.xlu0 %380
          %vm382 = vcmask 1041408
          %v383 = vsel %vm382, %v379, 0.0
          %384 = vadd.xlane.f32.xlu0 %v383
          %v385 = vpop.xlane.xlu0 %384
          %v386 = vrcp.pop 128.0
          %v387 = vmul.f32 %v381, %v386
          %v388 = vmul.f32 %v385, %v386
          %v389 = vsub.f32 %v378, %v387
          %v390 = vsub.f32 %v379, %v388
          %v391 = vmul.f32 %v389, %v389
          %v392 = vmul.f32 %v390, %v390
          %393 = vadd.xlane.f32.xlu0 %v391
          %v394 = vpop.xlane.xlu0 %393
          %v395 = vsel %vm382, %v392, 0.0
          %396 = vadd.xlane.f32.xlu0 %v395
          %v397 = vpop.xlane.xlu0 %396
          %v398 = vmul.f32 %v394, %v386
          %v399 = vmul.f32 %v397, %v386
          %v400 = vadd.f32 %v398, 1e-05
          %v401 = vadd.f32 %v399, 1e-05
          %v402 = vrsqrt.pop %v400
          %v403 = vrsqrt.pop %v401
          %v404 = vmul.f32 %v389, %v402
          %v405 = vmul.f32 %v390, %v403
          %v406 = vld [vmem:[%s1] sm:$0x1]
          %v408 = vlaneseq
          %v409 = vshrl.u32 %v408, 7
          %v410 = vsub.s32 0, %v409
          %v411 = vrot.slane %v406, %v410
          %v413 = vmul.f32 %v404, %v411
          %v414 = vmul.f32 %v405, %v411
          %v415 = vld [vmem:[%s2] sm:$0x1]
          %v417 = vlaneseq
          %v418 = vshrl.u32 %v417, 7
          %v419 = vsub.s32 0, %v418
          %v420 = vrot.slane %v415, %v419
          %v422 = vadd.f32 %v413, %v420
          %v423 = vadd.f32 %v414, %v420
          %v424 = vpack.c.bf16 %v423, %v422
          %v426 = vunpack.c.l.b16 %v424
          %v427 = vunpack.c.h.b16 %v424
          %v428 = vpack.c.b16 %v426, %v426
          %v429 = vpack.c.b16 %v427, %v427
          %432 = vst [vmem:[#allocation2] sm:$0xf] %v428
          %433 = vst [vmem:[#allocation2 + $0x4] sm:$0x1] %v429
        $region85: #{image_encoder_forward.17} parent=76 // pred_fallthru
          _
        %v434 = vld [vmem:[#allocation2] sm:$0xf]
        %v435 = vld [vmem:[#allocation2 + $0x4] sm:$0x1]
        %v436 = vld [vmem:[%s331] sm:$0xf]
        %v437 = vld [vmem:[%s331 + $0x4] sm:$0xf]
        %v438 = vld [vmem:[%s331 + $0x8] sm:$0xf]
        %v439 = vld [vmem:[%s331 + $0xc] sm:$0xf]
        %v440 = vld [vmem:[%s331 + $0x10] sm:$0xf]
        %v441 = vld [vmem:[%s331 + $0x14] sm:$0xf]
        %v442 = vld [vmem:[%s331 + $0x18] sm:$0xf]
        %v443 = vld [vmem:[%s331 + $0x1c] sm:$0xf]
        %v444 = vld [vmem:[%s331 + $0x20] sm:$0xf]
        %v445 = vld [vmem:[%s331 + $0x24] sm:$0xf]
        %v446 = vld [vmem:[%s331 + $0x28] sm:$0xf]
        %v447 = vld [vmem:[%s331 + $0x2c] sm:$0xf]
        %v448 = vld [vmem:[%s331 + $0x30] sm:$0xf]
        %v449 = vld [vmem:[%s331 + $0x34] sm:$0xf]
        %v450 = vld [vmem:[%s331 + $0x38] sm:$0xf]
        %v451 = vld [vmem:[%s331 + $0x3c] sm:$0xf]
        %v452 = vld [vmem:[%s371] sm:$0x1]
        %v454 = vlaneseq
        %v455 = vshrl.u32 %v454, 7
        %v456 = vsub.s32 0, %v455
        %v457 = vrot.slane %v452, %v456
        %v461 = vunpack.c.l.b16 %v434
        %v462 = vunpack.c.l.b16 %v435
        %v463 = vpack.c.b16 %v462, %v461
        %v481 = vunpack.c.l.b16 %v436
        %v482 = vunpack.c.l.b16 %v437
        %v483 = vunpack.c.l.b16 %v438
        %v484 = vunpack.c.l.b16 %v439
        %v485 = vunpack.c.l.b16 %v440
        %v486 = vunpack.c.l.b16 %v441
        %v487 = vunpack.c.l.b16 %v442
        %v488 = vunpack.c.l.b16 %v443
        %v489 = vunpack.c.l.b16 %v444
        %v490 = vunpack.c.l.b16 %v445
        %v491 = vunpack.c.l.b16 %v446
        %v492 = vunpack.c.l.b16 %v447
        %v493 = vunpack.c.l.b16 %v448
        %v494 = vunpack.c.l.b16 %v449
        %v495 = vunpack.c.l.b16 %v450
        %v496 = vunpack.c.l.b16 %v451
        %v497 = vpack.c.b16 %v482, %v481
        %v498 = vpack.c.b16 %v484, %v483
        %v499 = vpack.c.b16 %v486, %v485
        %v500 = vpack.c.b16 %v488, %v487
        %v501 = vpack.c.b16 %v490, %v489
        %v502 = vpack.c.b16 %v492, %v491
        %v503 = vpack.c.b16 %v494, %v493
        %v504 = vpack.c.b16 %v496, %v495
        %513 = vmatprep.subr.bf16.mxu0 0
        %514 = vmatpush1.bf16.msra.mxu0 %v504
        %515 = vmatprep.subr.bf16.mxu0 0
        %516 = vmatpush1.bf16.msra.mxu0 %v503
        %517 = vmatprep.subr.bf16.mxu0 0
        %518 = vmatpush1.bf16.msra.mxu0 %v502
        %519 = vmatprep.subr.bf16.mxu0 0
        %520 = vmatpush1.bf16.msra.mxu0 %v501
        %521 = vmatprep.subr.bf16.mxu0 0
        %522 = vmatpush1.bf16.msra.mxu0 %v500
        %523 = vmatprep.subr.bf16.mxu0 0
        %524 = vmatpush1.bf16.msra.mxu0 %v499
        %525 = vmatprep.subr.bf16.mxu0 0
        %526 = vmatpush1.bf16.msra.mxu0 %v498
        %527 = vmatprep.subr.bf16.mxu0 0
        %528 = vmatpush1.bf16.msra.mxu0 %v497
        %529 = vmatprep.subr.bf16.mxu0 0
        %530 = vmatpush2.bf16.msra.mxu0 0
        %531 = vmatprep.subr.bf16.mxu0 0
        %532 = vmatpush2.bf16.msra.mxu0 0
        %533 = vmatprep.subr.bf16.mxu0 0
        %534 = vmatpush2.bf16.msra.mxu0 0
        %535 = vmatprep.subr.bf16.mxu0 0
        %536 = vmatpush2.bf16.msra.mxu0 0
        %537 = vmatprep.subr.bf16.mxu0 0
        %538 = vmatpush2.bf16.msra.mxu0 0
        %539 = vmatprep.subr.bf16.mxu0 0
        %540 = vmatpush2.bf16.msra.mxu0 0
        %541 = vmatprep.subr.bf16.mxu0 0
        %542 = vmatpush2.bf16.msra.mxu0 0
        %543 = vmatprep.subr.bf16.mxu0 0
        %544 = vmatpush2.bf16.msra.mxu0 0
        %545 = vmatprep.mubr.bf16.mxu0 0
        %546 = vmatmul.mubr.bf16.gmra.mxu0 %v463
        %v547 = vpop.f32.mrf.mxu0
        %v548 = vadd.f32 %v457, %v547
        %v549 = vpop.f32.mrf.mxu0
        %v550 = vpop.f32.mrf.mxu0
        %v551 = vadd.f32 %v457, %v550
        %v552 = vpop.f32.mrf.mxu0
        %553 = vdwg.mxu0
        %v554 = vpack.c.bf16 %v551, %v548
        %v556 = vunpack.c.l.b16 %v554
        %v557 = vunpack.c.h.b16 %v554
        %v558 = vpack.c.b16 %v556, %v556
        %v559 = vpack.c.b16 %v557, %v557
        %562 = vst [vmem:[%s362] sm:$0xf] %v558
        %563 = vst [vmem:[%s362 + $0x4] sm:$0x1] %v559
        %s564 = sand.u32 %s158, 1
        %s565 = sand.u32 %s158, 1
        %s566 = smul.addr %s565, 8
        %s567 = scalar_lea.vmem [#allocation4], %s566
        // Predicated region
        $region86: #{image_encoder_forward.17} parent=76 // pred_check
          %p568 = pneg %p168
        $region87: #{image_encoder_forward.17} parent=76 // pred_check_branch
          %570 = sbr.rel (%p568) target = $region89
        $region88: #{image_encoder_forward.17} parent=76 // pred_region
          %s571 = smul.u32 2, %s20
          %s572 = smul.addr %s571, 3
          %s573 = sadd.s32 %s21, %s572
          %s574 = smul.addr %s573, 4
          %s575 = scalar_lea.vmem %s5, %s574
          // Predicated region
          $region90: #{image_encoder_forward.17} parent=88 // pred_check
            _
          $region91: #{image_encoder_forward.17} parent=88 // pred_check_branch
            %577 = sbr.rel (0) target = $region93
          $region92: #{image_encoder_forward.17} parent=88 // pred_region
            // Predicated region
            $region94: #{image_encoder_forward.17} parent=92 // pred_check
              _
            $region95: #{image_encoder_forward.17} parent=92 // pred_check_branch
              %579 = sbr.rel target = $region97
            $region96: #{image_encoder_forward.17} parent=92 // pred_region
              // Predicated region
              $region109: #{image_encoder_forward.17} parent=96 // pred_check
                _
              $region110: #{image_encoder_forward.17} parent=96 // pred_check_branch
                %597 = sbr.rel (0) target = $region112
              $region111: #{image_encoder_forward.17} parent=96 // pred_region
                loop: start=0, step=1, limit=1
                $region113: #{image_encoder_forward.17} parent=111 // loop_pre_header
                  _
                $region114: #{image_encoder_forward.17} parent=111 // loop_header
                  %s599 = sphi 0, %s603
                  %p600 = scmp.ge.s32.totalorder %s599, 1
                  %s604 = sphi %s567, %s567
                  %s605 = sphi %s575, %s575
                $region115: #{image_encoder_forward.17} parent=111 // loop_header_branch
                  %602 = sbr.rel (%p600) target = $region119
                $region116: #{image_encoder_forward.17} parent=111 // loop_body
                  _
                $region117: #{image_encoder_forward.17} parent=111 // loop_footer
                  %s603 = sadd.s32 1, %s599
                $region118: #{image_encoder_forward.17} parent=111 // loop_footer_branch
                  %598 = sbr.rel target = $region114
                $region119: #{image_encoder_forward.17} parent=111 // loop_exit
                  _
                %s607 = ssub.s32 16, 1
                loop: start=0, step=1, limit=1
                $region120: #{image_encoder_forward.17} parent=111 // loop_pre_header
                  _
                $region121: #{image_encoder_forward.17} parent=111 // loop_header
                  %s609 = sphi 0, %s613
                  %p610 = scmp.ge.s32.totalorder %s609, 1
                  %s614 = sphi %s567, %s567
                  %s615 = sphi %s575, %s575
                $region122: #{image_encoder_forward.17} parent=111 // loop_header_branch
                  %612 = sbr.rel (%p610) target = $region126
                $region123: #{image_encoder_forward.17} parent=111 // loop_body
                  %v616 = vld [vmem:[%s614] sm:%s607]
                  %617 = vst [vmem:[%s615] sm:%s607] %v616
                  %v618 = vld [vmem:[%s614 + $0x4] sm:%s607]
                  %619 = vst [vmem:[%s615 + $0xc] sm:%s607] %v618
                $region124: #{image_encoder_forward.17} parent=111 // loop_footer
                  %s613 = sadd.s32 1, %s609
                $region125: #{image_encoder_forward.17} parent=111 // loop_footer_branch
                  %608 = sbr.rel target = $region121
                $region126: #{image_encoder_forward.17} parent=111 // loop_exit
                  _
              $region112: #{image_encoder_forward.17} parent=96 // pred_fallthru
                _
            $region97: #{image_encoder_forward.17} parent=92 // pred_fallthru
              _
            // Predicated region
            $region98: #{image_encoder_forward.17} parent=92 // pred_check
              _
            $region99: #{image_encoder_forward.17} parent=92 // pred_check_branch
              %581 = sbr.rel (0) target = $region101
            $region100: #{image_encoder_forward.17} parent=92 // pred_region
              %s583 = ssub.s32 16, 1
              loop: start=0, step=1, limit=1
              $region102: #{image_encoder_forward.17} parent=100 // loop_pre_header
                _
              $region103: #{image_encoder_forward.17} parent=100 // loop_header
                %s585 = sphi 0, %s589
                %p586 = scmp.ge.s32.totalorder %s585, 1
                %s590 = sphi %s567, %s567
                %s591 = sphi %s575, %s575
              $region104: #{image_encoder_forward.17} parent=100 // loop_header_branch
                %588 = sbr.rel (%p586) target = $region108
              $region105: #{image_encoder_forward.17} parent=100 // loop_body
                %v592 = vld [vmem:[%s590] sm:%s583]
                %593 = vst [vmem:[%s591] sm:%s583] %v592
                %v594 = vld [vmem:[%s590 + $0x4] sm:%s583]
                %595 = vst [vmem:[%s591 + $0xc] sm:%s583] %v594
              $region106: #{image_encoder_forward.17} parent=100 // loop_footer
                %s589 = sadd.s32 1, %s585
              $region107: #{image_encoder_forward.17} parent=100 // loop_footer_branch
                %584 = sbr.rel target = $region103
              $region108: #{image_encoder_forward.17} parent=100 // loop_exit
                _
            $region101: #{image_encoder_forward.17} parent=92 // pred_fallthru
              _
          $region93: #{image_encoder_forward.17} parent=88 // pred_fallthru
            _
          %620 = vnop
        $region89: #{image_encoder_forward.17} parent=76 // pred_fallthru
          _
      $region77: #{image_encoder_forward.17} parent=5 // pred_fallthru
        _
      %p621 = scmp.le.s32.totalorder 2, %s11
      // Predicated region
      $region127: #{image_encoder_forward.17} parent=5 // pred_check
        %p622 = pneg %p621
      $region128: #{image_encoder_forward.17} parent=5 // pred_check_branch
        %624 = sbr.rel (%p622) target = $region130
      $region129: #{image_encoder_forward.17} parent=5 // pred_region
        %s625 = ssub.s32 %s11, 2
        // Predicated region
        $region131: #{image_encoder_forward.17} parent=129 // pred_check
          %p626 = pneg %p174
        $region132: #{image_encoder_forward.17} parent=129 // pred_check_branch
          %628 = sbr.rel (%p626) target = $region134
        $region133: #{image_encoder_forward.17} parent=129 // pred_region
          %s629 = sand.u32 %s159, 1
          %s630 = sand.u32 %s159, 1
          %s631 = smul.addr %s630, 8
          %s632 = scalar_lea.vmem [#allocation4], %s631
        $region134: #{image_encoder_forward.17} parent=129 // pred_fallthru
          _
      $region130: #{image_encoder_forward.17} parent=5 // pred_fallthru
        _
    $region6: #{image_encoder_forward.17} parent=1 // loop_footer
      %s15 = sadd.s32 1, %s11
    $region7: #{image_encoder_forward.17} parent=1 // loop_footer_branch
      %10 = sbr.rel target = $region3
    $region8: #{image_encoder_forward.17} parent=1 // loop_exit
      _

// kernel: image_encoder_forward.18
$region0: #{image_encoder_forward.18}
  #allocation0 [shape = 'u32[]', space=smem, size = 0x4, offset = 0x4, fixed_abs, tag = 'smem constant byte address 0x4 - core index']
  #allocation1 [shape = 'u32[144,128]{1,0:T(1,128)}', space=vmem, size = 0x12000, scoped, tag = 'internal scratch']
  %s0 = inlined_call_operand.vmem [shape: bf16[2,5,384], index: 0, kind: input, shape index: {}]
  %s1 = inlined_call_operand.vmem [shape: bf16[2,5,128], index: 1, kind: output, shape index: {}]
  %s2 = sld [smem:[#allocation0]]
  $region37: #{image_encoder_forward.18} parent=0
    _
  %s4 = ssub.s32 1, %s2
  %s5 = scalar_select 0, %s4, %s2
  loop: start=0, step=1, limit=4
  $region2: #{image_encoder_forward.18} parent=0 // loop_pre_header
    _
  $region3: #{image_encoder_forward.18} parent=0 // loop_header
    %s7 = sphi 0, %s11
    %p8 = scmp.ge.s32.totalorder %s7, 4
    %s17 = sphi 0, %s19
    %s20 = sphi 0, %s17
    %s21 = sphi 0, %s20
    %s37 = sphi 0, %s21
    %s43 = sphi 0, %s45
    %s46 = sphi 0, %s43
    %s47 = sphi 0, %s46
    %s63 = sphi 0, %s47
  $region4: #{image_encoder_forward.18} parent=0 // loop_header_branch
    %10 = sbr.rel (%p8) target = $region8
  $region5: #{image_encoder_forward.18} parent=0 // loop_body
    %s12 = ssub.s32 %s7, 1
    %s13 = ssub.s32 %s7, 2
    %s14 = sadd.s32 %s7, 1
    %s15 = ssub.s32 %s7, %s14
    %p16 = scmp.eq.s32.totalorder %s15, 0
    %s18 = sadd.s32 %s17, 1
    %s19 = scalar_select %p16, %s17, %s18
    %p22 = pneg %p16
    %p23 = scmp.eq.s32.totalorder %s7, 1
    %p24 = por %p22, %p23
    %p25 = scmp.ne.s32.totalorder %s17, %s20
    %p26 = scmp.eq.s32.totalorder %s7, 0
    %p27 = por %p25, %p26
    %p28 = scmp.ne.s32.totalorder %s17, %s20
    %p29 = scmp.eq.s32.totalorder %s12, 1
    %p30 = por %p28, %p29
    %p31 = scmp.ne.s32.totalorder %s20, %s21
    %p32 = scmp.eq.s32.totalorder %s12, 0
    %p33 = por %p31, %p32
    %p34 = scmp.ne.s32.totalorder %s20, %s21
    %p35 = scmp.eq.s32.totalorder %s13, 1
    %p36 = por %p34, %p35
    %p38 = scmp.ne.s32.totalorder %s21, %s37
    %p39 = scmp.eq.s32.totalorder %s13, 0
    %p40 = por %p38, %p39
    %s41 = ssub.s32 %s7, %s14
    %p42 = scmp.eq.s32.totalorder %s41, 0
    %s44 = sadd.s32 %s43, 1
    %s45 = scalar_select %p42, %s43, %s44
    %p48 = pneg %p42
    %p49 = scmp.eq.s32.totalorder %s7, 1
    %p50 = por %p48, %p49
    %p51 = scmp.ne.s32.totalorder %s43, %s46
    %p52 = scmp.eq.s32.totalorder %s7, 0
    %p53 = por %p51, %p52
    %p54 = scmp.ne.s32.totalorder %s43, %s46
    %p55 = scmp.eq.s32.totalorder %s12, 1
    %p56 = por %p54, %p55
    %p57 = scmp.ne.s32.totalorder %s46, %s47
    %p58 = scmp.eq.s32.totalorder %s12, 0
    %p59 = por %p57, %p58
    %p60 = scmp.ne.s32.totalorder %s46, %s47
    %p61 = scmp.eq.s32.totalorder %s13, 1
    %p62 = por %p60, %p61
    %p64 = scmp.ne.s32.totalorder %s47, %s63
    %p65 = scmp.eq.s32.totalorder %s13, 0
    %p66 = por %p64, %p65
    %p67 = scmp.le.s32.totalorder 1, %s7
    %p68 = scmp.lt.s32.totalorder %s7, 3
    %p69 = pnand %p67, %p68
    %p70 = pneg %p69
    // Predicated region
    $region9: #{image_encoder_forward.18} parent=5 // pred_check
      _
    $region10: #{image_encoder_forward.18} parent=5 // pred_check_branch
      %72 = sbr.rel (%p69) target = $region12
    $region11: #{image_encoder_forward.18} parent=5 // pred_region
      %s73 = ssub.s32 %s7, 1
    $region12: #{image_encoder_forward.18} parent=5 // pred_fallthru
      _
    %p74 = scmp.lt.s32.totalorder %s7, 2
    // Predicated region
    $region13: #{image_encoder_forward.18} parent=5 // pred_check
      %p75 = pneg %p74
    $region14: #{image_encoder_forward.18} parent=5 // pred_check_branch
      %77 = sbr.rel (%p75) target = $region16
    $region15: #{image_encoder_forward.18} parent=5 // pred_region
      // Predicated region
      $region17: #{image_encoder_forward.18} parent=15 // pred_check
        %p78 = pneg %p27
      $region18: #{image_encoder_forward.18} parent=15 // pred_check_branch
        %80 = sbr.rel (%p78) target = $region20
      $region19: #{image_encoder_forward.18} parent=15 // pred_region
        %p81 = scmp.lt.s32.totalorder %s7, 1
        %s82 = scalar_select %p81, %s7, 1
        %s83 = smul.addr %s82, 3
        %s84 = smul.addr %s83, 4
        %s85 = scalar_lea.vmem %s0, %s84
      $region20: #{image_encoder_forward.18} parent=15 // pred_fallthru
        _
    $region16: #{image_encoder_forward.18} parent=5 // pred_fallthru
      _
    %p86 = scmp.le.s32.totalorder 1, %s7
    %p87 = scmp.lt.s32.totalorder %s7, 3
    %p88 = pnand %p86, %p87
    %p89 = pneg %p88
    // Predicated region
    $region21: #{image_encoder_forward.18} parent=5 // pred_check
      _
    $region22: #{image_encoder_forward.18} parent=5 // pred_check_branch
      %91 = sbr.rel (%p88) target = $region24
    $region23: #{image_encoder_forward.18} parent=5 // pred_region
      %s92 = ssub.s32 %s7, 1
      %p93 = scmp.lt.s32.totalorder %s12, 1
      %s94 = scalar_select %p93, %s12, 1
      %s95 = smul.addr %s94, 3
      %s96 = smul.addr %s95, 4
      %s97 = scalar_lea.vmem %s0, %s96
      %p98 = pneg %p33
      %p99 = pneg %p30
      %p100 = pneg %p59
      %p101 = pneg %p56
      %p102 = scmp.lt.s32.totalorder %s12, 1
      %s103 = scalar_select %p102, %s12, 1
      %s104 = smul.addr %s103, 4
      %s105 = scalar_lea.vmem %s1, %s104
      %p106 = scmp.lt.s32.totalorder %s12, 1
      %s107 = scalar_select %p106, %s12, 1
      %s108 = smul.addr %s107, 3
      %s109 = smul.addr %s108, 4
      %s110 = scalar_lea.vmem %s0, %s109
      %p111 = scmp.lt.s32.totalorder %s12, 1
      %s112 = scalar_select %p111, %s12, 1
      %s113 = smul.addr %s112, 4
      %s114 = scalar_lea.vmem %s1, %s113
      %v116 = vld [vmem:[%s110] sm:$0x7]
      %v117 = vld [vmem:[%s110 + $0x4] sm:$0x7]
      %v118 = vld [vmem:[%s110 + $0x8] sm:$0x7]
      %vm119 = vcmask 261120
      %v121 = vsel %vm119, %v116, 0
      %v124 = vsel %vm119, %v117, 0
      %126 = vmatprep.subr.bf16.mxu0 0
      %127 = vmatpush1.bf16.xpose.msra.mxu0 0
      %128 = vmatprep.subr.bf16.mxu0 0
      %129 = vmatpush1.bf16.xpose.msra.mxu0 0
      %130 = vmatprep.subr.bf16.mxu0 0
      %131 = vmatpush1.bf16.xpose.msra.mxu0 0
      %132 = vmatprep.subr.bf16.mxu0 0
      %133 = vmatpush1.bf16.xpose.msra.mxu0 0
      %134 = vmatprep.subr.bf16.mxu0 0
      %135 = vmatpush1.bf16.xpose.msra.mxu0 0
      %136 = vmatprep.subr.bf16.mxu0 0
      %137 = vmatpush1.bf16.xpose.msra.mxu0 0
      %138 = vmatprep.subr.bf16.mxu0 0
      %139 = vmatpush1.bf16.xpose.msra.mxu0 0
      %140 = vmatprep.subr.bf16.mxu0 0
      %141 = vmatpush1.bf16.xpose.msra.mxu0 %v124
      %142 = vmatprep.subr.bf16.mxu0 0
      %143 = vmatpush2.bf16.xpose.msra.mxu0 0
      %144 = vmatprep.subr.bf16.mxu0 0
      %145 = vmatpush2.bf16.xpose.msra.mxu0 0
      %146 = vmatprep.subr.bf16.mxu0 0
      %147 = vmatpush2.bf16.xpose.msra.mxu0 0
      %148 = vmatprep.subr.bf16.mxu0 0
      %149 = vmatpush2.bf16.xpose.msra.mxu0 0
      %150 = vmatprep.subr.bf16.mxu0 0
      %151 = vmatpush2.bf16.xpose.msra.mxu0 0
      %152 = vmatprep.subr.bf16.mxu0 0
      %153 = vmatpush2.bf16.xpose.msra.mxu0 0
      %154 = vmatprep.subr.bf16.mxu0 0
      %155 = vmatpush2.bf16.xpose.msra.mxu0 0
      %156 = vmatprep.subr.bf16.mxu0 0
      %157 = vmatpush2.bf16.xpose.msra.mxu0 0
      %158 = vmatprep.mubr.bf16.mxu0 0
      %159 = vmatmul.mubr.bf16.gmra.mxu0 %v121
      %v160 = vpop.f32.mrf.mxu0
      %v161 = vadd.f32 0.0, %v160
      %v162 = vpop.f32.mrf.mxu0
      %v163 = vpop.f32.mrf.mxu0
      %v164 = vpop.f32.mrf.mxu0
      %165 = vdwg.mxu0
      %v166 = vmul.f32 %v161, 0.17677669
      %vm167 = vcmask 36864
      %v168 = vsel %vm167, %v166, -inf
      %169 = vmax.xlane.f32.xlu0 %v168
      %v170 = vpop.xlane.xlu0 %169
      %v171 = vsub.f32 %v166, %v170
      %v172 = vmul.f32 %v171, 1.442695
      %v173 = vpow.pop %v172
      %v174 = vsel %vm167, %v173, 0.0
      %175 = vadd.xlane.f32.xlu0 %v174
      %v176 = vpop.xlane.xlu0 %175
      %v177 = vrcp.pop %v176
      %v178 = vmul.f32 %v173, %v177
      %v179 = vpack.c.bf16 %v178, %v178
      %vm180 = vcmask 39936
      %v182 = vsel %vm180, %v179, 0
      %vm184 = vcmask 1041408
      %vm185 = vcmask 1042432
      %v186 = vsel %vm184, 4294967295, 65535
      %v187 = vsel %vm185, %v186, 0
      %v189 = vand.u32 %v118, %v187
      %191 = vmatprep.subr.bf16.mxu0 0
      %192 = vmatpush1.bf16.msra.mxu0 0
      %193 = vmatprep.subr.bf16.mxu0 0
      %194 = vmatpush1.bf16.msra.mxu0 0
      %195 = vmatprep.subr.bf16.mxu0 0
      %196 = vmatpush1.bf16.msra.mxu0 0
      %197 = vmatprep.subr.bf16.mxu0 0
      %198 = vmatpush1.bf16.msra.mxu0 0
      %199 = vmatprep.subr.bf16.mxu0 0
      %200 = vmatpush1.bf16.msra.mxu0 0
      %201 = vmatprep.subr.bf16.mxu0 0
      %202 = vmatpush1.bf16.msra.mxu0 0
      %203 = vmatprep.subr.bf16.mxu0 0
      %204 = vmatpush1.bf16.msra.mxu0 0
      %205 = vmatprep.subr.bf16.mxu0 0
      %206 = vmatpush1.bf16.msra.mxu0 %v189
      %207 = vmatprep.subr.bf16.mxu0 0
      %208 = vmatpush2.bf16.msra.mxu0 0
      %209 = vmatprep.subr.bf16.mxu0 0
      %210 = vmatpush2.bf16.msra.mxu0 0
      %211 = vmatprep.subr.bf16.mxu0 0
      %212 = vmatpush2.bf16.msra.mxu0 0
      %213 = vmatprep.subr.bf16.mxu0 0
      %214 = vmatpush2.bf16.msra.mxu0 0
      %215 = vmatprep.subr.bf16.mxu0 0
      %216 = vmatpush2.bf16.msra.mxu0 0
      %217 = vmatprep.subr.bf16.mxu0 0
      %218 = vmatpush2.bf16.msra.mxu0 0
      %219 = vmatprep.subr.bf16.mxu0 0
      %220 = vmatpush2.bf16.msra.mxu0 0
      %221 = vmatprep.subr.bf16.mxu0 0
      %222 = vmatpush2.bf16.msra.mxu0 0
      %223 = vmatprep.mubr.bf16.mxu0 0
      %224 = vmatmul.mubr.bf16.gmra.mxu0 %v182
      %v225 = vpop.f32.mrf.mxu0
      %v226 = vadd.f32 0.0, %v225
      %v227 = vpop.f32.mrf.mxu0
      %v228 = vpop.f32.mrf.mxu0
      %v229 = vpop.f32.mrf.mxu0
      %230 = vdwg.mxu0
      %v231 = vpack.c.bf16 %v226, %v226
      %vm232 = vcmask 256000
      %vm233 = vsmask.f32 2304
      %vm234 = vmand %vm232, %vm233
      %v235 = vld [vmem:[%s114] sm:$0x7]
      %v236 = vsel %vm234, %v231, %v235
      %237 = vst [vmem:[%s114] sm:$0x7] %v236
      %v238 = vld [vmem:[%s110] sm:$0x7]
      %v239 = vld [vmem:[%s110 + $0x4] sm:$0x7]
      %v240 = vld [vmem:[%s110 + $0x8] sm:$0x7]
      %v242 = vunpack.c.l.b16 %v238
      %v243 = vpack.c.b16 %v242, %v242
      %244 = vrot.lane.b32.xlu0 %v243, 96
      %v245 = vpop.permute.xlu0 %244
      %v247 = vunpack.c.l.b16 %v239
      %v248 = vpack.c.b16 %v247, %v247
      %249 = vrot.lane.b32.xlu0 %v248, 96
      %v250 = vpop.permute.xlu0 %249
      %v252 = vsel %vm119, %v245, 0
      %v255 = vsel %vm119, %v250, 0
      %257 = vmatprep.subr.bf16.mxu0 0
      %258 = vmatpush1.bf16.xpose.msra.mxu0 0
      %259 = vmatprep.subr.bf16.mxu0 0
      %260 = vmatpush1.bf16.xpose.msra.mxu0 0
      %261 = vmatprep.subr.bf16.mxu0 0
      %262 = vmatpush1.bf16.xpose.msra.mxu0 0
      %263 = vmatprep.subr.bf16.mxu0 0
      %264 = vmatpush1.bf16.xpose.msra.mxu0 0
      %265 = vmatprep.subr.bf16.mxu0 0
      %266 = vmatpush1.bf16.xpose.msra.mxu0 0
      %267 = vmatprep.subr.bf16.mxu0 0
      %268 = vmatpush1.bf16.xpose.msra.mxu0 0
      %269 = vmatprep.subr.bf16.mxu0 0
      %270 = vmatpush1.bf16.xpose.msra.mxu0 0
      %271 = vmatprep.subr.bf16.mxu0 0
      %272 = vmatpush1.bf16.xpose.msra.mxu0 %v255
      %273 = vmatprep.subr.bf16.mxu0 0
      %274 = vmatpush2.bf16.xpose.msra.mxu0 0
      %275 = vmatprep.subr.bf16.mxu0 0
      %276 = vmatpush2.bf16.xpose.msra.mxu0 0
      %277 = vmatprep.subr.bf16.mxu0 0
      %278 = vmatpush2.bf16.xpose.msra.mxu0 0
      %279 = vmatprep.subr.bf16.mxu0 0
      %280 = vmatpush2.bf16.xpose.msra.mxu0 0
      %281 = vmatprep.subr.bf16.mxu0 0
      %282 = vmatpush2.bf16.xpose.msra.mxu0 0
      %283 = vmatprep.subr.bf16.mxu0 0
      %284 = vmatpush2.bf16.xpose.msra.mxu0 0
      %285 = vmatprep.subr.bf16.mxu0 0
      %286 = vmatpush2.bf16.xpose.msra.mxu0 0
      %287 = vmatprep.subr.bf16.mxu0 0
      %288 = vmatpush2.bf16.xpose.msra.mxu0 0
      %289 = vmatprep.mubr.bf16.mxu0 0
      %290 = vmatmul.mubr.bf16.gmra.mxu0 %v252
      %v291 = vpop.f32.mrf.mxu0
      %v292 = vadd.f32 0.0, %v291
      %v293 = vpop.f32.mrf.mxu0
      %v294 = vpop.f32.mrf.mxu0
      %v295 = vpop.f32.mrf.mxu0
      %296 = vdwg.mxu0
      %v297 = vmul.f32 %v292, 0.17677669
      %v298 = vsel %vm167, %v297, -inf
      %299 = vmax.xlane.f32.xlu0 %v298
      %v300 = vpop.xlane.xlu0 %299
      %v301 = vsub.f32 %v297, %v300
      %v302 = vmul.f32 %v301, 1.442695
      %v303 = vpow.pop %v302
      %v304 = vsel %vm167, %v303, 0.0
      %305 = vadd.xlane.f32.xlu0 %v304
      %v306 = vpop.xlane.xlu0 %305
      %v307 = vrcp.pop %v306
      %v308 = vmul.f32 %v303, %v307
      %v309 = vpack.c.bf16 %v308, %v308
      %v311 = vunpack.c.l.b16 %v240
      %v312 = vpack.c.b16 %v311, %v311
      %313 = vrot.lane.b32.xlu0 %v312, 96
      %v314 = vpop.permute.xlu0 %313
      %v316 = vsel %vm180, %v309, 0
      %v319 = vand.u32 %v314, %v187
      %321 = vmatprep.subr.bf16.mxu0 0
      %322 = vmatpush1.bf16.msra.mxu0 0
      %323 = vmatprep.subr.bf16.mxu0 0
      %324 = vmatpush1.bf16.msra.mxu0 0
      %325 = vmatprep.subr.bf16.mxu0 0
      %326 = vmatpush1.bf16.msra.mxu0 0
      %327 = vmatprep.subr.bf16.mxu0 0
      %328 = vmatpush1.bf16.msra.mxu0 0
      %329 = vmatprep.subr.bf16.mxu0 0
      %330 = vmatpush1.bf16.msra.mxu0 0
      %331 = vmatprep.subr.bf16.mxu0 0
      %332 = vmatpush1.bf16.msra.mxu0 0
      %333 = vmatprep.subr.bf16.mxu0 0
      %334 = vmatpush1.bf16.msra.mxu0 0
      %335 = vmatprep.subr.bf16.mxu0 0
      %336 = vmatpush1.bf16.msra.mxu0 %v319
      %337 = vmatprep.subr.bf16.mxu0 0
      %338 = vmatpush2.bf16.msra.mxu0 0
      %339 = vmatprep.subr.bf16.mxu0 0
      %340 = vmatpush2.bf16.msra.mxu0 0
      %341 = vmatprep.subr.bf16.mxu0 0
      %342 = vmatpush2.bf16.msra.mxu0 0
      %343 = vmatprep.subr.bf16.mxu0 0
      %344 = vmatpush2.bf16.msra.mxu0 0
      %345 = vmatprep.subr.bf16.mxu0 0
      %346 = vmatpush2.bf16.msra.mxu0 0
      %347 = vmatprep.subr.bf16.mxu0 0
      %348 = vmatpush2.bf16.msra.mxu0 0
      %349 = vmatprep.subr.bf16.mxu0 0
      %350 = vmatpush2.bf16.msra.mxu0 0
      %351 = vmatprep.subr.bf16.mxu0 0
      %352 = vmatpush2.bf16.msra.mxu0 0
      %353 = vmatprep.mubr.bf16.mxu0 0
      %354 = vmatmul.mubr.bf16.gmra.mxu0 %v316
      %v355 = vpop.f32.mrf.mxu0
      %v356 = vadd.f32 0.0, %v355
      %v357 = vpop.f32.mrf.mxu0
      %v358 = vpop.f32.mrf.mxu0
      %v359 = vpop.f32.mrf.mxu0
      %360 = vdwg.mxu0
      %v361 = vpack.c.bf16 %v356, %v356
      %v363 = vunpack.c.l.b16 %v361
      %v364 = vpack.c.b16 %v363, %v363
      %365 = vrot.lane.b32.xlu0 %v364, 32
      %v366 = vpop.permute.xlu0 %365
      %vm368 = vcmask 518400
      %vm369 = vmand %vm368, %vm233
      %v370 = vld [vmem:[%s114] sm:$0x7]
      %v371 = vsel %vm369, %v366, %v370
      %372 = vst [vmem:[%s114] sm:$0x7] %v371
      %v373 = vld [vmem:[%s110] sm:$0x7]
      %v374 = vld [vmem:[%s110 + $0x4] sm:$0x7]
      %v375 = vld [vmem:[%s110 + $0x8] sm:$0x7]
      %v377 = vunpack.c.l.b16 %v373
      %v378 = vpack.c.b16 %v377, %v377
      %379 = vrot.lane.b32.xlu0 %v378, 64
      %v380 = vpop.permute.xlu0 %379
      %v382 = vunpack.c.l.b16 %v374
      %v383 = vpack.c.b16 %v382, %v382
      %384 = vrot.lane.b32.xlu0 %v383, 64
      %v385 = vpop.permute.xlu0 %384
      %v387 = vsel %vm119, %v380, 0
      %v390 = vsel %vm119, %v385, 0
      %392 = vmatprep.subr.bf16.mxu0 0
      %393 = vmatpush1.bf16.xpose.msra.mxu0 0
      %394 = vmatprep.subr.bf16.mxu0 0
      %395 = vmatpush1.bf16.xpose.msra.mxu0 0
      %396 = vmatprep.subr.bf16.mxu0 0
      %397 = vmatpush1.bf16.xpose.msra.mxu0 0
      %398 = vmatprep.subr.bf16.mxu0 0
      %399 = vmatpush1.bf16.xpose.msra.mxu0 0
      %400 = vmatprep.subr.bf16.mxu0 0
      %401 = vmatpush1.bf16.xpose.msra.mxu0 0
      %402 = vmatprep.subr.bf16.mxu0 0
      %403 = vmatpush1.bf16.xpose.msra.mxu0 0
      %404 = vmatprep.subr.bf16.mxu0 0
      %405 = vmatpush1.bf16.xpose.msra.mxu0 0
      %406 = vmatprep.subr.bf16.mxu0 0
      %407 = vmatpush1.bf16.xpose.msra.mxu0 %v390
      %408 = vmatprep.subr.bf16.mxu0 0
      %409 = vmatpush2.bf16.xpose.msra.mxu0 0
      %410 = vmatprep.subr.bf16.mxu0 0
      %411 = vmatpush2.bf16.xpose.msra.mxu0 0
      %412 = vmatprep.subr.bf16.mxu0 0
      %413 = vmatpush2.bf16.xpose.msra.mxu0 0
      %414 = vmatprep.subr.bf16.mxu0 0
      %415 = vmatpush2.bf16.xpose.msra.mxu0 0
      %416 = vmatprep.subr.bf16.mxu0 0
      %417 = vmatpush2.bf16.xpose.msra.mxu0 0
      %418 = vmatprep.subr.bf16.mxu0 0
      %419 = vmatpush2.bf16.xpose.msra.mxu0 0
      %420 = vmatprep.subr.bf16.mxu0 0
      %421 = vmatpush2.bf16.xpose.msra.mxu0 0
      %422 = vmatprep.subr.bf16.mxu0 0
      %423 = vmatpush2.bf16.xpose.msra.mxu0 0
      %424 = vmatprep.mubr.bf16.mxu0 0
      %425 = vmatmul.mubr.bf16.gmra.mxu0 %v387
      %v426 = vpop.f32.mrf.mxu0
      %v427 = vadd.f32 0.0, %v426
      %v428 = vpop.f32.mrf.mxu0
      %v429 = vpop.f32.mrf.mxu0
      %v430 = vpop.f32.mrf.mxu0
      %431 = vdwg.mxu0
      %v432 = vmul.f32 %v427, 0.17677669
      %v433 = vsel %vm167, %v432, -inf
      %434 = vmax.xlane.f32.xlu0 %v433
      %v435 = vpop.xlane.xlu0 %434
      %v436 = vsub.f32 %v432, %v435
      %v437 = vmul.f32 %v436, 1.442695
      %v438 = vpow.pop %v437
      %v439 = vsel %vm167, %v438, 0.0
      %440 = vadd.xlane.f32.xlu0 %v439
      %v441 = vpop.xlane.xlu0 %440
      %v442 = vrcp.pop %v441
      %v443 = vmul.f32 %v438, %v442
      %v444 = vpack.c.bf16 %v443, %v443
      %v446 = vunpack.c.l.b16 %v375
      %v447 = vpack.c.b16 %v446, %v446
      %448 = vrot.lane.b32.xlu0 %v447, 64
      %v449 = vpop.permute.xlu0 %448
      %v451 = vsel %vm180, %v444, 0
      %v454 = vand.u32 %v449, %v187
      %456 = vmatprep.subr.bf16.mxu0 0
      %457 = vmatpush1.bf16.msra.mxu0 0
      %458 = vmatprep.subr.bf16.mxu0 0
      %459 = vmatpush1.bf16.msra.mxu0 0
      %460 = vmatprep.subr.bf16.mxu0 0
      %461 = vmatpush1.bf16.msra.mxu0 0
      %462 = vmatprep.subr.bf16.mxu0 0
      %463 = vmatpush1.bf16.msra.mxu0 0
      %464 = vmatprep.subr.bf16.mxu0 0
      %465 = vmatpush1.bf16.msra.mxu0 0
      %466 = vmatprep.subr.bf16.mxu0 0
      %467 = vmatpush1.bf16.msra.mxu0 0
      %468 = vmatprep.subr.bf16.mxu0 0
      %469 = vmatpush1.bf16.msra.mxu0 0
      %470 = vmatprep.subr.bf16.mxu0 0
      %471 = vmatpush1.bf16.msra.mxu0 %v454
      %472 = vmatprep.subr.bf16.mxu0 0
      %473 = vmatpush2.bf16.msra.mxu0 0
      %474 = vmatprep.subr.bf16.mxu0 0
      %475 = vmatpush2.bf16.msra.mxu0 0
      %476 = vmatprep.subr.bf16.mxu0 0
      %477 = vmatpush2.bf16.msra.mxu0 0
      %478 = vmatprep.subr.bf16.mxu0 0
      %479 = vmatpush2.bf16.msra.mxu0 0
      %480 = vmatprep.subr.bf16.mxu0 0
      %481 = vmatpush2.bf16.msra.mxu0 0
      %482 = vmatprep.subr.bf16.mxu0 0
      %483 = vmatpush2.bf16.msra.mxu0 0
      %484 = vmatprep.subr.bf16.mxu0 0
      %485 = vmatpush2.bf16.msra.mxu0 0
      %486 = vmatprep.subr.bf16.mxu0 0
      %487 = vmatpush2.bf16.msra.mxu0 0
      %488 = vmatprep.mubr.bf16.mxu0 0
      %489 = vmatmul.mubr.bf16.gmra.mxu0 %v451
      %v490 = vpop.f32.mrf.mxu0
      %v491 = vadd.f32 0.0, %v490
      %v492 = vpop.f32.mrf.mxu0
      %v493 = vpop.f32.mrf.mxu0
      %v494 = vpop.f32.mrf.mxu0
      %495 = vdwg.mxu0
      %v496 = vpack.c.bf16 %v491, %v491
      %v498 = vunpack.c.l.b16 %v496
      %v499 = vpack.c.b16 %v498, %v498
      %500 = vrot.lane.b32.xlu0 %v499, 64
      %v501 = vpop.permute.xlu0 %500
      %vm503 = vcmask 780800
      %vm504 = vmand %vm503, %vm233
      %v505 = vld [vmem:[%s114] sm:$0x7]
      %v506 = vsel %vm504, %v501, %v505
      %507 = vst [vmem:[%s114] sm:$0x7] %v506
      %v508 = vld [vmem:[%s110] sm:$0x7]
      %v509 = vld [vmem:[%s110 + $0x4] sm:$0x7]
      %v510 = vld [vmem:[%s110 + $0x8] sm:$0x7]
      %v512 = vunpack.c.l.b16 %v508
      %v513 = vpack.c.b16 %v512, %v512
      %514 = vrot.lane.b32.xlu0 %v513, 32
      %v515 = vpop.permute.xlu0 %514
      %v517 = vunpack.c.l.b16 %v509
      %v518 = vpack.c.b16 %v517, %v517
      %519 = vrot.lane.b32.xlu0 %v518, 32
      %v520 = vpop.permute.xlu0 %519
      %v522 = vsel %vm119, %v515, 0
      %v525 = vsel %vm119, %v520, 0
      %527 = vmatprep.subr.bf16.mxu0 0
      %528 = vmatpush1.bf16.xpose.msra.mxu0 0
      %529 = vmatprep.subr.bf16.mxu0 0
      %530 = vmatpush1.bf16.xpose.msra.mxu0 0
      %531 = vmatprep.subr.bf16.mxu0 0
      %532 = vmatpush1.bf16.xpose.msra.mxu0 0
      %533 = vmatprep.subr.bf16.mxu0 0
      %534 = vmatpush1.bf16.xpose.msra.mxu0 0
      %535 = vmatprep.subr.bf16.mxu0 0
      %536 = vmatpush1.bf16.xpose.msra.mxu0 0
      %537 = vmatprep.subr.bf16.mxu0 0
      %538 = vmatpush1.bf16.xpose.msra.mxu0 0
      %539 = vmatprep.subr.bf16.mxu0 0
      %540 = vmatpush1.bf16.xpose.msra.mxu0 0
      %541 = vmatprep.subr.bf16.mxu0 0
      %542 = vmatpush1.bf16.xpose.msra.mxu0 %v525
      %543 = vmatprep.subr.bf16.mxu0 0
      %544 = vmatpush2.bf16.xpose.msra.mxu0 0
      %545 = vmatprep.subr.bf16.mxu0 0
      %546 = vmatpush2.bf16.xpose.msra.mxu0 0
      %547 = vmatprep.subr.bf16.mxu0 0
      %548 = vmatpush2.bf16.xpose.msra.mxu0 0
      %549 = vmatprep.subr.bf16.mxu0 0
      %550 = vmatpush2.bf16.xpose.msra.mxu0 0
      %551 = vmatprep.subr.bf16.mxu0 0
      %552 = vmatpush2.bf16.xpose.msra.mxu0 0
      %553 = vmatprep.subr.bf16.mxu0 0
      %554 = vmatpush2.bf16.xpose.msra.mxu0 0
      %555 = vmatprep.subr.bf16.mxu0 0
      %556 = vmatpush2.bf16.xpose.msra.mxu0 0
      %557 = vmatprep.subr.bf16.mxu0 0
      %558 = vmatpush2.bf16.xpose.msra.mxu0 0
      %559 = vmatprep.mubr.bf16.mxu0 0
      %560 = vmatmul.mubr.bf16.gmra.mxu0 %v522
      %v561 = vpop.f32.mrf.mxu0
      %v562 = vadd.f32 0.0, %v561
      %v563 = vpop.f32.mrf.mxu0
      %v564 = vpop.f32.mrf.mxu0
      %v565 = vpop.f32.mrf.mxu0
      %566 = vdwg.mxu0
      %v567 = vmul.f32 %v562, 0.17677669
      %v568 = vsel %vm167, %v567, -inf
      %569 = vmax.xlane.f32.xlu0 %v568
      %v570 = vpop.xlane.xlu0 %569
      %v571 = vsub.f32 %v567, %v570
      %v572 = vmul.f32 %v571, 1.442695
      %v573 = vpow.pop %v572
      %v574 = vsel %vm167, %v573, 0.0
      %575 = vadd.xlane.f32.xlu0 %v574
      %v576 = vpop.xlane.xlu0 %575
      %v577 = vrcp.pop %v576
      %v578 = vmul.f32 %v573, %v577
      %v579 = vpack.c.bf16 %v578, %v578
      %v581 = vunpack.c.l.b16 %v510
      %v582 = vpack.c.b16 %v581, %v581
      %583 = vrot.lane.b32.xlu0 %v582, 32
      %v584 = vpop.permute.xlu0 %583
      %v586 = vsel %vm180, %v579, 0
      %v589 = vand.u32 %v584, %v187
      %591 = vmatprep.subr.bf16.mxu0 0
      %592 = vmatpush1.bf16.msra.mxu0 0
      %593 = vmatprep.subr.bf16.mxu0 0
      %594 = vmatpush1.bf16.msra.mxu0 0
      %595 = vmatprep.subr.bf16.mxu0 0
      %596 = vmatpush1.bf16.msra.mxu0 0
      %597 = vmatprep.subr.bf16.mxu0 0
      %598 = vmatpush1.bf16.msra.mxu0 0
      %599 = vmatprep.subr.bf16.mxu0 0
      %600 = vmatpush1.bf16.msra.mxu0 0
      %601 = vmatprep.subr.bf16.mxu0 0
      %602 = vmatpush1.bf16.msra.mxu0 0
      %603 = vmatprep.subr.bf16.mxu0 0
      %604 = vmatpush1.bf16.msra.mxu0 0
      %605 = vmatprep.subr.bf16.mxu0 0
      %606 = vmatpush1.bf16.msra.mxu0 %v589
      %607 = vmatprep.subr.bf16.mxu0 0
      %608 = vmatpush2.bf16.msra.mxu0 0
      %609 = vmatprep.subr.bf16.mxu0 0
      %610 = vmatpush2.bf16.msra.mxu0 0
      %611 = vmatprep.subr.bf16.mxu0 0
      %612 = vmatpush2.bf16.msra.mxu0 0
      %613 = vmatprep.subr.bf16.mxu0 0
      %614 = vmatpush2.bf16.msra.mxu0 0
      %615 = vmatprep.subr.bf16.mxu0 0
      %616 = vmatpush2.bf16.msra.mxu0 0
      %617 = vmatprep.subr.bf16.mxu0 0
      %618 = vmatpush2.bf16.msra.mxu0 0
      %619 = vmatprep.subr.bf16.mxu0 0
      %620 = vmatpush2.bf16.msra.mxu0 0
      %621 = vmatprep.subr.bf16.mxu0 0
      %622 = vmatpush2.bf16.msra.mxu0 0
      %623 = vmatprep.mubr.bf16.mxu0 0
      %624 = vmatmul.mubr.bf16.gmra.mxu0 %v586
      %v625 = vpop.f32.mrf.mxu0
      %v626 = vadd.f32 0.0, %v625
      %v627 = vpop.f32.mrf.mxu0
      %v628 = vpop.f32.mrf.mxu0
      %v629 = vpop.f32.mrf.mxu0
      %630 = vdwg.mxu0
      %v631 = vpack.c.bf16 %v626, %v626
      %v633 = vunpack.c.l.b16 %v631
      %v634 = vpack.c.b16 %v633, %v633
      %635 = vrot.lane.b32.xlu0 %v634, 96
      %v636 = vpop.permute.xlu0 %635
      %vm638 = vcmask 1043200
      %vm639 = vmand %vm638, %vm233
      %v640 = vld [vmem:[%s114] sm:$0x7]
      %v641 = vsel %vm639, %v636, %v640
      %642 = vst [vmem:[%s114] sm:$0x7] %v641
      %p643 = scmp.lt.s32.totalorder %s12, 1
      %s644 = scalar_select %p643, %s12, 1
      %s645 = smul.addr %s644, 4
      %s646 = scalar_lea.vmem %s1, %s645
      // Predicated region
      $region25: #{image_encoder_forward.18} parent=23 // pred_check
        %p647 = pneg %p56
      $region26: #{image_encoder_forward.18} parent=23 // pred_check_branch
        %649 = sbr.rel (%p647) target = $region28
      $region27: #{image_encoder_forward.18} parent=23 // pred_region
        _
      $region28: #{image_encoder_forward.18} parent=23 // pred_fallthru
        _
    $region24: #{image_encoder_forward.18} parent=5 // pred_fallthru
      _
    %p650 = scmp.le.s32.totalorder 2, %s7
    // Predicated region
    $region29: #{image_encoder_forward.18} parent=5 // pred_check
      %p651 = pneg %p650
    $region30: #{image_encoder_forward.18} parent=5 // pred_check_branch
      %653 = sbr.rel (%p651) target = $region32
    $region31: #{image_encoder_forward.18} parent=5 // pred_region
      %s654 = ssub.s32 %s7, 2
      // Predicated region
      $region33: #{image_encoder_forward.18} parent=31 // pred_check
        %p655 = pneg %p62
      $region34: #{image_encoder_forward.18} parent=31 // pred_check_branch
        %657 = sbr.rel (%p655) target = $region36
      $region35: #{image_encoder_forward.18} parent=31 // pred_region
        %p658 = scmp.lt.s32.totalorder %s13, 1
        %s659 = scalar_select %p658, %s13, 1
        %s660 = smul.addr %s659, 4
        %s661 = scalar_lea.vmem %s1, %s660
      $region36: #{image_encoder_forward.18} parent=31 // pred_fallthru
        _
    $region32: #{image_encoder_forward.18} parent=5 // pred_fallthru
      _
  $region6: #{image_encoder_forward.18} parent=0 // loop_footer
    %s11 = sadd.s32 1, %s7
  $region7: #{image_encoder_forward.18} parent=0 // loop_footer_branch
    %6 = sbr.rel target = $region3
  $region8: #{image_encoder_forward.18} parent=0 // loop_exit
    _

// kernel: image_encoder_forward.19
$region0: #{image_encoder_forward.19}
  #allocation0 [shape = 'u32[]', space=smem, size = 0x4, offset = 0x4, fixed_abs, tag = 'smem constant byte address 0x4 - core index']
  #allocation1 [shape = 'u32[144,128]{1,0:T(1,128)}', space=vmem, size = 0x12000, scoped, tag = 'internal scratch']
  %s0 = inlined_call_operand.vmem [shape: bf16[10,128], index: 0, kind: input, shape index: {}]
  %s1 = inlined_call_operand.vmem [shape: bf16[128,128], index: 1, kind: input, shape index: {}]
  %s2 = inlined_call_operand.vmem [shape: f32[1,128], index: 2, kind: input, shape index: {}]
  %s3 = inlined_call_operand.vmem [shape: f32[10,128], index: 3, kind: input, shape index: {}]
  %s4 = inlined_call_operand.vmem [shape: f32[10,128], index: 4, kind: output, shape index: {}]
  %s5 = sld [smem:[#allocation0]]
  $region26: #{image_encoder_forward.19} parent=0
    _
  %s7 = ssub.s32 1, %s5
  %s8 = scalar_select 0, %s7, %s5
  // Predicated region
  $region2: #{image_encoder_forward.19} parent=0 // pred_check
    _
  $region3: #{image_encoder_forward.19} parent=0 // pred_check_branch
    %10 = sbr.rel (0) target = $region5
  $region4: #{image_encoder_forward.19} parent=0 // pred_region
    _
  $region5: #{image_encoder_forward.19} parent=0 // pred_fallthru
    _
  // Predicated region
  $region6: #{image_encoder_forward.19} parent=0 // pred_check
    _
  $region7: #{image_encoder_forward.19} parent=0 // pred_check_branch
    %12 = sbr.rel (0) target = $region9
  $region8: #{image_encoder_forward.19} parent=0 // pred_region
    _
  $region9: #{image_encoder_forward.19} parent=0 // pred_fallthru
    _
  // Predicated region
  $region10: #{image_encoder_forward.19} parent=0 // pred_check
    _
  $region11: #{image_encoder_forward.19} parent=0 // pred_check_branch
    %14 = sbr.rel (0) target = $region13
  $region12: #{image_encoder_forward.19} parent=0 // pred_region
    _
  $region13: #{image_encoder_forward.19} parent=0 // pred_fallthru
    _
  // Predicated region
  $region14: #{image_encoder_forward.19} parent=0 // pred_check
    _
  $region15: #{image_encoder_forward.19} parent=0 // pred_check_branch
    %16 = sbr.rel (0) target = $region17
  $region16: #{image_encoder_forward.19} parent=0 // pred_region
    _
  $region17: #{image_encoder_forward.19} parent=0 // pred_fallthru
    _
  %v18 = vld [vmem:[%s0] sm:$0xf]
  %v19 = vld [vmem:[%s0 + $0x4] sm:$0x1]
  %v20 = vld [vmem:[%s1] sm:$0xf]
  %v21 = vld [vmem:[%s1 + $0x4] sm:$0xf]
  %v22 = vld [vmem:[%s1 + $0x8] sm:$0xf]
  %v23 = vld [vmem:[%s1 + $0xc] sm:$0xf]
  %v24 = vld [vmem:[%s1 + $0x10] sm:$0xf]
  %v25 = vld [vmem:[%s1 + $0x14] sm:$0xf]
  %v26 = vld [vmem:[%s1 + $0x18] sm:$0xf]
  %v27 = vld [vmem:[%s1 + $0x1c] sm:$0xf]
  %v28 = vld [vmem:[%s1 + $0x20] sm:$0xf]
  %v29 = vld [vmem:[%s1 + $0x24] sm:$0xf]
  %v30 = vld [vmem:[%s1 + $0x28] sm:$0xf]
  %v31 = vld [vmem:[%s1 + $0x2c] sm:$0xf]
  %v32 = vld [vmem:[%s1 + $0x30] sm:$0xf]
  %v33 = vld [vmem:[%s1 + $0x34] sm:$0xf]
  %v34 = vld [vmem:[%s1 + $0x38] sm:$0xf]
  %v35 = vld [vmem:[%s1 + $0x3c] sm:$0xf]
  %v36 = vld [vmem:[%s2] sm:$0x1]
  %v38 = vlaneseq
  %v39 = vshrl.u32 %v38, 7
  %v40 = vsub.s32 0, %v39
  %v41 = vrot.slane %v36, %v40
  %v45 = vunpack.c.l.b16 %v18
  %v46 = vunpack.c.l.b16 %v19
  %v47 = vpack.c.b16 %v46, %v45
  %v65 = vunpack.c.l.b16 %v20
  %v66 = vunpack.c.l.b16 %v21
  %v67 = vunpack.c.l.b16 %v22
  %v68 = vunpack.c.l.b16 %v23
  %v69 = vunpack.c.l.b16 %v24
  %v70 = vunpack.c.l.b16 %v25
  %v71 = vunpack.c.l.b16 %v26
  %v72 = vunpack.c.l.b16 %v27
  %v73 = vunpack.c.l.b16 %v28
  %v74 = vunpack.c.l.b16 %v29
  %v75 = vunpack.c.l.b16 %v30
  %v76 = vunpack.c.l.b16 %v31
  %v77 = vunpack.c.l.b16 %v32
  %v78 = vunpack.c.l.b16 %v33
  %v79 = vunpack.c.l.b16 %v34
  %v80 = vunpack.c.l.b16 %v35
  %v81 = vpack.c.b16 %v66, %v65
  %v82 = vpack.c.b16 %v68, %v67
  %v83 = vpack.c.b16 %v70, %v69
  %v84 = vpack.c.b16 %v72, %v71
  %v85 = vpack.c.b16 %v74, %v73
  %v86 = vpack.c.b16 %v76, %v75
  %v87 = vpack.c.b16 %v78, %v77
  %v88 = vpack.c.b16 %v80, %v79
  %97 = vmatprep.subr.bf16.mxu0 0
  %98 = vmatpush1.bf16.msra.mxu0 %v88
  %99 = vmatprep.subr.bf16.mxu0 0
  %100 = vmatpush1.bf16.msra.mxu0 %v87
  %101 = vmatprep.subr.bf16.mxu0 0
  %102 = vmatpush1.bf16.msra.mxu0 %v86
  %103 = vmatprep.subr.bf16.mxu0 0
  %104 = vmatpush1.bf16.msra.mxu0 %v85
  %105 = vmatprep.subr.bf16.mxu0 0
  %106 = vmatpush1.bf16.msra.mxu0 %v84
  %107 = vmatprep.subr.bf16.mxu0 0
  %108 = vmatpush1.bf16.msra.mxu0 %v83
  %109 = vmatprep.subr.bf16.mxu0 0
  %110 = vmatpush1.bf16.msra.mxu0 %v82
  %111 = vmatprep.subr.bf16.mxu0 0
  %112 = vmatpush1.bf16.msra.mxu0 %v81
  %113 = vmatprep.subr.bf16.mxu0 0
  %114 = vmatpush2.bf16.msra.mxu0 0
  %115 = vmatprep.subr.bf16.mxu0 0
  %116 = vmatpush2.bf16.msra.mxu0 0
  %117 = vmatprep.subr.bf16.mxu0 0
  %118 = vmatpush2.bf16.msra.mxu0 0
  %119 = vmatprep.subr.bf16.mxu0 0
  %120 = vmatpush2.bf16.msra.mxu0 0
  %121 = vmatprep.subr.bf16.mxu0 0
  %122 = vmatpush2.bf16.msra.mxu0 0
  %123 = vmatprep.subr.bf16.mxu0 0
  %124 = vmatpush2.bf16.msra.mxu0 0
  %125 = vmatprep.subr.bf16.mxu0 0
  %126 = vmatpush2.bf16.msra.mxu0 0
  %127 = vmatprep.subr.bf16.mxu0 0
  %128 = vmatpush2.bf16.msra.mxu0 0
  %129 = vmatprep.mubr.bf16.mxu0 0
  %130 = vmatmul.mubr.bf16.gmra.mxu0 %v47
  %v131 = vpop.f32.mrf.mxu0
  %v132 = vadd.f32 %v41, %v131
  %v133 = vpop.f32.mrf.mxu0
  %v134 = vpop.f32.mrf.mxu0
  %v135 = vadd.f32 %v41, %v134
  %v136 = vpop.f32.mrf.mxu0
  %137 = vdwg.mxu0
  %v138 = vld [vmem:[%s3] sm:$0xff]
  %v139 = vld [vmem:[%s3 + $0x8] sm:$0x3]
  %v140 = vadd.f32 %v132, %v138
  %v141 = vadd.f32 %v135, %v139
  %142 = vst [vmem:[%s4] sm:$0xff] %v140
  %143 = vst [vmem:[%s4 + $0x8] sm:$0x3] %v141
  // Predicated region
  $region18: #{image_encoder_forward.19} parent=0 // pred_check
    _
  $region19: #{image_encoder_forward.19} parent=0 // pred_check_branch
    %145 = sbr.rel (0) target = $region21
  $region20: #{image_encoder_forward.19} parent=0 // pred_region
    _
  $region21: #{image_encoder_forward.19} parent=0 // pred_fallthru
    _
  // Predicated region
  $region22: #{image_encoder_forward.19} parent=0 // pred_check
    _
  $region23: #{image_encoder_forward.19} parent=0 // pred_check_branch
    %147 = sbr.rel (0) target = $region25
  $region24: #{image_encoder_forward.19} parent=0 // pred_region
    _
  $region25: #{image_encoder_forward.19} parent=0 // pred_fallthru
    _

// kernel: image_encoder_forward.29
$region0: #{image_encoder_forward.29}
  #allocation0 [shape = 'u32[]', space=smem, size = 0x4, offset = 0x4, fixed_abs, tag = 'smem constant byte address 0x4 - core index']
  #allocation1 [shape = 'u32[144,128]{1,0:T(1,128)}', space=vmem, size = 0x12000, scoped, tag = 'internal scratch']
  %s0 = inlined_call_operand.vmem [shape: f32[6,128], index: 0, kind: input, shape index: {}]
  %s1 = inlined_call_operand.vmem [shape: f32[1,128], index: 1, kind: input, shape index: {}]
  %s2 = inlined_call_operand.vmem [shape: f32[1,128], index: 2, kind: input, shape index: {}]
  %s3 = inlined_call_operand.vmem [shape: f32[6,128], index: 3, kind: output, shape index: {}]
  %s4 = sld [smem:[#allocation0]]
  $region22: #{image_encoder_forward.29} parent=0
    _
  %s6 = ssub.s32 1, %s4
  %s7 = scalar_select 0, %s6, %s4
  // Predicated region
  $region2: #{image_encoder_forward.29} parent=0 // pred_check
    _
  $region3: #{image_encoder_forward.29} parent=0 // pred_check_branch
    %9 = sbr.rel (0) target = $region5
  $region4: #{image_encoder_forward.29} parent=0 // pred_region
    _
  $region5: #{image_encoder_forward.29} parent=0 // pred_fallthru
    _
  // Predicated region
  $region6: #{image_encoder_forward.29} parent=0 // pred_check
    _
  $region7: #{image_encoder_forward.29} parent=0 // pred_check_branch
    %11 = sbr.rel (0) target = $region9
  $region8: #{image_encoder_forward.29} parent=0 // pred_region
    _
  $region9: #{image_encoder_forward.29} parent=0 // pred_fallthru
    _
  // Predicated region
  $region10: #{image_encoder_forward.29} parent=0 // pred_check
    _
  $region11: #{image_encoder_forward.29} parent=0 // pred_check_branch
    %13 = sbr.rel (0) target = $region13
  $region12: #{image_encoder_forward.29} parent=0 // pred_region
    _
  $region13: #{image_encoder_forward.29} parent=0 // pred_fallthru
    _
  %v14 = vld [vmem:[%s0] sm:$0x3f]
  %vm15 = vcmask 1045504
  %v16 = vsel %vm15, %v14, 0.0
  %17 = vadd.xlane.f32.xlu0 %v16
  %v18 = vpop.xlane.xlu0 %17
  %v19 = vrcp.pop 128.0
  %v20 = vmul.f32 %v18, %v19
  %v21 = vsub.f32 %v14, %v20
  %v22 = vmul.f32 %v21, %v21
  %v23 = vsel %vm15, %v22, 0.0
  %24 = vadd.xlane.f32.xlu0 %v23
  %v25 = vpop.xlane.xlu0 %24
  %v26 = vmul.f32 %v25, %v19
  %v27 = vadd.f32 %v26, 1e-05
  %v28 = vrsqrt.pop %v27
  %v29 = vmul.f32 %v21, %v28
  %v30 = vld [vmem:[%s1] sm:$0x1]
  %v32 = vlaneseq
  %v33 = vshrl.u32 %v32, 7
  %v34 = vsub.s32 0, %v33
  %v35 = vrot.slane %v30, %v34
  %v37 = vmul.f32 %v29, %v35
  %v38 = vld [vmem:[%s2] sm:$0x1]
  %v40 = vlaneseq
  %v41 = vshrl.u32 %v40, 7
  %v42 = vsub.s32 0, %v41
  %v43 = vrot.slane %v38, %v42
  %v45 = vadd.f32 %v37, %v43
  %46 = vst [vmem:[%s3] sm:$0x3f] %v45
  // Predicated region
  $region14: #{image_encoder_forward.29} parent=0 // pred_check
    _
  $region15: #{image_encoder_forward.29} parent=0 // pred_check_branch
    %48 = sbr.rel (0) target = $region17
  $region16: #{image_encoder_forward.29} parent=0 // pred_region
    _
  $region17: #{image_encoder_forward.29} parent=0 // pred_fallthru
    _
  // Predicated region
  $region18: #{image_encoder_forward.29} parent=0 // pred_check
    _
  $region19: #{image_encoder_forward.29} parent=0 // pred_check_branch
    %50 = sbr.rel (0) target = $region21
  $region20: #{image_encoder_forward.29} parent=0 // pred_region
    _
  $region21: #{image_encoder_forward.29} parent=0 // pred_fallthru
    _

// kernel: image_encoder_forward.20
$region0: #{image_encoder_forward.20}
  #allocation0 [shape = 'u32[]', space=smem, size = 0x4, offset = 0x4, fixed_abs, tag = 'smem constant byte address 0x4 - core index']
  #allocation1 [shape = 'u32[144,128]{1,0:T(1,128)}', space=vmem, size = 0x12000, scoped, tag = 'internal scratch']
  #allocation2 [shape = 'bf16[10,128]{1,0:T(8,128)(2,1)}', space=vmem, size = 0x1000, scoped, tag = 'scratch operand']
  #allocation3 [shape = 'f32[10,128]{1,0:T(8,128)}', space=vmem, size = 0x2000, scoped, tag = 'scratch operand']
  %s0 = inlined_call_operand.vmem [shape: f32[10,128], index: 0, kind: input, shape index: {}]
  %s1 = inlined_call_operand.vmem [shape: f32[1,128], index: 1, kind: input, shape index: {}]
  %s2 = inlined_call_operand.vmem [shape: f32[1,128], index: 2, kind: input, shape index: {}]
  %s3 = inlined_call_operand.vmem [shape: bf16[128,512], index: 3, kind: input, shape index: {}]
  %s4 = inlined_call_operand.vmem [shape: f32[1,512], index: 4, kind: input, shape index: {}]
  %s5 = inlined_call_operand.vmem [shape: bf16[512,128], index: 5, kind: input, shape index: {}]
  %s6 = inlined_call_operand.vmem [shape: f32[1,128], index: 6, kind: input, shape index: {}]
  %s7 = inlined_call_operand.vmem [shape: f32[10,128], index: 7, kind: output, shape index: {}]
  %s8 = sld [smem:[#allocation0]]
  $region46: #{image_encoder_forward.20} parent=0
    _
  %s10 = ssub.s32 1, %s8
  %s11 = scalar_select 0, %s10, %s8
  // Predicated region
  $region2: #{image_encoder_forward.20} parent=0 // pred_check
    _
  $region3: #{image_encoder_forward.20} parent=0 // pred_check_branch
    %13 = sbr.rel (0) target = $region5
  $region4: #{image_encoder_forward.20} parent=0 // pred_region
    _
  $region5: #{image_encoder_forward.20} parent=0 // pred_fallthru
    _
  // Predicated region
  $region6: #{image_encoder_forward.20} parent=0 // pred_check
    _
  $region7: #{image_encoder_forward.20} parent=0 // pred_check_branch
    %15 = sbr.rel (0) target = $region9
  $region8: #{image_encoder_forward.20} parent=0 // pred_region
    _
  $region9: #{image_encoder_forward.20} parent=0 // pred_fallthru
    _
  // Predicated region
  $region10: #{image_encoder_forward.20} parent=0 // pred_check
    _
  $region11: #{image_encoder_forward.20} parent=0 // pred_check_branch
    %17 = sbr.rel (0) target = $region13
  $region12: #{image_encoder_forward.20} parent=0 // pred_region
    _
  $region13: #{image_encoder_forward.20} parent=0 // pred_fallthru
    _
  // Predicated region
  $region14: #{image_encoder_forward.20} parent=0 // pred_check
    _
  $region15: #{image_encoder_forward.20} parent=0 // pred_check_branch
    %19 = sbr.rel (0) target = $region17
  $region16: #{image_encoder_forward.20} parent=0 // pred_region
    _
  $region17: #{image_encoder_forward.20} parent=0 // pred_fallthru
    _
  // Predicated region
  $region18: #{image_encoder_forward.20} parent=0 // pred_check
    _
  $region19: #{image_encoder_forward.20} parent=0 // pred_check_branch
    %21 = sbr.rel (0) target = $region21
  $region20: #{image_encoder_forward.20} parent=0 // pred_region
    _
  $region21: #{image_encoder_forward.20} parent=0 // pred_fallthru
    _
  // Predicated region
  $region22: #{image_encoder_forward.20} parent=0 // pred_check
    _
  $region23: #{image_encoder_forward.20} parent=0 // pred_check_branch
    %23 = sbr.rel (0) target = $region25
  $region24: #{image_encoder_forward.20} parent=0 // pred_region
    _
  $region25: #{image_encoder_forward.20} parent=0 // pred_fallthru
    _
  // Predicated region
  $region26: #{image_encoder_forward.20} parent=0 // pred_check
    _
  $region27: #{image_encoder_forward.20} parent=0 // pred_check_branch
    %25 = sbr.rel (0) target = $region29
  $region28: #{image_encoder_forward.20} parent=0 // pred_region
    _
  $region29: #{image_encoder_forward.20} parent=0 // pred_fallthru
    _
  %p27 = scmp.eq.s32.totalorder 0, 0
  // Predicated region
  $region30: #{image_encoder_forward.20} parent=0 // pred_check
    %p28 = pneg %p27
  $region31: #{image_encoder_forward.20} parent=0 // pred_check_branch
    %30 = sbr.rel (%p28) target = $region33
  $region32: #{image_encoder_forward.20} parent=0 // pred_region
    %v31 = vld [vmem:[%s0] sm:$0xff]
    %v32 = vld [vmem:[%s0 + $0x8] sm:$0x3]
    %33 = vadd.xlane.f32.xlu0 %v31
    %v34 = vpop.xlane.xlu0 %33
    %vm35 = vcmask 1041408
    %v36 = vsel %vm35, %v32, 0.0
    %37 = vadd.xlane.f32.xlu0 %v36
    %v38 = vpop.xlane.xlu0 %37
    %v39 = vrcp.pop 128.0
    %v40 = vmul.f32 %v34, %v39
    %v41 = vmul.f32 %v38, %v39
    %v42 = vsub.f32 %v31, %v40
    %v43 = vsub.f32 %v32, %v41
    %v44 = vmul.f32 %v42, %v42
    %v45 = vmul.f32 %v43, %v43
    %46 = vadd.xlane.f32.xlu0 %v44
    %v47 = vpop.xlane.xlu0 %46
    %v48 = vsel %vm35, %v45, 0.0
    %49 = vadd.xlane.f32.xlu0 %v48
    %v50 = vpop.xlane.xlu0 %49
    %v51 = vmul.f32 %v47, %v39
    %v52 = vmul.f32 %v50, %v39
    %v53 = vadd.f32 %v51, 1e-05
    %v54 = vadd.f32 %v52, 1e-05
    %v55 = vrsqrt.pop %v53
    %v56 = vrsqrt.pop %v54
    %v57 = vmul.f32 %v42, %v55
    %v58 = vmul.f32 %v43, %v56
    %v59 = vld [vmem:[%s1] sm:$0x1]
    %v61 = vlaneseq
    %v62 = vshrl.u32 %v61, 7
    %v63 = vsub.s32 0, %v62
    %v64 = vrot.slane %v59, %v63
    %v66 = vmul.f32 %v57, %v64
    %v67 = vmul.f32 %v58, %v64
    %v68 = vld [vmem:[%s2] sm:$0x1]
    %v70 = vlaneseq
    %v71 = vshrl.u32 %v70, 7
    %v72 = vsub.s32 0, %v71
    %v73 = vrot.slane %v68, %v72
    %v75 = vadd.f32 %v66, %v73
    %v76 = vadd.f32 %v67, %v73
    %v77 = vpack.c.bf16 %v76, %v75
    %v79 = vunpack.c.l.b16 %v77
    %v80 = vunpack.c.h.b16 %v77
    %v81 = vpack.c.b16 %v79, %v79
    %v82 = vpack.c.b16 %v80, %v80
    %85 = vst [vmem:[#allocation2] sm:$0xf] %v81
    %86 = vst [vmem:[#allocation2 + $0x4] sm:$0x1] %v82
    %v87 = vld [vmem:[%s6] sm:$0x1]
    %v89 = vlaneseq
    %v90 = vshrl.u32 %v89, 7
    %v91 = vsub.s32 0, %v90
    %v92 = vrot.slane %v87, %v91
    %v94 = vadd.f32 %v31, %v92
    %v95 = vadd.f32 %v32, %v92
    %96 = vst [vmem:[#allocation3] sm:$0xff] %v94
    %97 = vst [vmem:[#allocation3 + $0x8] sm:$0x3] %v95
  $region33: #{image_encoder_forward.20} parent=0 // pred_fallthru
    _
  %v98 = vld [vmem:[#allocation2] sm:$0xf]
  %v99 = vld [vmem:[#allocation2 + $0x4] sm:$0x1]
  %v100 = vld [vmem:[%s3] sm:$0xff]
  %v101 = vld [vmem:[%s3 + $0x8] sm:$0xff]
  %v102 = vld [vmem:[%s3 + $0x10] sm:$0xff]
  %v103 = vld [vmem:[%s3 + $0x18] sm:$0xff]
  %v104 = vld [vmem:[%s3 + $0x20] sm:$0xff]
  %v105 = vld [vmem:[%s3 + $0x28] sm:$0xff]
  %v106 = vld [vmem:[%s3 + $0x30] sm:$0xff]
  %v107 = vld [vmem:[%s3 + $0x38] sm:$0xff]
  %v108 = vld [vmem:[%s3 + $0x40] sm:$0xff]
  %v109 = vld [vmem:[%s3 + $0x48] sm:$0xff]
  %v110 = vld [vmem:[%s3 + $0x50] sm:$0xff]
  %v111 = vld [vmem:[%s3 + $0x58] sm:$0xff]
  %v112 = vld [vmem:[%s3 + $0x60] sm:$0xff]
  %v113 = vld [vmem:[%s3 + $0x68] sm:$0xff]
  %v114 = vld [vmem:[%s3 + $0x70] sm:$0xff]
  %v115 = vld [vmem:[%s3 + $0x78] sm:$0xff]
  %v116 = vld [vmem:[%s3 + $0x80] sm:$0xff]
  %v117 = vld [vmem:[%s3 + $0x88] sm:$0xff]
  %v118 = vld [vmem:[%s3 + $0x90] sm:$0xff]
  %v119 = vld [vmem:[%s3 + $0x98] sm:$0xff]
  %v120 = vld [vmem:[%s3 + $0xa0] sm:$0xff]
  %v121 = vld [vmem:[%s3 + $0xa8] sm:$0xff]
  %v122 = vld [vmem:[%s3 + $0xb0] sm:$0xff]
  %v123 = vld [vmem:[%s3 + $0xb8] sm:$0xff]
  %v124 = vld [vmem:[%s3 + $0xc0] sm:$0xff]
  %v125 = vld [vmem:[%s3 + $0xc8] sm:$0xff]
  %v126 = vld [vmem:[%s3 + $0xd0] sm:$0xff]
  %v127 = vld [vmem:[%s3 + $0xd8] sm:$0xff]
  %v128 = vld [vmem:[%s3 + $0xe0] sm:$0xff]
  %v129 = vld [vmem:[%s3 + $0xe8] sm:$0xff]
  %v130 = vld [vmem:[%s3 + $0xf0] sm:$0xff]
  %v131 = vld [vmem:[%s3 + $0xf8] sm:$0xff]
  %v132 = vld [vmem:[%s4] sm:$0xf]
  %v134 = vlaneseq
  %v135 = vshrl.u32 %v134, 7
  %v136 = vsub.s32 0, %v135
  %v137 = vrot.slane %v132, %v136
  %v138 = vlaneseq
  %v139 = vshrl.u32 %v138, 7
  %v140 = vsub.s32 1, %v139
  %v141 = vrot.slane %v132, %v140
  %v142 = vlaneseq
  %v143 = vshrl.u32 %v142, 7
  %v144 = vsub.s32 2, %v143
  %v145 = vrot.slane %v132, %v144
  %v146 = vlaneseq
  %v147 = vshrl.u32 %v146, 7
  %v148 = vsub.s32 3, %v147
  %v149 = vrot.slane %v132, %v148
  %v156 = vunpack.c.l.b16 %v98
  %v157 = vunpack.c.l.b16 %v99
  %v158 = vpack.c.b16 %v157, %v156
  %v192 = vunpack.c.l.b16 %v100
  %v193 = vunpack.c.h.b16 %v100
  %v194 = vunpack.c.l.b16 %v101
  %v195 = vunpack.c.h.b16 %v101
  %v196 = vunpack.c.l.b16 %v102
  %v197 = vunpack.c.h.b16 %v102
  %v198 = vunpack.c.l.b16 %v103
  %v199 = vunpack.c.h.b16 %v103
  %v200 = vunpack.c.l.b16 %v104
  %v201 = vunpack.c.h.b16 %v104
  %v202 = vunpack.c.l.b16 %v105
  %v203 = vunpack.c.h.b16 %v105
  %v204 = vunpack.c.l.b16 %v106
  %v205 = vunpack.c.h.b16 %v106
  %v206 = vunpack.c.l.b16 %v107
  %v207 = vunpack.c.h.b16 %v107
  %v208 = vunpack.c.l.b16 %v108
  %v209 = vunpack.c.h.b16 %v108
  %v210 = vunpack.c.l.b16 %v109
  %v211 = vunpack.c.h.b16 %v109
  %v212 = vunpack.c.l.b16 %v110
  %v213 = vunpack.c.h.b16 %v110
  %v214 = vunpack.c.l.b16 %v111
  %v215 = vunpack.c.h.b16 %v111
  %v216 = vunpack.c.l.b16 %v112
  %v217 = vunpack.c.h.b16 %v112
  %v218 = vunpack.c.l.b16 %v113
  %v219 = vunpack.c.h.b16 %v113
  %v220 = vunpack.c.l.b16 %v114
  %v221 = vunpack.c.h.b16 %v114
  %v222 = vunpack.c.l.b16 %v115
  %v223 = vunpack.c.h.b16 %v115
  %v224 = vunpack.c.l.b16 %v116
  %v225 = vunpack.c.h.b16 %v116
  %v226 = vunpack.c.l.b16 %v117
  %v227 = vunpack.c.h.b16 %v117
  %v228 = vunpack.c.l.b16 %v118
  %v229 = vunpack.c.h.b16 %v118
  %v230 = vunpack.c.l.b16 %v119
  %v231 = vunpack.c.h.b16 %v119
  %v232 = vunpack.c.l.b16 %v120
  %v233 = vunpack.c.h.b16 %v120
  %v234 = vunpack.c.l.b16 %v121
  %v235 = vunpack.c.h.b16 %v121
  %v236 = vunpack.c.l.b16 %v122
  %v237 = vunpack.c.h.b16 %v122
  %v238 = vunpack.c.l.b16 %v123
  %v239 = vunpack.c.h.b16 %v123
  %v240 = vunpack.c.l.b16 %v124
  %v241 = vunpack.c.h.b16 %v124
  %v242 = vunpack.c.l.b16 %v125
  %v243 = vunpack.c.h.b16 %v125
  %v244 = vunpack.c.l.b16 %v126
  %v245 = vunpack.c.h.b16 %v126
  %v246 = vunpack.c.l.b16 %v127
  %v247 = vunpack.c.h.b16 %v127
  %v248 = vunpack.c.l.b16 %v128
  %v249 = vunpack.c.h.b16 %v128
  %v250 = vunpack.c.l.b16 %v129
  %v251 = vunpack.c.h.b16 %v129
  %v252 = vunpack.c.l.b16 %v130
  %v253 = vunpack.c.h.b16 %v130
  %v254 = vunpack.c.l.b16 %v131
  %v255 = vunpack.c.h.b16 %v131
  %v256 = vpack.c.b16 %v196, %v192
  %v257 = vpack.c.b16 %v197, %v193
  %v258 = vpack.c.b16 %v198, %v194
  %v259 = vpack.c.b16 %v199, %v195
  %v260 = vpack.c.b16 %v204, %v200
  %v261 = vpack.c.b16 %v205, %v201
  %v262 = vpack.c.b16 %v206, %v202
  %v263 = vpack.c.b16 %v207, %v203
  %v264 = vpack.c.b16 %v212, %v208
  %v265 = vpack.c.b16 %v213, %v209
  %v266 = vpack.c.b16 %v214, %v210
  %v267 = vpack.c.b16 %v215, %v211
  %v268 = vpack.c.b16 %v220, %v216
  %v269 = vpack.c.b16 %v221, %v217
  %v270 = vpack.c.b16 %v222, %v218
  %v271 = vpack.c.b16 %v223, %v219
  %v272 = vpack.c.b16 %v228, %v224
  %v273 = vpack.c.b16 %v229, %v225
  %v274 = vpack.c.b16 %v230, %v226
  %v275 = vpack.c.b16 %v231, %v227
  %v276 = vpack.c.b16 %v236, %v232
  %v277 = vpack.c.b16 %v237, %v233
  %v278 = vpack.c.b16 %v238, %v234
  %v279 = vpack.c.b16 %v239, %v235
  %v280 = vpack.c.b16 %v244, %v240
  %v281 = vpack.c.b16 %v245, %v241
  %v282 = vpack.c.b16 %v246, %v242
  %v283 = vpack.c.b16 %v247, %v243
  %v284 = vpack.c.b16 %v252, %v248
  %v285 = vpack.c.b16 %v253, %v249
  %v286 = vpack.c.b16 %v254, %v250
  %v287 = vpack.c.b16 %v255, %v251
  %320 = vmatprep.subr.bf16.mxu0 %v285
  %321 = vmatpush1.bf16.msra.mxu0 %v284
  %322 = vmatprep.subr.bf16.mxu0 %v281
  %323 = vmatpush1.bf16.msra.mxu0 %v280
  %324 = vmatprep.subr.bf16.mxu0 %v277
  %325 = vmatpush1.bf16.msra.mxu0 %v276
  %326 = vmatprep.subr.bf16.mxu0 %v273
  %327 = vmatpush1.bf16.msra.mxu0 %v272
  %328 = vmatprep.subr.bf16.mxu0 %v269
  %329 = vmatpush1.bf16.msra.mxu0 %v268
  %330 = vmatprep.subr.bf16.mxu0 %v265
  %331 = vmatpush1.bf16.msra.mxu0 %v264
  %332 = vmatprep.subr.bf16.mxu0 %v261
  %333 = vmatpush1.bf16.msra.mxu0 %v260
  %334 = vmatprep.subr.bf16.mxu0 %v257
  %335 = vmatpush1.bf16.msra.mxu0 %v256
  %336 = vmatprep.subr.bf16.mxu0 0
  %337 = vmatpush2.bf16.msra.mxu0 0
  %338 = vmatprep.subr.bf16.mxu0 0
  %339 = vmatpush2.bf16.msra.mxu0 0
  %340 = vmatprep.subr.bf16.mxu0 0
  %341 = vmatpush2.bf16.msra.mxu0 0
  %342 = vmatprep.subr.bf16.mxu0 0
  %343 = vmatpush2.bf16.msra.mxu0 0
  %344 = vmatprep.subr.bf16.mxu0 0
  %345 = vmatpush2.bf16.msra.mxu0 0
  %346 = vmatprep.subr.bf16.mxu0 0
  %347 = vmatpush2.bf16.msra.mxu0 0
  %348 = vmatprep.subr.bf16.mxu0 0
  %349 = vmatpush2.bf16.msra.mxu0 0
  %350 = vmatprep.subr.bf16.mxu0 0
  %351 = vmatpush2.bf16.msra.mxu0 0
  %352 = vmatprep.mubr.bf16.mxu0 0
  %353 = vmatmul.mubr.bf16.gmra.mxu0 %v158
  %v354 = vpop.f32.mrf.mxu0
  %v355 = vadd.f32 %v137, %v354
  %v356 = vpop.f32.mrf.mxu0
  %v357 = vadd.f32 %v141, %v356
  %v358 = vpop.f32.mrf.mxu0
  %v359 = vadd.f32 %v137, %v358
  %v360 = vpop.f32.mrf.mxu0
  %v361 = vadd.f32 %v141, %v360
  %362 = vdwg.mxu0
  %363 = vmatprep.subr.bf16.mxu0 %v287
  %364 = vmatpush1.bf16.msra.mxu0 %v286
  %365 = vmatprep.subr.bf16.mxu0 %v283
  %366 = vmatpush1.bf16.msra.mxu0 %v282
  %367 = vmatprep.subr.bf16.mxu0 %v279
  %368 = vmatpush1.bf16.msra.mxu0 %v278
  %369 = vmatprep.subr.bf16.mxu0 %v275
  %370 = vmatpush1.bf16.msra.mxu0 %v274
  %371 = vmatprep.subr.bf16.mxu0 %v271
  %372 = vmatpush1.bf16.msra.mxu0 %v270
  %373 = vmatprep.subr.bf16.mxu0 %v267
  %374 = vmatpush1.bf16.msra.mxu0 %v266
  %375 = vmatprep.subr.bf16.mxu0 %v263
  %376 = vmatpush1.bf16.msra.mxu0 %v262
  %377 = vmatprep.subr.bf16.mxu0 %v259
  %378 = vmatpush1.bf16.msra.mxu0 %v258
  %379 = vmatprep.subr.bf16.mxu0 0
  %380 = vmatpush2.bf16.msra.mxu0 0
  %381 = vmatprep.subr.bf16.mxu0 0
  %382 = vmatpush2.bf16.msra.mxu0 0
  %383 = vmatprep.subr.bf16.mxu0 0
  %384 = vmatpush2.bf16.msra.mxu0 0
  %385 = vmatprep.subr.bf16.mxu0 0
  %386 = vmatpush2.bf16.msra.mxu0 0
  %387 = vmatprep.subr.bf16.mxu0 0
  %388 = vmatpush2.bf16.msra.mxu0 0
  %389 = vmatprep.subr.bf16.mxu0 0
  %390 = vmatpush2.bf16.msra.mxu0 0
  %391 = vmatprep.subr.bf16.mxu0 0
  %392 = vmatpush2.bf16.msra.mxu0 0
  %393 = vmatprep.subr.bf16.mxu0 0
  %394 = vmatpush2.bf16.msra.mxu0 0
  %395 = vmatprep.mubr.bf16.mxu0 0
  %396 = vmatmul.mubr.bf16.gmra.mxu0 %v158
  %v397 = vpop.f32.mrf.mxu0
  %v398 = vadd.f32 %v145, %v397
  %v399 = vpop.f32.mrf.mxu0
  %v400 = vadd.f32 %v149, %v399
  %v401 = vpop.f32.mrf.mxu0
  %v402 = vadd.f32 %v145, %v401
  %v403 = vpop.f32.mrf.mxu0
  %v404 = vadd.f32 %v149, %v403
  %405 = vdwg.mxu0
  %v406 = vmul.f32 %v355, 1.702
  %v407 = vmul.f32 %v357, 1.702
  %v408 = vmul.f32 %v398, 1.702
  %v409 = vmul.f32 %v400, 1.702
  %v410 = vmul.f32 %v359, 1.702
  %v411 = vmul.f32 %v361, 1.702
  %v412 = vmul.f32 %v402, 1.702
  %v413 = vmul.f32 %v404, 1.702
  %v414 = vxor.u32 %v406, 2147483648
  %v415 = vxor.u32 %v407, 2147483648
  %v416 = vxor.u32 %v408, 2147483648
  %v417 = vxor.u32 %v409, 2147483648
  %v418 = vxor.u32 %v410, 2147483648
  %v419 = vxor.u32 %v411, 2147483648
  %v420 = vxor.u32 %v412, 2147483648
  %v421 = vxor.u32 %v413, 2147483648
  %v422 = vmul.f32 %v414, 1.442695
  %v423 = vpow.pop %v422
  %v424 = vmul.f32 %v415, 1.442695
  %v425 = vpow.pop %v424
  %v426 = vmul.f32 %v416, 1.442695
  %v427 = vpow.pop %v426
  %v428 = vmul.f32 %v417, 1.442695
  %v429 = vpow.pop %v428
  %v430 = vmul.f32 %v418, 1.442695
  %v431 = vpow.pop %v430
  %v432 = vmul.f32 %v419, 1.442695
  %v433 = vpow.pop %v432
  %v434 = vmul.f32 %v420, 1.442695
  %v435 = vpow.pop %v434
  %v436 = vmul.f32 %v421, 1.442695
  %v437 = vpow.pop %v436
  %v438 = vadd.f32 %v423, 1.0
  %v439 = vadd.f32 %v425, 1.0
  %v440 = vadd.f32 %v427, 1.0
  %v441 = vadd.f32 %v429, 1.0
  %v442 = vadd.f32 %v431, 1.0
  %v443 = vadd.f32 %v433, 1.0
  %v444 = vadd.f32 %v435, 1.0
  %v445 = vadd.f32 %v437, 1.0
  %v446 = vrcp.pop %v438
  %v447 = vmul.f32 1.0, %v446
  %v448 = vrcp.pop %v439
  %v449 = vmul.f32 1.0, %v448
  %v450 = vrcp.pop %v440
  %v451 = vmul.f32 1.0, %v450
  %v452 = vrcp.pop %v441
  %v453 = vmul.f32 1.0, %v452
  %v454 = vrcp.pop %v442
  %v455 = vmul.f32 1.0, %v454
  %v456 = vrcp.pop %v443
  %v457 = vmul.f32 1.0, %v456
  %v458 = vrcp.pop %v444
  %v459 = vmul.f32 1.0, %v458
  %v460 = vrcp.pop %v445
  %v461 = vmul.f32 1.0, %v460
  %v462 = vmul.f32 %v355, %v447
  %v463 = vmul.f32 %v357, %v449
  %v464 = vmul.f32 %v398, %v451
  %v465 = vmul.f32 %v400, %v453
  %v466 = vmul.f32 %v359, %v455
  %v467 = vmul.f32 %v361, %v457
  %v468 = vmul.f32 %v402, %v459
  %v469 = vmul.f32 %v404, %v461
  %v470 = vld [vmem:[#allocation3] sm:$0xff]
  %v471 = vld [vmem:[#allocation3 + $0x8] sm:$0x3]
  %v472 = vpack.c.bf16 %v466, %v462
  %v473 = vpack.c.bf16 %v467, %v463
  %v474 = vpack.c.bf16 %v468, %v464
  %v475 = vpack.c.bf16 %v469, %v465
  %v476 = vld [vmem:[%s5] sm:$0xf]
  %v477 = vld [vmem:[%s5 + $0x4] sm:$0xf]
  %v478 = vld [vmem:[%s5 + $0x8] sm:$0xf]
  %v479 = vld [vmem:[%s5 + $0xc] sm:$0xf]
  %v480 = vld [vmem:[%s5 + $0x10] sm:$0xf]
  %v481 = vld [vmem:[%s5 + $0x14] sm:$0xf]
  %v482 = vld [vmem:[%s5 + $0x18] sm:$0xf]
  %v483 = vld [vmem:[%s5 + $0x1c] sm:$0xf]
  %v484 = vld [vmem:[%s5 + $0x20] sm:$0xf]
  %v485 = vld [vmem:[%s5 + $0x24] sm:$0xf]
  %v486 = vld [vmem:[%s5 + $0x28] sm:$0xf]
  %v487 = vld [vmem:[%s5 + $0x2c] sm:$0xf]
  %v488 = vld [vmem:[%s5 + $0x30] sm:$0xf]
  %v489 = vld [vmem:[%s5 + $0x34] sm:$0xf]
  %v490 = vld [vmem:[%s5 + $0x38] sm:$0xf]
  %v491 = vld [vmem:[%s5 + $0x3c] sm:$0xf]
  %v492 = vld [vmem:[%s5 + $0x40] sm:$0xf]
  %v493 = vld [vmem:[%s5 + $0x44] sm:$0xf]
  %v494 = vld [vmem:[%s5 + $0x48] sm:$0xf]
  %v495 = vld [vmem:[%s5 + $0x4c] sm:$0xf]
  %v496 = vld [vmem:[%s5 + $0x50] sm:$0xf]
  %v497 = vld [vmem:[%s5 + $0x54] sm:$0xf]
  %v498 = vld [vmem:[%s5 + $0x58] sm:$0xf]
  %v499 = vld [vmem:[%s5 + $0x5c] sm:$0xf]
  %v500 = vld [vmem:[%s5 + $0x60] sm:$0xf]
  %v501 = vld [vmem:[%s5 + $0x64] sm:$0xf]
  %v502 = vld [vmem:[%s5 + $0x68] sm:$0xf]
  %v503 = vld [vmem:[%s5 + $0x6c] sm:$0xf]
  %v504 = vld [vmem:[%s5 + $0x70] sm:$0xf]
  %v505 = vld [vmem:[%s5 + $0x74] sm:$0xf]
  %v506 = vld [vmem:[%s5 + $0x78] sm:$0xf]
  %v507 = vld [vmem:[%s5 + $0x7c] sm:$0xf]
  %v508 = vld [vmem:[%s5 + $0x80] sm:$0xf]
  %v509 = vld [vmem:[%s5 + $0x84] sm:$0xf]
  %v510 = vld [vmem:[%s5 + $0x88] sm:$0xf]
  %v511 = vld [vmem:[%s5 + $0x8c] sm:$0xf]
  %v512 = vld [vmem:[%s5 + $0x90] sm:$0xf]
  %v513 = vld [vmem:[%s5 + $0x94] sm:$0xf]
  %v514 = vld [vmem:[%s5 + $0x98] sm:$0xf]
  %v515 = vld [vmem:[%s5 + $0x9c] sm:$0xf]
  %v516 = vld [vmem:[%s5 + $0xa0] sm:$0xf]
  %v517 = vld [vmem:[%s5 + $0xa4] sm:$0xf]
  %v518 = vld [vmem:[%s5 + $0xa8] sm:$0xf]
  %v519 = vld [vmem:[%s5 + $0xac] sm:$0xf]
  %v520 = vld [vmem:[%s5 + $0xb0] sm:$0xf]
  %v521 = vld [vmem:[%s5 + $0xb4] sm:$0xf]
  %v522 = vld [vmem:[%s5 + $0xb8] sm:$0xf]
  %v523 = vld [vmem:[%s5 + $0xbc] sm:$0xf]
  %v524 = vld [vmem:[%s5 + $0xc0] sm:$0xf]
  %v525 = vld [vmem:[%s5 + $0xc4] sm:$0xf]
  %v526 = vld [vmem:[%s5 + $0xc8] sm:$0xf]
  %v527 = vld [vmem:[%s5 + $0xcc] sm:$0xf]
  %v528 = vld [vmem:[%s5 + $0xd0] sm:$0xf]
  %v529 = vld [vmem:[%s5 + $0xd4] sm:$0xf]
  %v530 = vld [vmem:[%s5 + $0xd8] sm:$0xf]
  %v531 = vld [vmem:[%s5 + $0xdc] sm:$0xf]
  %v532 = vld [vmem:[%s5 + $0xe0] sm:$0xf]
  %v533 = vld [vmem:[%s5 + $0xe4] sm:$0xf]
  %v534 = vld [vmem:[%s5 + $0xe8] sm:$0xf]
  %v535 = vld [vmem:[%s5 + $0xec] sm:$0xf]
  %v536 = vld [vmem:[%s5 + $0xf0] sm:$0xf]
  %v537 = vld [vmem:[%s5 + $0xf4] sm:$0xf]
  %v538 = vld [vmem:[%s5 + $0xf8] sm:$0xf]
  %v539 = vld [vmem:[%s5 + $0xfc] sm:$0xf]
  %v604 = vunpack.c.l.b16 %v476
  %v605 = vunpack.c.l.b16 %v477
  %v606 = vunpack.c.l.b16 %v478
  %v607 = vunpack.c.l.b16 %v479
  %v608 = vunpack.c.l.b16 %v480
  %v609 = vunpack.c.l.b16 %v481
  %v610 = vunpack.c.l.b16 %v482
  %v611 = vunpack.c.l.b16 %v483
  %v612 = vunpack.c.l.b16 %v484
  %v613 = vunpack.c.l.b16 %v485
  %v614 = vunpack.c.l.b16 %v486
  %v615 = vunpack.c.l.b16 %v487
  %v616 = vunpack.c.l.b16 %v488
  %v617 = vunpack.c.l.b16 %v489
  %v618 = vunpack.c.l.b16 %v490
  %v619 = vunpack.c.l.b16 %v491
  %v620 = vunpack.c.l.b16 %v492
  %v621 = vunpack.c.l.b16 %v493
  %v622 = vunpack.c.l.b16 %v494
  %v623 = vunpack.c.l.b16 %v495
  %v624 = vunpack.c.l.b16 %v496
  %v625 = vunpack.c.l.b16 %v497
  %v626 = vunpack.c.l.b16 %v498
  %v627 = vunpack.c.l.b16 %v499
  %v628 = vunpack.c.l.b16 %v500
  %v629 = vunpack.c.l.b16 %v501
  %v630 = vunpack.c.l.b16 %v502
  %v631 = vunpack.c.l.b16 %v503
  %v632 = vunpack.c.l.b16 %v504
  %v633 = vunpack.c.l.b16 %v505
  %v634 = vunpack.c.l.b16 %v506
  %v635 = vunpack.c.l.b16 %v507
  %v636 = vunpack.c.l.b16 %v508
  %v637 = vunpack.c.l.b16 %v509
  %v638 = vunpack.c.l.b16 %v510
  %v639 = vunpack.c.l.b16 %v511
  %v640 = vunpack.c.l.b16 %v512
  %v641 = vunpack.c.l.b16 %v513
  %v642 = vunpack.c.l.b16 %v514
  %v643 = vunpack.c.l.b16 %v515
  %v644 = vunpack.c.l.b16 %v516
  %v645 = vunpack.c.l.b16 %v517
  %v646 = vunpack.c.l.b16 %v518
  %v647 = vunpack.c.l.b16 %v519
  %v648 = vunpack.c.l.b16 %v520
  %v649 = vunpack.c.l.b16 %v521
  %v650 = vunpack.c.l.b16 %v522
  %v651 = vunpack.c.l.b16 %v523
  %v652 = vunpack.c.l.b16 %v524
  %v653 = vunpack.c.l.b16 %v525
  %v654 = vunpack.c.l.b16 %v526
  %v655 = vunpack.c.l.b16 %v527
  %v656 = vunpack.c.l.b16 %v528
  %v657 = vunpack.c.l.b16 %v529
  %v658 = vunpack.c.l.b16 %v530
  %v659 = vunpack.c.l.b16 %v531
  %v660 = vunpack.c.l.b16 %v532
  %v661 = vunpack.c.l.b16 %v533
  %v662 = vunpack.c.l.b16 %v534
  %v663 = vunpack.c.l.b16 %v535
  %v664 = vunpack.c.l.b16 %v536
  %v665 = vunpack.c.l.b16 %v537
  %v666 = vunpack.c.l.b16 %v538
  %v667 = vunpack.c.l.b16 %v539
  %v668 = vpack.c.b16 %v605, %v604
  %v669 = vpack.c.b16 %v607, %v606
  %v670 = vpack.c.b16 %v609, %v608
  %v671 = vpack.c.b16 %v611, %v610
  %v672 = vpack.c.b16 %v613, %v612
  %v673 = vpack.c.b16 %v615, %v614
  %v674 = vpack.c.b16 %v617, %v616
  %v675 = vpack.c.b16 %v619, %v618
  %v676 = vpack.c.b16 %v621, %v620
  %v677 = vpack.c.b16 %v623, %v622
  %v678 = vpack.c.b16 %v625, %v624
  %v679 = vpack.c.b16 %v627, %v626
  %v680 = vpack.c.b16 %v629, %v628
  %v681 = vpack.c.b16 %v631, %v630
  %v682 = vpack.c.b16 %v633, %v632
  %v683 = vpack.c.b16 %v635, %v634
  %v684 = vpack.c.b16 %v637, %v636
  %v685 = vpack.c.b16 %v639, %v638
  %v686 = vpack.c.b16 %v641, %v640
  %v687 = vpack.c.b16 %v643, %v642
  %v688 = vpack.c.b16 %v645, %v644
  %v689 = vpack.c.b16 %v647, %v646
  %v690 = vpack.c.b16 %v649, %v648
  %v691 = vpack.c.b16 %v651, %v650
  %v692 = vpack.c.b16 %v653, %v652
  %v693 = vpack.c.b16 %v655, %v654
  %v694 = vpack.c.b16 %v657, %v656
  %v695 = vpack.c.b16 %v659, %v658
  %v696 = vpack.c.b16 %v661, %v660
  %v697 = vpack.c.b16 %v663, %v662
  %v698 = vpack.c.b16 %v665, %v664
  %v699 = vpack.c.b16 %v667, %v666
  %732 = vmatprep.subr.bf16.mxu0 0
  %733 = vmatpush1.bf16.msra.mxu0 %v675
  %734 = vmatprep.subr.bf16.mxu0 0
  %735 = vmatpush1.bf16.msra.mxu0 %v674
  %736 = vmatprep.subr.bf16.mxu0 0
  %737 = vmatpush1.bf16.msra.mxu0 %v673
  %738 = vmatprep.subr.bf16.mxu0 0
  %739 = vmatpush1.bf16.msra.mxu0 %v672
  %740 = vmatprep.subr.bf16.mxu0 0
  %741 = vmatpush1.bf16.msra.mxu0 %v671
  %742 = vmatprep.subr.bf16.mxu0 0
  %743 = vmatpush1.bf16.msra.mxu0 %v670
  %744 = vmatprep.subr.bf16.mxu0 0
  %745 = vmatpush1.bf16.msra.mxu0 %v669
  %746 = vmatprep.subr.bf16.mxu0 0
  %747 = vmatpush1.bf16.msra.mxu0 %v668
  %748 = vmatprep.subr.bf16.mxu0 0
  %749 = vmatpush2.bf16.msra.mxu0 %v683
  %750 = vmatprep.subr.bf16.mxu0 0
  %751 = vmatpush2.bf16.msra.mxu0 %v682
  %752 = vmatprep.subr.bf16.mxu0 0
  %753 = vmatpush2.bf16.msra.mxu0 %v681
  %754 = vmatprep.subr.bf16.mxu0 0
  %755 = vmatpush2.bf16.msra.mxu0 %v680
  %756 = vmatprep.subr.bf16.mxu0 0
  %757 = vmatpush2.bf16.msra.mxu0 %v679
  %758 = vmatprep.subr.bf16.mxu0 0
  %759 = vmatpush2.bf16.msra.mxu0 %v678
  %760 = vmatprep.subr.bf16.mxu0 0
  %761 = vmatpush2.bf16.msra.mxu0 %v677
  %762 = vmatprep.subr.bf16.mxu0 0
  %763 = vmatpush2.bf16.msra.mxu0 %v676
  %764 = vmatprep.mubr.bf16.mxu0 %v473
  %765 = vmatmul.mubr.bf16.gmra.mxu0 %v472
  %v766 = vpop.f32.mrf.mxu0
  %v767 = vadd.f32 0.0, %v766
  %v768 = vpop.f32.mrf.mxu0
  %v769 = vpop.f32.mrf.mxu0
  %v770 = vadd.f32 0.0, %v769
  %v771 = vpop.f32.mrf.mxu0
  %772 = vdwg.mxu0
  %773 = vmatprep.subr.bf16.mxu0 0
  %774 = vmatpush1.bf16.msra.mxu0 %v691
  %775 = vmatprep.subr.bf16.mxu0 0
  %776 = vmatpush1.bf16.msra.mxu0 %v690
  %777 = vmatprep.subr.bf16.mxu0 0
  %778 = vmatpush1.bf16.msra.mxu0 %v689
  %779 = vmatprep.subr.bf16.mxu0 0
  %780 = vmatpush1.bf16.msra.mxu0 %v688
  %781 = vmatprep.subr.bf16.mxu0 0
  %782 = vmatpush1.bf16.msra.mxu0 %v687
  %783 = vmatprep.subr.bf16.mxu0 0
  %784 = vmatpush1.bf16.msra.mxu0 %v686
  %785 = vmatprep.subr.bf16.mxu0 0
  %786 = vmatpush1.bf16.msra.mxu0 %v685
  %787 = vmatprep.subr.bf16.mxu0 0
  %788 = vmatpush1.bf16.msra.mxu0 %v684
  %789 = vmatprep.subr.bf16.mxu0 0
  %790 = vmatpush2.bf16.msra.mxu0 %v699
  %791 = vmatprep.subr.bf16.mxu0 0
  %792 = vmatpush2.bf16.msra.mxu0 %v698
  %793 = vmatprep.subr.bf16.mxu0 0
  %794 = vmatpush2.bf16.msra.mxu0 %v697
  %795 = vmatprep.subr.bf16.mxu0 0
  %796 = vmatpush2.bf16.msra.mxu0 %v696
  %797 = vmatprep.subr.bf16.mxu0 0
  %798 = vmatpush2.bf16.msra.mxu0 %v695
  %799 = vmatprep.subr.bf16.mxu0 0
  %800 = vmatpush2.bf16.msra.mxu0 %v694
  %801 = vmatprep.subr.bf16.mxu0 0
  %802 = vmatpush2.bf16.msra.mxu0 %v693
  %803 = vmatprep.subr.bf16.mxu0 0
  %804 = vmatpush2.bf16.msra.mxu0 %v692
  %805 = vmatprep.mubr.bf16.mxu0 %v475
  %806 = vmatmul.mubr.bf16.gmra.mxu0 %v474
  %v807 = vpop.f32.mrf.mxu0
  %v808 = vadd.f32 %v767, %v807
  %v809 = vpop.f32.mrf.mxu0
  %v810 = vpop.f32.mrf.mxu0
  %v811 = vadd.f32 %v770, %v810
  %v812 = vpop.f32.mrf.mxu0
  %813 = vdwg.mxu0
  %v814 = vadd.f32 %v470, %v808
  %v815 = vadd.f32 %v471, %v811
  %816 = vst [vmem:[#allocation3] sm:$0xff] %v814
  %817 = vst [vmem:[#allocation3 + $0x8] sm:$0x3] %v815
  // Predicated region
  $region34: #{image_encoder_forward.20} parent=0 // pred_check
    %p818 = pneg %p27
  $region35: #{image_encoder_forward.20} parent=0 // pred_check_branch
    %820 = sbr.rel (%p818) target = $region37
  $region36: #{image_encoder_forward.20} parent=0 // pred_region
    %v821 = vld [vmem:[#allocation3] sm:$0xff]
    %v822 = vld [vmem:[#allocation3 + $0x8] sm:$0x3]
    %823 = vst [vmem:[%s7] sm:$0xff] %v821
    %824 = vst [vmem:[%s7 + $0x8] sm:$0x3] %v822
  $region37: #{image_encoder_forward.20} parent=0 // pred_fallthru
    _
  // Predicated region
  $region38: #{image_encoder_forward.20} parent=0 // pred_check
    _
  $region39: #{image_encoder_forward.20} parent=0 // pred_check_branch
    %826 = sbr.rel (0) target = $region41
  $region40: #{image_encoder_forward.20} parent=0 // pred_region
    _
  $region41: #{image_encoder_forward.20} parent=0 // pred_fallthru
    _
  // Predicated region
  $region42: #{image_encoder_forward.20} parent=0 // pred_check
    _
  $region43: #{image_encoder_forward.20} parent=0 // pred_check_branch
    %828 = sbr.rel (0) target = $region45
  $region44: #{image_encoder_forward.20} parent=0 // pred_region
    _
  $region45: #{image_encoder_forward.20} parent=0 // pred_fallthru
    _

</llo_original>
